<compile_context>
chip_gen: v7x
topology: tpu7x:2x2x1
jax: 0.10.0
libtpu: 0.0.40
codegen_flags: <defaults>
</compile_context>

<pallas_src>
import jax
import jax.numpy as jnp
from jax.experimental import pallas as pl
from jax.experimental.pallas import tpu as pltpu  # noqa: F401  (kept for TPU-specific params if needed)


def mul_conv1x1_kernel(x_ref, s_ref, w_ref, o_ref):
    # x_ref: [C_in, M]     f32 activations (channels on sublanes, spatial on lanes)
    # s_ref: [C_in, 1]     f32 per-channel SE scale (broadcast over columns)
    # w_ref: [C_out, C_in] bf16 1x1-conv weight (pre-cast constant)
    # o_ref: [C_out, M]    f32 output
    #
    # Multiply in f32 (v5e VPU has no bf16 ALUs; also rounds only once), cast the
    # product to bf16 for the MXU, accumulate in f32 via preferred_element_type.
    xs = (x_ref[...] * s_ref[...]).astype(jnp.bfloat16)
    o_ref[...] = jnp.dot(w_ref[...], xs, preferred_element_type=jnp.float32)


def mul_conv1x1(x_nchw, scale_nc11, w2d_bf16):
    """x_nchw: [N, C_in, H, W] f32; scale_nc11: [N, C_in, 1, 1] f32 (N == 1);
    w2d_bf16: [C_out, C_in] bf16 weight, pre-cast once at parameter-load time."""
    N, C_in, H, W = x_nchw.shape
    C_out = w2d_bf16.shape[0]
    assert N == 1, "module was traced with batch 1"
    # TODO(synk): if callers ever batch N>1, fold N into M (C_in stays the contraction dim).
    M = H * W

    # Glue reshapes only — no transposes, no dtype-copy kernels.
    x2d = x_nchw.reshape(C_in, M)
    s2d = scale_nc11.reshape(C_in, 1)

    cost = pl.CostEstimate(
        flops=2 * C_out * C_in * M,
        bytes_accessed=(x2d.size * 4 + s2d.size * 4 + w2d_bf16.size * 2 + C_out * M * 4),
        transcendentals=0,
    )

    # Single invocation: all operands (~2 MB total) fit comfortably in scoped VMEM on
    # v5e/v6e/v7x; no grid => no per-step overhead and no 3-tiles-over-2-cores imbalance.
    # TODO(synk): on v7x a grid=(2,) split of C_out into two 172-row tiles would share the
    # weight DMA across both TensorCores; at this size the single step is expected to win.
    o2d = pl.pallas_call(
        mul_conv1x1_kernel,
        out_shape=jax.ShapeDtypeStruct((C_out, M), jnp.float32),
        cost_estimate=cost,
    )(x2d, s2d, w2d_bf16)

    # Row-major reshape straight back to NCHW — no transpose, no slice, no pad removal.
    return o2d.reshape(N, C_out, H, W)


if __name__ == "__main__":
    # Shapes implied by the module: x477 [1, 2064, 7, 7], x482 [1, 2064, 1, 1],
    # conv weight [344, 2064, 1, 1] (bias=False). Small enough to run directly.
    N, C_in, H, W = 1, 2064, 7, 7
    C_out = 344

    key = jax.random.PRNGKey(0)
    kx, ks, kw = jax.random.split(key, 3)
    x477 = jax.random.normal(kx, (N, C_in, H, W), dtype=jnp.float32)
    x482 = jax.random.normal(ks, (N, C_in, 1, 1), dtype=jnp.float32)
    weight = jax.random.normal(kw, (C_out, C_in, 1, 1), dtype=jnp.float32) * 0.02

    # "Parameter-load time" prep: reshape + bf16-cast of the constant weight, done once.
    w2d_bf16 = weight.reshape(C_out, C_in).astype(jnp.bfloat16)

    out = mul_conv1x1(x477, x482, w2d_bf16)
    jax.block_until_ready(out)

    # Reference in plain JAX (f32): (x * s) convolved with a 1x1 kernel.
    ref = jnp.einsum("nchw,oc->nohw", x477 * x482, weight.reshape(C_out, C_in))
    assert out.shape == (N, C_out, H, W), out.shape
    # bf16 MXU operands with f32 accumulation over K=2064 -> small expected abs error.
    assert jnp.allclose(out, ref, atol=5e-2, rtol=5e-2), float(jnp.max(jnp.abs(out - ref)))

    print("KERNEL_OK")
</pallas_src>

<mosaic_0001>
module attributes {stable_mosaic.version = 11 : i64} {
  func.func @mul_conv1x1_kernel(%arg0: memref<2064x49xf32, #tpu.memory_space<vmem>>, %arg1: memref<2064x1xf32, #tpu.memory_space<vmem>>, %arg2: memref<344x2064xbf16, #tpu.memory_space<vmem>>, %arg3: memref<344x49xf32, #tpu.memory_space<vmem>>) attributes {dimension_semantics = [], scalar_prefetch = 0 : i64, scratch_operands = 0 : i64, tpu.core_type = #tpu.core_type<tc>} {
    %c0 = arith.constant 0 : index
    %c0_0 = arith.constant 0 : index
    %0 = vector.load %arg0[%c0, %c0_0] : memref<2064x49xf32, #tpu.memory_space<vmem>>, vector<2064x49xf32>
    %c0_1 = arith.constant 0 : index
    %c0_2 = arith.constant 0 : index
    %1 = vector.load %arg1[%c0_1, %c0_2] : memref<2064x1xf32, #tpu.memory_space<vmem>>, vector<2064x1xf32>
    %2 = vector.broadcast %1 : vector<2064x1xf32> to vector<2064x49xf32>
    %3 = arith.mulf %0, %2 : vector<2064x49xf32>
    %4 = arith.truncf %3 : vector<2064x49xf32> to vector<2064x49xbf16>
    %c0_3 = arith.constant 0 : index
    %c0_4 = arith.constant 0 : index
    %5 = vector.load %arg2[%c0_3, %c0_4] : memref<344x2064xbf16, #tpu.memory_space<vmem>>, vector<344x2064xbf16>
    %cst = arith.constant dense<0.000000e+00> : vector<344x49xf32>
    %6 = tpu.matmul %5, %4, %cst {dimension_numbers = #tpu.dot_dimension_numbers<[1], [0], [0], [1], [0, 0, 1, 1], [], []>} : vector<344x2064xbf16>, vector<2064x49xbf16>, vector<344x49xf32> -> vector<344x49xf32>
    %c0_5 = arith.constant 0 : index
    %c0_6 = arith.constant 0 : index
    %7 = vector.load %arg3[%c0_5, %c0_6] : memref<344x49xf32, #tpu.memory_space<vmem>>, vector<344x49xf32>
    tpu.vector_store %arg3[%c0_5, %c0_6], %6 {strides = array<i32>} : memref<344x49xf32, #tpu.memory_space<vmem>>, vector<344x49xf32>,
    return
  }
}

</mosaic_0001>

<llo_original>
// kernel: tpu_custom_call.1
$region0: #{tpu_custom_call.1}
  #allocation0 [shape = 'u32[]', space=smem, size = 0x4, offset = 0x4, fixed_abs, tag = 'smem constant byte address 0x4 - core index']
  #allocation1 [shape = 'u32[144,128]{1,0:T(1,128)}', space=vmem, size = 0x12000, scoped, tag = 'internal scratch']
  %s0 = inlined_call_operand.vmem [shape: f32[2064,49], index: 0, kind: input, shape index: {}]
  %s1 = inlined_call_operand.vmem [shape: f32[2064,1], index: 1, kind: input, shape index: {}]
  %s2 = inlined_call_operand.vmem [shape: bf16[344,2064], index: 2, kind: input, shape index: {}]
  %s3 = inlined_call_operand.vmem [shape: f32[344,49], index: 3, kind: output, shape index: {}]
  %s4 = sld [smem:[#allocation0]]
  $region22: #{tpu_custom_call.1} parent=0
    _
  %s6 = ssub.s32 1, %s4
  %s7 = scalar_select 0, %s6, %s4
  // Predicated region
  $region2: #{tpu_custom_call.1} parent=0 // pred_check
    _
  $region3: #{tpu_custom_call.1} parent=0 // pred_check_branch
    %9 = sbr.rel (0) target = $region5
  $region4: #{tpu_custom_call.1} parent=0 // pred_region
    _
  $region5: #{tpu_custom_call.1} parent=0 // pred_fallthru
    _
  // Predicated region
  $region6: #{tpu_custom_call.1} parent=0 // pred_check
    _
  $region7: #{tpu_custom_call.1} parent=0 // pred_check_branch
    %11 = sbr.rel (0) target = $region9
  $region8: #{tpu_custom_call.1} parent=0 // pred_region
    _
  $region9: #{tpu_custom_call.1} parent=0 // pred_fallthru
    _
  // Predicated region
  $region10: #{tpu_custom_call.1} parent=0 // pred_check
    _
  $region11: #{tpu_custom_call.1} parent=0 // pred_check_branch
    %13 = sbr.rel (0) target = $region13
  $region12: #{tpu_custom_call.1} parent=0 // pred_region
    _
  $region13: #{tpu_custom_call.1} parent=0 // pred_fallthru
    _
  %v15 = vld [vmem:[%s0] sm:$0xff]
  %v16 = vld [vmem:[%s0 + $0x8] sm:$0xff]
  %v17 = vld [vmem:[%s0 + $0x10] sm:$0xff]
  %v18 = vld [vmem:[%s0 + $0x18] sm:$0xff]
  %v19 = vld [vmem:[%s0 + $0x20] sm:$0xff]
  %v20 = vld [vmem:[%s0 + $0x28] sm:$0xff]
  %v21 = vld [vmem:[%s0 + $0x30] sm:$0xff]
  %v22 = vld [vmem:[%s0 + $0x38] sm:$0xff]
  %v23 = vld [vmem:[%s0 + $0x40] sm:$0xff]
  %v24 = vld [vmem:[%s0 + $0x48] sm:$0xff]
  %v25 = vld [vmem:[%s0 + $0x50] sm:$0xff]
  %v26 = vld [vmem:[%s0 + $0x58] sm:$0xff]
  %v27 = vld [vmem:[%s0 + $0x60] sm:$0xff]
  %v28 = vld [vmem:[%s0 + $0x68] sm:$0xff]
  %v29 = vld [vmem:[%s0 + $0x70] sm:$0xff]
  %v30 = vld [vmem:[%s0 + $0x78] sm:$0xff]
  %v31 = vld [vmem:[%s0 + $0x80] sm:$0xff]
  %v32 = vld [vmem:[%s0 + $0x88] sm:$0xff]
  %v33 = vld [vmem:[%s0 + $0x90] sm:$0xff]
  %v34 = vld [vmem:[%s0 + $0x98] sm:$0xff]
  %v35 = vld [vmem:[%s0 + $0xa0] sm:$0xff]
  %v36 = vld [vmem:[%s0 + $0xa8] sm:$0xff]
  %v37 = vld [vmem:[%s0 + $0xb0] sm:$0xff]
  %v38 = vld [vmem:[%s0 + $0xb8] sm:$0xff]
  %v39 = vld [vmem:[%s0 + $0xc0] sm:$0xff]
  %v40 = vld [vmem:[%s0 + $0xc8] sm:$0xff]
  %v41 = vld [vmem:[%s0 + $0xd0] sm:$0xff]
  %v42 = vld [vmem:[%s0 + $0xd8] sm:$0xff]
  %v43 = vld [vmem:[%s0 + $0xe0] sm:$0xff]
  %v44 = vld [vmem:[%s0 + $0xe8] sm:$0xff]
  %v45 = vld [vmem:[%s0 + $0xf0] sm:$0xff]
  %v46 = vld [vmem:[%s0 + $0xf8] sm:$0xff]
  %v47 = vld [vmem:[%s0 + $0x100] sm:$0xff]
  %v48 = vld [vmem:[%s0 + $0x108] sm:$0xff]
  %v49 = vld [vmem:[%s0 + $0x110] sm:$0xff]
  %v50 = vld [vmem:[%s0 + $0x118] sm:$0xff]
  %v51 = vld [vmem:[%s0 + $0x120] sm:$0xff]
  %v52 = vld [vmem:[%s0 + $0x128] sm:$0xff]
  %v53 = vld [vmem:[%s0 + $0x130] sm:$0xff]
  %v54 = vld [vmem:[%s0 + $0x138] sm:$0xff]
  %v55 = vld [vmem:[%s0 + $0x140] sm:$0xff]
  %v56 = vld [vmem:[%s0 + $0x148] sm:$0xff]
  %v57 = vld [vmem:[%s0 + $0x150] sm:$0xff]
  %v58 = vld [vmem:[%s0 + $0x158] sm:$0xff]
  %v59 = vld [vmem:[%s0 + $0x160] sm:$0xff]
  %v60 = vld [vmem:[%s0 + $0x168] sm:$0xff]
  %v61 = vld [vmem:[%s0 + $0x170] sm:$0xff]
  %v62 = vld [vmem:[%s0 + $0x178] sm:$0xff]
  %v63 = vld [vmem:[%s0 + $0x180] sm:$0xff]
  %v64 = vld [vmem:[%s0 + $0x188] sm:$0xff]
  %v65 = vld [vmem:[%s0 + $0x190] sm:$0xff]
  %v66 = vld [vmem:[%s0 + $0x198] sm:$0xff]
  %v67 = vld [vmem:[%s0 + $0x1a0] sm:$0xff]
  %v68 = vld [vmem:[%s0 + $0x1a8] sm:$0xff]
  %v69 = vld [vmem:[%s0 + $0x1b0] sm:$0xff]
  %v70 = vld [vmem:[%s0 + $0x1b8] sm:$0xff]
  %v71 = vld [vmem:[%s0 + $0x1c0] sm:$0xff]
  %v72 = vld [vmem:[%s0 + $0x1c8] sm:$0xff]
  %v73 = vld [vmem:[%s0 + $0x1d0] sm:$0xff]
  %v74 = vld [vmem:[%s0 + $0x1d8] sm:$0xff]
  %v75 = vld [vmem:[%s0 + $0x1e0] sm:$0xff]
  %v76 = vld [vmem:[%s0 + $0x1e8] sm:$0xff]
  %v77 = vld [vmem:[%s0 + $0x1f0] sm:$0xff]
  %v78 = vld [vmem:[%s0 + $0x1f8] sm:$0xff]
  %v79 = vld [vmem:[%s0 + $0x200] sm:$0xff]
  %v80 = vld [vmem:[%s0 + $0x208] sm:$0xff]
  %v81 = vld [vmem:[%s0 + $0x210] sm:$0xff]
  %v82 = vld [vmem:[%s0 + $0x218] sm:$0xff]
  %v83 = vld [vmem:[%s0 + $0x220] sm:$0xff]
  %v84 = vld [vmem:[%s0 + $0x228] sm:$0xff]
  %v85 = vld [vmem:[%s0 + $0x230] sm:$0xff]
  %v86 = vld [vmem:[%s0 + $0x238] sm:$0xff]
  %v87 = vld [vmem:[%s0 + $0x240] sm:$0xff]
  %v88 = vld [vmem:[%s0 + $0x248] sm:$0xff]
  %v89 = vld [vmem:[%s0 + $0x250] sm:$0xff]
  %v90 = vld [vmem:[%s0 + $0x258] sm:$0xff]
  %v91 = vld [vmem:[%s0 + $0x260] sm:$0xff]
  %v92 = vld [vmem:[%s0 + $0x268] sm:$0xff]
  %v93 = vld [vmem:[%s0 + $0x270] sm:$0xff]
  %v94 = vld [vmem:[%s0 + $0x278] sm:$0xff]
  %v95 = vld [vmem:[%s0 + $0x280] sm:$0xff]
  %v96 = vld [vmem:[%s0 + $0x288] sm:$0xff]
  %v97 = vld [vmem:[%s0 + $0x290] sm:$0xff]
  %v98 = vld [vmem:[%s0 + $0x298] sm:$0xff]
  %v99 = vld [vmem:[%s0 + $0x2a0] sm:$0xff]
  %v100 = vld [vmem:[%s0 + $0x2a8] sm:$0xff]
  %v101 = vld [vmem:[%s0 + $0x2b0] sm:$0xff]
  %v102 = vld [vmem:[%s0 + $0x2b8] sm:$0xff]
  %v103 = vld [vmem:[%s0 + $0x2c0] sm:$0xff]
  %v104 = vld [vmem:[%s0 + $0x2c8] sm:$0xff]
  %v105 = vld [vmem:[%s0 + $0x2d0] sm:$0xff]
  %v106 = vld [vmem:[%s0 + $0x2d8] sm:$0xff]
  %v107 = vld [vmem:[%s0 + $0x2e0] sm:$0xff]
  %v108 = vld [vmem:[%s0 + $0x2e8] sm:$0xff]
  %v109 = vld [vmem:[%s0 + $0x2f0] sm:$0xff]
  %v110 = vld [vmem:[%s0 + $0x2f8] sm:$0xff]
  %v111 = vld [vmem:[%s0 + $0x300] sm:$0xff]
  %v112 = vld [vmem:[%s0 + $0x308] sm:$0xff]
  %v113 = vld [vmem:[%s0 + $0x310] sm:$0xff]
  %v114 = vld [vmem:[%s0 + $0x318] sm:$0xff]
  %v115 = vld [vmem:[%s0 + $0x320] sm:$0xff]
  %v116 = vld [vmem:[%s0 + $0x328] sm:$0xff]
  %v117 = vld [vmem:[%s0 + $0x330] sm:$0xff]
  %v118 = vld [vmem:[%s0 + $0x338] sm:$0xff]
  %v119 = vld [vmem:[%s0 + $0x340] sm:$0xff]
  %v120 = vld [vmem:[%s0 + $0x348] sm:$0xff]
  %v121 = vld [vmem:[%s0 + $0x350] sm:$0xff]
  %v122 = vld [vmem:[%s0 + $0x358] sm:$0xff]
  %v123 = vld [vmem:[%s0 + $0x360] sm:$0xff]
  %v124 = vld [vmem:[%s0 + $0x368] sm:$0xff]
  %v125 = vld [vmem:[%s0 + $0x370] sm:$0xff]
  %v126 = vld [vmem:[%s0 + $0x378] sm:$0xff]
  %v127 = vld [vmem:[%s0 + $0x380] sm:$0xff]
  %v128 = vld [vmem:[%s0 + $0x388] sm:$0xff]
  %v129 = vld [vmem:[%s0 + $0x390] sm:$0xff]
  %v130 = vld [vmem:[%s0 + $0x398] sm:$0xff]
  %v131 = vld [vmem:[%s0 + $0x3a0] sm:$0xff]
  %v132 = vld [vmem:[%s0 + $0x3a8] sm:$0xff]
  %v133 = vld [vmem:[%s0 + $0x3b0] sm:$0xff]
  %v134 = vld [vmem:[%s0 + $0x3b8] sm:$0xff]
  %v135 = vld [vmem:[%s0 + $0x3c0] sm:$0xff]
  %v136 = vld [vmem:[%s0 + $0x3c8] sm:$0xff]
  %v137 = vld [vmem:[%s0 + $0x3d0] sm:$0xff]
  %v138 = vld [vmem:[%s0 + $0x3d8] sm:$0xff]
  %v139 = vld [vmem:[%s0 + $0x3e0] sm:$0xff]
  %v140 = vld [vmem:[%s0 + $0x3e8] sm:$0xff]
  %v141 = vld [vmem:[%s0 + $0x3f0] sm:$0xff]
  %v142 = vld [vmem:[%s0 + $0x3f8] sm:$0xff]
  %v143 = vld [vmem:[%s0 + $0x400] sm:$0xff]
  %v144 = vld [vmem:[%s0 + $0x408] sm:$0xff]
  %v145 = vld [vmem:[%s0 + $0x410] sm:$0xff]
  %v146 = vld [vmem:[%s0 + $0x418] sm:$0xff]
  %v147 = vld [vmem:[%s0 + $0x420] sm:$0xff]
  %v148 = vld [vmem:[%s0 + $0x428] sm:$0xff]
  %v149 = vld [vmem:[%s0 + $0x430] sm:$0xff]
  %v150 = vld [vmem:[%s0 + $0x438] sm:$0xff]
  %v151 = vld [vmem:[%s0 + $0x440] sm:$0xff]
  %v152 = vld [vmem:[%s0 + $0x448] sm:$0xff]
  %v153 = vld [vmem:[%s0 + $0x450] sm:$0xff]
  %v154 = vld [vmem:[%s0 + $0x458] sm:$0xff]
  %v155 = vld [vmem:[%s0 + $0x460] sm:$0xff]
  %v156 = vld [vmem:[%s0 + $0x468] sm:$0xff]
  %v157 = vld [vmem:[%s0 + $0x470] sm:$0xff]
  %v158 = vld [vmem:[%s0 + $0x478] sm:$0xff]
  %v159 = vld [vmem:[%s0 + $0x480] sm:$0xff]
  %v160 = vld [vmem:[%s0 + $0x488] sm:$0xff]
  %v161 = vld [vmem:[%s0 + $0x490] sm:$0xff]
  %v162 = vld [vmem:[%s0 + $0x498] sm:$0xff]
  %v163 = vld [vmem:[%s0 + $0x4a0] sm:$0xff]
  %v164 = vld [vmem:[%s0 + $0x4a8] sm:$0xff]
  %v165 = vld [vmem:[%s0 + $0x4b0] sm:$0xff]
  %v166 = vld [vmem:[%s0 + $0x4b8] sm:$0xff]
  %v167 = vld [vmem:[%s0 + $0x4c0] sm:$0xff]
  %v168 = vld [vmem:[%s0 + $0x4c8] sm:$0xff]
  %v169 = vld [vmem:[%s0 + $0x4d0] sm:$0xff]
  %v170 = vld [vmem:[%s0 + $0x4d8] sm:$0xff]
  %v171 = vld [vmem:[%s0 + $0x4e0] sm:$0xff]
  %v172 = vld [vmem:[%s0 + $0x4e8] sm:$0xff]
  %v173 = vld [vmem:[%s0 + $0x4f0] sm:$0xff]
  %v174 = vld [vmem:[%s0 + $0x4f8] sm:$0xff]
  %v175 = vld [vmem:[%s0 + $0x500] sm:$0xff]
  %v176 = vld [vmem:[%s0 + $0x508] sm:$0xff]
  %v177 = vld [vmem:[%s0 + $0x510] sm:$0xff]
  %v178 = vld [vmem:[%s0 + $0x518] sm:$0xff]
  %v179 = vld [vmem:[%s0 + $0x520] sm:$0xff]
  %v180 = vld [vmem:[%s0 + $0x528] sm:$0xff]
  %v181 = vld [vmem:[%s0 + $0x530] sm:$0xff]
  %v182 = vld [vmem:[%s0 + $0x538] sm:$0xff]
  %v183 = vld [vmem:[%s0 + $0x540] sm:$0xff]
  %v184 = vld [vmem:[%s0 + $0x548] sm:$0xff]
  %v185 = vld [vmem:[%s0 + $0x550] sm:$0xff]
  %v186 = vld [vmem:[%s0 + $0x558] sm:$0xff]
  %v187 = vld [vmem:[%s0 + $0x560] sm:$0xff]
  %v188 = vld [vmem:[%s0 + $0x568] sm:$0xff]
  %v189 = vld [vmem:[%s0 + $0x570] sm:$0xff]
  %v190 = vld [vmem:[%s0 + $0x578] sm:$0xff]
  %v191 = vld [vmem:[%s0 + $0x580] sm:$0xff]
  %v192 = vld [vmem:[%s0 + $0x588] sm:$0xff]
  %v193 = vld [vmem:[%s0 + $0x590] sm:$0xff]
  %v194 = vld [vmem:[%s0 + $0x598] sm:$0xff]
  %v195 = vld [vmem:[%s0 + $0x5a0] sm:$0xff]
  %v196 = vld [vmem:[%s0 + $0x5a8] sm:$0xff]
  %v197 = vld [vmem:[%s0 + $0x5b0] sm:$0xff]
  %v198 = vld [vmem:[%s0 + $0x5b8] sm:$0xff]
  %v199 = vld [vmem:[%s0 + $0x5c0] sm:$0xff]
  %v200 = vld [vmem:[%s0 + $0x5c8] sm:$0xff]
  %v201 = vld [vmem:[%s0 + $0x5d0] sm:$0xff]
  %v202 = vld [vmem:[%s0 + $0x5d8] sm:$0xff]
  %v203 = vld [vmem:[%s0 + $0x5e0] sm:$0xff]
  %v204 = vld [vmem:[%s0 + $0x5e8] sm:$0xff]
  %v205 = vld [vmem:[%s0 + $0x5f0] sm:$0xff]
  %v206 = vld [vmem:[%s0 + $0x5f8] sm:$0xff]
  %v207 = vld [vmem:[%s0 + $0x600] sm:$0xff]
  %v208 = vld [vmem:[%s0 + $0x608] sm:$0xff]
  %v209 = vld [vmem:[%s0 + $0x610] sm:$0xff]
  %v210 = vld [vmem:[%s0 + $0x618] sm:$0xff]
  %v211 = vld [vmem:[%s0 + $0x620] sm:$0xff]
  %v212 = vld [vmem:[%s0 + $0x628] sm:$0xff]
  %v213 = vld [vmem:[%s0 + $0x630] sm:$0xff]
  %v214 = vld [vmem:[%s0 + $0x638] sm:$0xff]
  %v215 = vld [vmem:[%s0 + $0x640] sm:$0xff]
  %v216 = vld [vmem:[%s0 + $0x648] sm:$0xff]
  %v217 = vld [vmem:[%s0 + $0x650] sm:$0xff]
  %v218 = vld [vmem:[%s0 + $0x658] sm:$0xff]
  %v219 = vld [vmem:[%s0 + $0x660] sm:$0xff]
  %v220 = vld [vmem:[%s0 + $0x668] sm:$0xff]
  %v221 = vld [vmem:[%s0 + $0x670] sm:$0xff]
  %v222 = vld [vmem:[%s0 + $0x678] sm:$0xff]
  %v223 = vld [vmem:[%s0 + $0x680] sm:$0xff]
  %v224 = vld [vmem:[%s0 + $0x688] sm:$0xff]
  %v225 = vld [vmem:[%s0 + $0x690] sm:$0xff]
  %v226 = vld [vmem:[%s0 + $0x698] sm:$0xff]
  %v227 = vld [vmem:[%s0 + $0x6a0] sm:$0xff]
  %v228 = vld [vmem:[%s0 + $0x6a8] sm:$0xff]
  %v229 = vld [vmem:[%s0 + $0x6b0] sm:$0xff]
  %v230 = vld [vmem:[%s0 + $0x6b8] sm:$0xff]
  %v231 = vld [vmem:[%s0 + $0x6c0] sm:$0xff]
  %v232 = vld [vmem:[%s0 + $0x6c8] sm:$0xff]
  %v233 = vld [vmem:[%s0 + $0x6d0] sm:$0xff]
  %v234 = vld [vmem:[%s0 + $0x6d8] sm:$0xff]
  %v235 = vld [vmem:[%s0 + $0x6e0] sm:$0xff]
  %v236 = vld [vmem:[%s0 + $0x6e8] sm:$0xff]
  %v237 = vld [vmem:[%s0 + $0x6f0] sm:$0xff]
  %v238 = vld [vmem:[%s0 + $0x6f8] sm:$0xff]
  %v239 = vld [vmem:[%s0 + $0x700] sm:$0xff]
  %v240 = vld [vmem:[%s0 + $0x708] sm:$0xff]
  %v241 = vld [vmem:[%s0 + $0x710] sm:$0xff]
  %v242 = vld [vmem:[%s0 + $0x718] sm:$0xff]
  %v243 = vld [vmem:[%s0 + $0x720] sm:$0xff]
  %v244 = vld [vmem:[%s0 + $0x728] sm:$0xff]
  %v245 = vld [vmem:[%s0 + $0x730] sm:$0xff]
  %v246 = vld [vmem:[%s0 + $0x738] sm:$0xff]
  %v247 = vld [vmem:[%s0 + $0x740] sm:$0xff]
  %v248 = vld [vmem:[%s0 + $0x748] sm:$0xff]
  %v249 = vld [vmem:[%s0 + $0x750] sm:$0xff]
  %v250 = vld [vmem:[%s0 + $0x758] sm:$0xff]
  %v251 = vld [vmem:[%s0 + $0x760] sm:$0xff]
  %v252 = vld [vmem:[%s0 + $0x768] sm:$0xff]
  %v253 = vld [vmem:[%s0 + $0x770] sm:$0xff]
  %v254 = vld [vmem:[%s0 + $0x778] sm:$0xff]
  %v255 = vld [vmem:[%s0 + $0x780] sm:$0xff]
  %v256 = vld [vmem:[%s0 + $0x788] sm:$0xff]
  %v257 = vld [vmem:[%s0 + $0x790] sm:$0xff]
  %v258 = vld [vmem:[%s0 + $0x798] sm:$0xff]
  %v259 = vld [vmem:[%s0 + $0x7a0] sm:$0xff]
  %v260 = vld [vmem:[%s0 + $0x7a8] sm:$0xff]
  %v261 = vld [vmem:[%s0 + $0x7b0] sm:$0xff]
  %v262 = vld [vmem:[%s0 + $0x7b8] sm:$0xff]
  %v263 = vld [vmem:[%s0 + $0x7c0] sm:$0xff]
  %v264 = vld [vmem:[%s0 + $0x7c8] sm:$0xff]
  %v265 = vld [vmem:[%s0 + $0x7d0] sm:$0xff]
  %v266 = vld [vmem:[%s0 + $0x7d8] sm:$0xff]
  %v267 = vld [vmem:[%s0 + $0x7e0] sm:$0xff]
  %v268 = vld [vmem:[%s0 + $0x7e8] sm:$0xff]
  %v269 = vld [vmem:[%s0 + $0x7f0] sm:$0xff]
  %v270 = vld [vmem:[%s0 + $0x7f8] sm:$0xff]
  %v271 = vld [vmem:[%s0 + $0x800] sm:$0xff]
  %v272 = vld [vmem:[%s0 + $0x808] sm:$0xff]
  %v273 = vld [vmem:[%s1] sm:$0xff]
  %v274 = vld [vmem:[%s1 + $0x8] sm:$0xff]
  %v275 = vld [vmem:[%s1 + $0x10] sm:$0xff]
  %v276 = vld [vmem:[%s1 + $0x18] sm:$0xff]
  %v277 = vld [vmem:[%s1 + $0x20] sm:$0xff]
  %v278 = vld [vmem:[%s1 + $0x28] sm:$0xff]
  %v279 = vld [vmem:[%s1 + $0x30] sm:$0xff]
  %v280 = vld [vmem:[%s1 + $0x38] sm:$0xff]
  %v281 = vld [vmem:[%s1 + $0x40] sm:$0xff]
  %v282 = vld [vmem:[%s1 + $0x48] sm:$0xff]
  %v283 = vld [vmem:[%s1 + $0x50] sm:$0xff]
  %v284 = vld [vmem:[%s1 + $0x58] sm:$0xff]
  %v285 = vld [vmem:[%s1 + $0x60] sm:$0xff]
  %v286 = vld [vmem:[%s1 + $0x68] sm:$0xff]
  %v287 = vld [vmem:[%s1 + $0x70] sm:$0xff]
  %v288 = vld [vmem:[%s1 + $0x78] sm:$0xff]
  %v289 = vld [vmem:[%s1 + $0x80] sm:$0xff]
  %v290 = vld [vmem:[%s1 + $0x88] sm:$0xff]
  %v291 = vld [vmem:[%s1 + $0x90] sm:$0xff]
  %v292 = vld [vmem:[%s1 + $0x98] sm:$0xff]
  %v293 = vld [vmem:[%s1 + $0xa0] sm:$0xff]
  %v294 = vld [vmem:[%s1 + $0xa8] sm:$0xff]
  %v295 = vld [vmem:[%s1 + $0xb0] sm:$0xff]
  %v296 = vld [vmem:[%s1 + $0xb8] sm:$0xff]
  %v297 = vld [vmem:[%s1 + $0xc0] sm:$0xff]
  %v298 = vld [vmem:[%s1 + $0xc8] sm:$0xff]
  %v299 = vld [vmem:[%s1 + $0xd0] sm:$0xff]
  %v300 = vld [vmem:[%s1 + $0xd8] sm:$0xff]
  %v301 = vld [vmem:[%s1 + $0xe0] sm:$0xff]
  %v302 = vld [vmem:[%s1 + $0xe8] sm:$0xff]
  %v303 = vld [vmem:[%s1 + $0xf0] sm:$0xff]
  %v304 = vld [vmem:[%s1 + $0xf8] sm:$0xff]
  %v305 = vld [vmem:[%s1 + $0x100] sm:$0xff]
  %v306 = vld [vmem:[%s1 + $0x108] sm:$0xff]
  %v307 = vld [vmem:[%s1 + $0x110] sm:$0xff]
  %v308 = vld [vmem:[%s1 + $0x118] sm:$0xff]
  %v309 = vld [vmem:[%s1 + $0x120] sm:$0xff]
  %v310 = vld [vmem:[%s1 + $0x128] sm:$0xff]
  %v311 = vld [vmem:[%s1 + $0x130] sm:$0xff]
  %v312 = vld [vmem:[%s1 + $0x138] sm:$0xff]
  %v313 = vld [vmem:[%s1 + $0x140] sm:$0xff]
  %v314 = vld [vmem:[%s1 + $0x148] sm:$0xff]
  %v315 = vld [vmem:[%s1 + $0x150] sm:$0xff]
  %v316 = vld [vmem:[%s1 + $0x158] sm:$0xff]
  %v317 = vld [vmem:[%s1 + $0x160] sm:$0xff]
  %v318 = vld [vmem:[%s1 + $0x168] sm:$0xff]
  %v319 = vld [vmem:[%s1 + $0x170] sm:$0xff]
  %v320 = vld [vmem:[%s1 + $0x178] sm:$0xff]
  %v321 = vld [vmem:[%s1 + $0x180] sm:$0xff]
  %v322 = vld [vmem:[%s1 + $0x188] sm:$0xff]
  %v323 = vld [vmem:[%s1 + $0x190] sm:$0xff]
  %v324 = vld [vmem:[%s1 + $0x198] sm:$0xff]
  %v325 = vld [vmem:[%s1 + $0x1a0] sm:$0xff]
  %v326 = vld [vmem:[%s1 + $0x1a8] sm:$0xff]
  %v327 = vld [vmem:[%s1 + $0x1b0] sm:$0xff]
  %v328 = vld [vmem:[%s1 + $0x1b8] sm:$0xff]
  %v329 = vld [vmem:[%s1 + $0x1c0] sm:$0xff]
  %v330 = vld [vmem:[%s1 + $0x1c8] sm:$0xff]
  %v331 = vld [vmem:[%s1 + $0x1d0] sm:$0xff]
  %v332 = vld [vmem:[%s1 + $0x1d8] sm:$0xff]
  %v333 = vld [vmem:[%s1 + $0x1e0] sm:$0xff]
  %v334 = vld [vmem:[%s1 + $0x1e8] sm:$0xff]
  %v335 = vld [vmem:[%s1 + $0x1f0] sm:$0xff]
  %v336 = vld [vmem:[%s1 + $0x1f8] sm:$0xff]
  %v337 = vld [vmem:[%s1 + $0x200] sm:$0xff]
  %v338 = vld [vmem:[%s1 + $0x208] sm:$0xff]
  %v339 = vld [vmem:[%s1 + $0x210] sm:$0xff]
  %v340 = vld [vmem:[%s1 + $0x218] sm:$0xff]
  %v341 = vld [vmem:[%s1 + $0x220] sm:$0xff]
  %v342 = vld [vmem:[%s1 + $0x228] sm:$0xff]
  %v343 = vld [vmem:[%s1 + $0x230] sm:$0xff]
  %v344 = vld [vmem:[%s1 + $0x238] sm:$0xff]
  %v345 = vld [vmem:[%s1 + $0x240] sm:$0xff]
  %v346 = vld [vmem:[%s1 + $0x248] sm:$0xff]
  %v347 = vld [vmem:[%s1 + $0x250] sm:$0xff]
  %v348 = vld [vmem:[%s1 + $0x258] sm:$0xff]
  %v349 = vld [vmem:[%s1 + $0x260] sm:$0xff]
  %v350 = vld [vmem:[%s1 + $0x268] sm:$0xff]
  %v351 = vld [vmem:[%s1 + $0x270] sm:$0xff]
  %v352 = vld [vmem:[%s1 + $0x278] sm:$0xff]
  %v353 = vld [vmem:[%s1 + $0x280] sm:$0xff]
  %v354 = vld [vmem:[%s1 + $0x288] sm:$0xff]
  %v355 = vld [vmem:[%s1 + $0x290] sm:$0xff]
  %v356 = vld [vmem:[%s1 + $0x298] sm:$0xff]
  %v357 = vld [vmem:[%s1 + $0x2a0] sm:$0xff]
  %v358 = vld [vmem:[%s1 + $0x2a8] sm:$0xff]
  %v359 = vld [vmem:[%s1 + $0x2b0] sm:$0xff]
  %v360 = vld [vmem:[%s1 + $0x2b8] sm:$0xff]
  %v361 = vld [vmem:[%s1 + $0x2c0] sm:$0xff]
  %v362 = vld [vmem:[%s1 + $0x2c8] sm:$0xff]
  %v363 = vld [vmem:[%s1 + $0x2d0] sm:$0xff]
  %v364 = vld [vmem:[%s1 + $0x2d8] sm:$0xff]
  %v365 = vld [vmem:[%s1 + $0x2e0] sm:$0xff]
  %v366 = vld [vmem:[%s1 + $0x2e8] sm:$0xff]
  %v367 = vld [vmem:[%s1 + $0x2f0] sm:$0xff]
  %v368 = vld [vmem:[%s1 + $0x2f8] sm:$0xff]
  %v369 = vld [vmem:[%s1 + $0x300] sm:$0xff]
  %v370 = vld [vmem:[%s1 + $0x308] sm:$0xff]
  %v371 = vld [vmem:[%s1 + $0x310] sm:$0xff]
  %v372 = vld [vmem:[%s1 + $0x318] sm:$0xff]
  %v373 = vld [vmem:[%s1 + $0x320] sm:$0xff]
  %v374 = vld [vmem:[%s1 + $0x328] sm:$0xff]
  %v375 = vld [vmem:[%s1 + $0x330] sm:$0xff]
  %v376 = vld [vmem:[%s1 + $0x338] sm:$0xff]
  %v377 = vld [vmem:[%s1 + $0x340] sm:$0xff]
  %v378 = vld [vmem:[%s1 + $0x348] sm:$0xff]
  %v379 = vld [vmem:[%s1 + $0x350] sm:$0xff]
  %v380 = vld [vmem:[%s1 + $0x358] sm:$0xff]
  %v381 = vld [vmem:[%s1 + $0x360] sm:$0xff]
  %v382 = vld [vmem:[%s1 + $0x368] sm:$0xff]
  %v383 = vld [vmem:[%s1 + $0x370] sm:$0xff]
  %v384 = vld [vmem:[%s1 + $0x378] sm:$0xff]
  %v385 = vld [vmem:[%s1 + $0x380] sm:$0xff]
  %v386 = vld [vmem:[%s1 + $0x388] sm:$0xff]
  %v387 = vld [vmem:[%s1 + $0x390] sm:$0xff]
  %v388 = vld [vmem:[%s1 + $0x398] sm:$0xff]
  %v389 = vld [vmem:[%s1 + $0x3a0] sm:$0xff]
  %v390 = vld [vmem:[%s1 + $0x3a8] sm:$0xff]
  %v391 = vld [vmem:[%s1 + $0x3b0] sm:$0xff]
  %v392 = vld [vmem:[%s1 + $0x3b8] sm:$0xff]
  %v393 = vld [vmem:[%s1 + $0x3c0] sm:$0xff]
  %v394 = vld [vmem:[%s1 + $0x3c8] sm:$0xff]
  %v395 = vld [vmem:[%s1 + $0x3d0] sm:$0xff]
  %v396 = vld [vmem:[%s1 + $0x3d8] sm:$0xff]
  %v397 = vld [vmem:[%s1 + $0x3e0] sm:$0xff]
  %v398 = vld [vmem:[%s1 + $0x3e8] sm:$0xff]
  %v399 = vld [vmem:[%s1 + $0x3f0] sm:$0xff]
  %v400 = vld [vmem:[%s1 + $0x3f8] sm:$0xff]
  %v401 = vld [vmem:[%s1 + $0x400] sm:$0xff]
  %v402 = vld [vmem:[%s1 + $0x408] sm:$0xff]
  %v403 = vld [vmem:[%s1 + $0x410] sm:$0xff]
  %v404 = vld [vmem:[%s1 + $0x418] sm:$0xff]
  %v405 = vld [vmem:[%s1 + $0x420] sm:$0xff]
  %v406 = vld [vmem:[%s1 + $0x428] sm:$0xff]
  %v407 = vld [vmem:[%s1 + $0x430] sm:$0xff]
  %v408 = vld [vmem:[%s1 + $0x438] sm:$0xff]
  %v409 = vld [vmem:[%s1 + $0x440] sm:$0xff]
  %v410 = vld [vmem:[%s1 + $0x448] sm:$0xff]
  %v411 = vld [vmem:[%s1 + $0x450] sm:$0xff]
  %v412 = vld [vmem:[%s1 + $0x458] sm:$0xff]
  %v413 = vld [vmem:[%s1 + $0x460] sm:$0xff]
  %v414 = vld [vmem:[%s1 + $0x468] sm:$0xff]
  %v415 = vld [vmem:[%s1 + $0x470] sm:$0xff]
  %v416 = vld [vmem:[%s1 + $0x478] sm:$0xff]
  %v417 = vld [vmem:[%s1 + $0x480] sm:$0xff]
  %v418 = vld [vmem:[%s1 + $0x488] sm:$0xff]
  %v419 = vld [vmem:[%s1 + $0x490] sm:$0xff]
  %v420 = vld [vmem:[%s1 + $0x498] sm:$0xff]
  %v421 = vld [vmem:[%s1 + $0x4a0] sm:$0xff]
  %v422 = vld [vmem:[%s1 + $0x4a8] sm:$0xff]
  %v423 = vld [vmem:[%s1 + $0x4b0] sm:$0xff]
  %v424 = vld [vmem:[%s1 + $0x4b8] sm:$0xff]
  %v425 = vld [vmem:[%s1 + $0x4c0] sm:$0xff]
  %v426 = vld [vmem:[%s1 + $0x4c8] sm:$0xff]
  %v427 = vld [vmem:[%s1 + $0x4d0] sm:$0xff]
  %v428 = vld [vmem:[%s1 + $0x4d8] sm:$0xff]
  %v429 = vld [vmem:[%s1 + $0x4e0] sm:$0xff]
  %v430 = vld [vmem:[%s1 + $0x4e8] sm:$0xff]
  %v431 = vld [vmem:[%s1 + $0x4f0] sm:$0xff]
  %v432 = vld [vmem:[%s1 + $0x4f8] sm:$0xff]
  %v433 = vld [vmem:[%s1 + $0x500] sm:$0xff]
  %v434 = vld [vmem:[%s1 + $0x508] sm:$0xff]
  %v435 = vld [vmem:[%s1 + $0x510] sm:$0xff]
  %v436 = vld [vmem:[%s1 + $0x518] sm:$0xff]
  %v437 = vld [vmem:[%s1 + $0x520] sm:$0xff]
  %v438 = vld [vmem:[%s1 + $0x528] sm:$0xff]
  %v439 = vld [vmem:[%s1 + $0x530] sm:$0xff]
  %v440 = vld [vmem:[%s1 + $0x538] sm:$0xff]
  %v441 = vld [vmem:[%s1 + $0x540] sm:$0xff]
  %v442 = vld [vmem:[%s1 + $0x548] sm:$0xff]
  %v443 = vld [vmem:[%s1 + $0x550] sm:$0xff]
  %v444 = vld [vmem:[%s1 + $0x558] sm:$0xff]
  %v445 = vld [vmem:[%s1 + $0x560] sm:$0xff]
  %v446 = vld [vmem:[%s1 + $0x568] sm:$0xff]
  %v447 = vld [vmem:[%s1 + $0x570] sm:$0xff]
  %v448 = vld [vmem:[%s1 + $0x578] sm:$0xff]
  %v449 = vld [vmem:[%s1 + $0x580] sm:$0xff]
  %v450 = vld [vmem:[%s1 + $0x588] sm:$0xff]
  %v451 = vld [vmem:[%s1 + $0x590] sm:$0xff]
  %v452 = vld [vmem:[%s1 + $0x598] sm:$0xff]
  %v453 = vld [vmem:[%s1 + $0x5a0] sm:$0xff]
  %v454 = vld [vmem:[%s1 + $0x5a8] sm:$0xff]
  %v455 = vld [vmem:[%s1 + $0x5b0] sm:$0xff]
  %v456 = vld [vmem:[%s1 + $0x5b8] sm:$0xff]
  %v457 = vld [vmem:[%s1 + $0x5c0] sm:$0xff]
  %v458 = vld [vmem:[%s1 + $0x5c8] sm:$0xff]
  %v459 = vld [vmem:[%s1 + $0x5d0] sm:$0xff]
  %v460 = vld [vmem:[%s1 + $0x5d8] sm:$0xff]
  %v461 = vld [vmem:[%s1 + $0x5e0] sm:$0xff]
  %v462 = vld [vmem:[%s1 + $0x5e8] sm:$0xff]
  %v463 = vld [vmem:[%s1 + $0x5f0] sm:$0xff]
  %v464 = vld [vmem:[%s1 + $0x5f8] sm:$0xff]
  %v465 = vld [vmem:[%s1 + $0x600] sm:$0xff]
  %v466 = vld [vmem:[%s1 + $0x608] sm:$0xff]
  %v467 = vld [vmem:[%s1 + $0x610] sm:$0xff]
  %v468 = vld [vmem:[%s1 + $0x618] sm:$0xff]
  %v469 = vld [vmem:[%s1 + $0x620] sm:$0xff]
  %v470 = vld [vmem:[%s1 + $0x628] sm:$0xff]
  %v471 = vld [vmem:[%s1 + $0x630] sm:$0xff]
  %v472 = vld [vmem:[%s1 + $0x638] sm:$0xff]
  %v473 = vld [vmem:[%s1 + $0x640] sm:$0xff]
  %v474 = vld [vmem:[%s1 + $0x648] sm:$0xff]
  %v475 = vld [vmem:[%s1 + $0x650] sm:$0xff]
  %v476 = vld [vmem:[%s1 + $0x658] sm:$0xff]
  %v477 = vld [vmem:[%s1 + $0x660] sm:$0xff]
  %v478 = vld [vmem:[%s1 + $0x668] sm:$0xff]
  %v479 = vld [vmem:[%s1 + $0x670] sm:$0xff]
  %v480 = vld [vmem:[%s1 + $0x678] sm:$0xff]
  %v481 = vld [vmem:[%s1 + $0x680] sm:$0xff]
  %v482 = vld [vmem:[%s1 + $0x688] sm:$0xff]
  %v483 = vld [vmem:[%s1 + $0x690] sm:$0xff]
  %v484 = vld [vmem:[%s1 + $0x698] sm:$0xff]
  %v485 = vld [vmem:[%s1 + $0x6a0] sm:$0xff]
  %v486 = vld [vmem:[%s1 + $0x6a8] sm:$0xff]
  %v487 = vld [vmem:[%s1 + $0x6b0] sm:$0xff]
  %v488 = vld [vmem:[%s1 + $0x6b8] sm:$0xff]
  %v489 = vld [vmem:[%s1 + $0x6c0] sm:$0xff]
  %v490 = vld [vmem:[%s1 + $0x6c8] sm:$0xff]
  %v491 = vld [vmem:[%s1 + $0x6d0] sm:$0xff]
  %v492 = vld [vmem:[%s1 + $0x6d8] sm:$0xff]
  %v493 = vld [vmem:[%s1 + $0x6e0] sm:$0xff]
  %v494 = vld [vmem:[%s1 + $0x6e8] sm:$0xff]
  %v495 = vld [vmem:[%s1 + $0x6f0] sm:$0xff]
  %v496 = vld [vmem:[%s1 + $0x6f8] sm:$0xff]
  %v497 = vld [vmem:[%s1 + $0x700] sm:$0xff]
  %v498 = vld [vmem:[%s1 + $0x708] sm:$0xff]
  %v499 = vld [vmem:[%s1 + $0x710] sm:$0xff]
  %v500 = vld [vmem:[%s1 + $0x718] sm:$0xff]
  %v501 = vld [vmem:[%s1 + $0x720] sm:$0xff]
  %v502 = vld [vmem:[%s1 + $0x728] sm:$0xff]
  %v503 = vld [vmem:[%s1 + $0x730] sm:$0xff]
  %v504 = vld [vmem:[%s1 + $0x738] sm:$0xff]
  %v505 = vld [vmem:[%s1 + $0x740] sm:$0xff]
  %v506 = vld [vmem:[%s1 + $0x748] sm:$0xff]
  %v507 = vld [vmem:[%s1 + $0x750] sm:$0xff]
  %v508 = vld [vmem:[%s1 + $0x758] sm:$0xff]
  %v509 = vld [vmem:[%s1 + $0x760] sm:$0xff]
  %v510 = vld [vmem:[%s1 + $0x768] sm:$0xff]
  %v511 = vld [vmem:[%s1 + $0x770] sm:$0xff]
  %v512 = vld [vmem:[%s1 + $0x778] sm:$0xff]
  %v513 = vld [vmem:[%s1 + $0x780] sm:$0xff]
  %v514 = vld [vmem:[%s1 + $0x788] sm:$0xff]
  %v515 = vld [vmem:[%s1 + $0x790] sm:$0xff]
  %v516 = vld [vmem:[%s1 + $0x798] sm:$0xff]
  %v517 = vld [vmem:[%s1 + $0x7a0] sm:$0xff]
  %v518 = vld [vmem:[%s1 + $0x7a8] sm:$0xff]
  %v519 = vld [vmem:[%s1 + $0x7b0] sm:$0xff]
  %v520 = vld [vmem:[%s1 + $0x7b8] sm:$0xff]
  %v521 = vld [vmem:[%s1 + $0x7c0] sm:$0xff]
  %v522 = vld [vmem:[%s1 + $0x7c8] sm:$0xff]
  %v523 = vld [vmem:[%s1 + $0x7d0] sm:$0xff]
  %v524 = vld [vmem:[%s1 + $0x7d8] sm:$0xff]
  %v525 = vld [vmem:[%s1 + $0x7e0] sm:$0xff]
  %v526 = vld [vmem:[%s1 + $0x7e8] sm:$0xff]
  %v527 = vld [vmem:[%s1 + $0x7f0] sm:$0xff]
  %v528 = vld [vmem:[%s1 + $0x7f8] sm:$0xff]
  %v529 = vld [vmem:[%s1 + $0x800] sm:$0xff]
  %v530 = vld [vmem:[%s1 + $0x808] sm:$0xff]
  %532 = vset.pattern.permute.xlu0 0
  %533 = vperm.xlu0 %532, %v273
  %v534 = vpop.permute.xlu0 %533
  %537 = vset.pattern.permute.xlu0 0
  %538 = vperm.xlu0 %537, %v274
  %v539 = vpop.permute.xlu0 %538
  %542 = vset.pattern.permute.xlu0 0
  %543 = vperm.xlu0 %542, %v275
  %v544 = vpop.permute.xlu0 %543
  %547 = vset.pattern.permute.xlu0 0
  %548 = vperm.xlu0 %547, %v276
  %v549 = vpop.permute.xlu0 %548
  %552 = vset.pattern.permute.xlu0 0
  %553 = vperm.xlu0 %552, %v277
  %v554 = vpop.permute.xlu0 %553
  %557 = vset.pattern.permute.xlu0 0
  %558 = vperm.xlu0 %557, %v278
  %v559 = vpop.permute.xlu0 %558
  %562 = vset.pattern.permute.xlu0 0
  %563 = vperm.xlu0 %562, %v279
  %v564 = vpop.permute.xlu0 %563
  %567 = vset.pattern.permute.xlu0 0
  %568 = vperm.xlu0 %567, %v280
  %v569 = vpop.permute.xlu0 %568
  %572 = vset.pattern.permute.xlu0 0
  %573 = vperm.xlu0 %572, %v281
  %v574 = vpop.permute.xlu0 %573
  %577 = vset.pattern.permute.xlu0 0
  %578 = vperm.xlu0 %577, %v282
  %v579 = vpop.permute.xlu0 %578
  %582 = vset.pattern.permute.xlu0 0
  %583 = vperm.xlu0 %582, %v283
  %v584 = vpop.permute.xlu0 %583
  %587 = vset.pattern.permute.xlu0 0
  %588 = vperm.xlu0 %587, %v284
  %v589 = vpop.permute.xlu0 %588
  %592 = vset.pattern.permute.xlu0 0
  %593 = vperm.xlu0 %592, %v285
  %v594 = vpop.permute.xlu0 %593
  %597 = vset.pattern.permute.xlu0 0
  %598 = vperm.xlu0 %597, %v286
  %v599 = vpop.permute.xlu0 %598
  %602 = vset.pattern.permute.xlu0 0
  %603 = vperm.xlu0 %602, %v287
  %v604 = vpop.permute.xlu0 %603
  %607 = vset.pattern.permute.xlu0 0
  %608 = vperm.xlu0 %607, %v288
  %v609 = vpop.permute.xlu0 %608
  %612 = vset.pattern.permute.xlu0 0
  %613 = vperm.xlu0 %612, %v289
  %v614 = vpop.permute.xlu0 %613
  %617 = vset.pattern.permute.xlu0 0
  %618 = vperm.xlu0 %617, %v290
  %v619 = vpop.permute.xlu0 %618
  %622 = vset.pattern.permute.xlu0 0
  %623 = vperm.xlu0 %622, %v291
  %v624 = vpop.permute.xlu0 %623
  %627 = vset.pattern.permute.xlu0 0
  %628 = vperm.xlu0 %627, %v292
  %v629 = vpop.permute.xlu0 %628
  %632 = vset.pattern.permute.xlu0 0
  %633 = vperm.xlu0 %632, %v293
  %v634 = vpop.permute.xlu0 %633
  %637 = vset.pattern.permute.xlu0 0
  %638 = vperm.xlu0 %637, %v294
  %v639 = vpop.permute.xlu0 %638
  %642 = vset.pattern.permute.xlu0 0
  %643 = vperm.xlu0 %642, %v295
  %v644 = vpop.permute.xlu0 %643
  %647 = vset.pattern.permute.xlu0 0
  %648 = vperm.xlu0 %647, %v296
  %v649 = vpop.permute.xlu0 %648
  %652 = vset.pattern.permute.xlu0 0
  %653 = vperm.xlu0 %652, %v297
  %v654 = vpop.permute.xlu0 %653
  %657 = vset.pattern.permute.xlu0 0
  %658 = vperm.xlu0 %657, %v298
  %v659 = vpop.permute.xlu0 %658
  %662 = vset.pattern.permute.xlu0 0
  %663 = vperm.xlu0 %662, %v299
  %v664 = vpop.permute.xlu0 %663
  %667 = vset.pattern.permute.xlu0 0
  %668 = vperm.xlu0 %667, %v300
  %v669 = vpop.permute.xlu0 %668
  %672 = vset.pattern.permute.xlu0 0
  %673 = vperm.xlu0 %672, %v301
  %v674 = vpop.permute.xlu0 %673
  %677 = vset.pattern.permute.xlu0 0
  %678 = vperm.xlu0 %677, %v302
  %v679 = vpop.permute.xlu0 %678
  %682 = vset.pattern.permute.xlu0 0
  %683 = vperm.xlu0 %682, %v303
  %v684 = vpop.permute.xlu0 %683
  %687 = vset.pattern.permute.xlu0 0
  %688 = vperm.xlu0 %687, %v304
  %v689 = vpop.permute.xlu0 %688
  %692 = vset.pattern.permute.xlu0 0
  %693 = vperm.xlu0 %692, %v305
  %v694 = vpop.permute.xlu0 %693
  %697 = vset.pattern.permute.xlu0 0
  %698 = vperm.xlu0 %697, %v306
  %v699 = vpop.permute.xlu0 %698
  %702 = vset.pattern.permute.xlu0 0
  %703 = vperm.xlu0 %702, %v307
  %v704 = vpop.permute.xlu0 %703
  %707 = vset.pattern.permute.xlu0 0
  %708 = vperm.xlu0 %707, %v308
  %v709 = vpop.permute.xlu0 %708
  %712 = vset.pattern.permute.xlu0 0
  %713 = vperm.xlu0 %712, %v309
  %v714 = vpop.permute.xlu0 %713
  %717 = vset.pattern.permute.xlu0 0
  %718 = vperm.xlu0 %717, %v310
  %v719 = vpop.permute.xlu0 %718
  %722 = vset.pattern.permute.xlu0 0
  %723 = vperm.xlu0 %722, %v311
  %v724 = vpop.permute.xlu0 %723
  %727 = vset.pattern.permute.xlu0 0
  %728 = vperm.xlu0 %727, %v312
  %v729 = vpop.permute.xlu0 %728
  %732 = vset.pattern.permute.xlu0 0
  %733 = vperm.xlu0 %732, %v313
  %v734 = vpop.permute.xlu0 %733
  %737 = vset.pattern.permute.xlu0 0
  %738 = vperm.xlu0 %737, %v314
  %v739 = vpop.permute.xlu0 %738
  %742 = vset.pattern.permute.xlu0 0
  %743 = vperm.xlu0 %742, %v315
  %v744 = vpop.permute.xlu0 %743
  %747 = vset.pattern.permute.xlu0 0
  %748 = vperm.xlu0 %747, %v316
  %v749 = vpop.permute.xlu0 %748
  %752 = vset.pattern.permute.xlu0 0
  %753 = vperm.xlu0 %752, %v317
  %v754 = vpop.permute.xlu0 %753
  %757 = vset.pattern.permute.xlu0 0
  %758 = vperm.xlu0 %757, %v318
  %v759 = vpop.permute.xlu0 %758
  %762 = vset.pattern.permute.xlu0 0
  %763 = vperm.xlu0 %762, %v319
  %v764 = vpop.permute.xlu0 %763
  %767 = vset.pattern.permute.xlu0 0
  %768 = vperm.xlu0 %767, %v320
  %v769 = vpop.permute.xlu0 %768
  %772 = vset.pattern.permute.xlu0 0
  %773 = vperm.xlu0 %772, %v321
  %v774 = vpop.permute.xlu0 %773
  %777 = vset.pattern.permute.xlu0 0
  %778 = vperm.xlu0 %777, %v322
  %v779 = vpop.permute.xlu0 %778
  %782 = vset.pattern.permute.xlu0 0
  %783 = vperm.xlu0 %782, %v323
  %v784 = vpop.permute.xlu0 %783
  %787 = vset.pattern.permute.xlu0 0
  %788 = vperm.xlu0 %787, %v324
  %v789 = vpop.permute.xlu0 %788
  %792 = vset.pattern.permute.xlu0 0
  %793 = vperm.xlu0 %792, %v325
  %v794 = vpop.permute.xlu0 %793
  %797 = vset.pattern.permute.xlu0 0
  %798 = vperm.xlu0 %797, %v326
  %v799 = vpop.permute.xlu0 %798
  %802 = vset.pattern.permute.xlu0 0
  %803 = vperm.xlu0 %802, %v327
  %v804 = vpop.permute.xlu0 %803
  %807 = vset.pattern.permute.xlu0 0
  %808 = vperm.xlu0 %807, %v328
  %v809 = vpop.permute.xlu0 %808
  %812 = vset.pattern.permute.xlu0 0
  %813 = vperm.xlu0 %812, %v329
  %v814 = vpop.permute.xlu0 %813
  %817 = vset.pattern.permute.xlu0 0
  %818 = vperm.xlu0 %817, %v330
  %v819 = vpop.permute.xlu0 %818
  %822 = vset.pattern.permute.xlu0 0
  %823 = vperm.xlu0 %822, %v331
  %v824 = vpop.permute.xlu0 %823
  %827 = vset.pattern.permute.xlu0 0
  %828 = vperm.xlu0 %827, %v332
  %v829 = vpop.permute.xlu0 %828
  %832 = vset.pattern.permute.xlu0 0
  %833 = vperm.xlu0 %832, %v333
  %v834 = vpop.permute.xlu0 %833
  %837 = vset.pattern.permute.xlu0 0
  %838 = vperm.xlu0 %837, %v334
  %v839 = vpop.permute.xlu0 %838
  %842 = vset.pattern.permute.xlu0 0
  %843 = vperm.xlu0 %842, %v335
  %v844 = vpop.permute.xlu0 %843
  %847 = vset.pattern.permute.xlu0 0
  %848 = vperm.xlu0 %847, %v336
  %v849 = vpop.permute.xlu0 %848
  %852 = vset.pattern.permute.xlu0 0
  %853 = vperm.xlu0 %852, %v337
  %v854 = vpop.permute.xlu0 %853
  %857 = vset.pattern.permute.xlu0 0
  %858 = vperm.xlu0 %857, %v338
  %v859 = vpop.permute.xlu0 %858
  %862 = vset.pattern.permute.xlu0 0
  %863 = vperm.xlu0 %862, %v339
  %v864 = vpop.permute.xlu0 %863
  %867 = vset.pattern.permute.xlu0 0
  %868 = vperm.xlu0 %867, %v340
  %v869 = vpop.permute.xlu0 %868
  %872 = vset.pattern.permute.xlu0 0
  %873 = vperm.xlu0 %872, %v341
  %v874 = vpop.permute.xlu0 %873
  %877 = vset.pattern.permute.xlu0 0
  %878 = vperm.xlu0 %877, %v342
  %v879 = vpop.permute.xlu0 %878
  %882 = vset.pattern.permute.xlu0 0
  %883 = vperm.xlu0 %882, %v343
  %v884 = vpop.permute.xlu0 %883
  %887 = vset.pattern.permute.xlu0 0
  %888 = vperm.xlu0 %887, %v344
  %v889 = vpop.permute.xlu0 %888
  %892 = vset.pattern.permute.xlu0 0
  %893 = vperm.xlu0 %892, %v345
  %v894 = vpop.permute.xlu0 %893
  %897 = vset.pattern.permute.xlu0 0
  %898 = vperm.xlu0 %897, %v346
  %v899 = vpop.permute.xlu0 %898
  %902 = vset.pattern.permute.xlu0 0
  %903 = vperm.xlu0 %902, %v347
  %v904 = vpop.permute.xlu0 %903
  %907 = vset.pattern.permute.xlu0 0
  %908 = vperm.xlu0 %907, %v348
  %v909 = vpop.permute.xlu0 %908
  %912 = vset.pattern.permute.xlu0 0
  %913 = vperm.xlu0 %912, %v349
  %v914 = vpop.permute.xlu0 %913
  %917 = vset.pattern.permute.xlu0 0
  %918 = vperm.xlu0 %917, %v350
  %v919 = vpop.permute.xlu0 %918
  %922 = vset.pattern.permute.xlu0 0
  %923 = vperm.xlu0 %922, %v351
  %v924 = vpop.permute.xlu0 %923
  %927 = vset.pattern.permute.xlu0 0
  %928 = vperm.xlu0 %927, %v352
  %v929 = vpop.permute.xlu0 %928
  %932 = vset.pattern.permute.xlu0 0
  %933 = vperm.xlu0 %932, %v353
  %v934 = vpop.permute.xlu0 %933
  %937 = vset.pattern.permute.xlu0 0
  %938 = vperm.xlu0 %937, %v354
  %v939 = vpop.permute.xlu0 %938
  %942 = vset.pattern.permute.xlu0 0
  %943 = vperm.xlu0 %942, %v355
  %v944 = vpop.permute.xlu0 %943
  %947 = vset.pattern.permute.xlu0 0
  %948 = vperm.xlu0 %947, %v356
  %v949 = vpop.permute.xlu0 %948
  %952 = vset.pattern.permute.xlu0 0
  %953 = vperm.xlu0 %952, %v357
  %v954 = vpop.permute.xlu0 %953
  %957 = vset.pattern.permute.xlu0 0
  %958 = vperm.xlu0 %957, %v358
  %v959 = vpop.permute.xlu0 %958
  %962 = vset.pattern.permute.xlu0 0
  %963 = vperm.xlu0 %962, %v359
  %v964 = vpop.permute.xlu0 %963
  %967 = vset.pattern.permute.xlu0 0
  %968 = vperm.xlu0 %967, %v360
  %v969 = vpop.permute.xlu0 %968
  %972 = vset.pattern.permute.xlu0 0
  %973 = vperm.xlu0 %972, %v361
  %v974 = vpop.permute.xlu0 %973
  %977 = vset.pattern.permute.xlu0 0
  %978 = vperm.xlu0 %977, %v362
  %v979 = vpop.permute.xlu0 %978
  %982 = vset.pattern.permute.xlu0 0
  %983 = vperm.xlu0 %982, %v363
  %v984 = vpop.permute.xlu0 %983
  %987 = vset.pattern.permute.xlu0 0
  %988 = vperm.xlu0 %987, %v364
  %v989 = vpop.permute.xlu0 %988
  %992 = vset.pattern.permute.xlu0 0
  %993 = vperm.xlu0 %992, %v365
  %v994 = vpop.permute.xlu0 %993
  %997 = vset.pattern.permute.xlu0 0
  %998 = vperm.xlu0 %997, %v366
  %v999 = vpop.permute.xlu0 %998
  %1002 = vset.pattern.permute.xlu0 0
  %1003 = vperm.xlu0 %1002, %v367
  %v1004 = vpop.permute.xlu0 %1003
  %1007 = vset.pattern.permute.xlu0 0
  %1008 = vperm.xlu0 %1007, %v368
  %v1009 = vpop.permute.xlu0 %1008
  %1012 = vset.pattern.permute.xlu0 0
  %1013 = vperm.xlu0 %1012, %v369
  %v1014 = vpop.permute.xlu0 %1013
  %1017 = vset.pattern.permute.xlu0 0
  %1018 = vperm.xlu0 %1017, %v370
  %v1019 = vpop.permute.xlu0 %1018
  %1022 = vset.pattern.permute.xlu0 0
  %1023 = vperm.xlu0 %1022, %v371
  %v1024 = vpop.permute.xlu0 %1023
  %1027 = vset.pattern.permute.xlu0 0
  %1028 = vperm.xlu0 %1027, %v372
  %v1029 = vpop.permute.xlu0 %1028
  %1032 = vset.pattern.permute.xlu0 0
  %1033 = vperm.xlu0 %1032, %v373
  %v1034 = vpop.permute.xlu0 %1033
  %1037 = vset.pattern.permute.xlu0 0
  %1038 = vperm.xlu0 %1037, %v374
  %v1039 = vpop.permute.xlu0 %1038
  %1042 = vset.pattern.permute.xlu0 0
  %1043 = vperm.xlu0 %1042, %v375
  %v1044 = vpop.permute.xlu0 %1043
  %1047 = vset.pattern.permute.xlu0 0
  %1048 = vperm.xlu0 %1047, %v376
  %v1049 = vpop.permute.xlu0 %1048
  %1052 = vset.pattern.permute.xlu0 0
  %1053 = vperm.xlu0 %1052, %v377
  %v1054 = vpop.permute.xlu0 %1053
  %1057 = vset.pattern.permute.xlu0 0
  %1058 = vperm.xlu0 %1057, %v378
  %v1059 = vpop.permute.xlu0 %1058
  %1062 = vset.pattern.permute.xlu0 0
  %1063 = vperm.xlu0 %1062, %v379
  %v1064 = vpop.permute.xlu0 %1063
  %1067 = vset.pattern.permute.xlu0 0
  %1068 = vperm.xlu0 %1067, %v380
  %v1069 = vpop.permute.xlu0 %1068
  %1072 = vset.pattern.permute.xlu0 0
  %1073 = vperm.xlu0 %1072, %v381
  %v1074 = vpop.permute.xlu0 %1073
  %1077 = vset.pattern.permute.xlu0 0
  %1078 = vperm.xlu0 %1077, %v382
  %v1079 = vpop.permute.xlu0 %1078
  %1082 = vset.pattern.permute.xlu0 0
  %1083 = vperm.xlu0 %1082, %v383
  %v1084 = vpop.permute.xlu0 %1083
  %1087 = vset.pattern.permute.xlu0 0
  %1088 = vperm.xlu0 %1087, %v384
  %v1089 = vpop.permute.xlu0 %1088
  %1092 = vset.pattern.permute.xlu0 0
  %1093 = vperm.xlu0 %1092, %v385
  %v1094 = vpop.permute.xlu0 %1093
  %1097 = vset.pattern.permute.xlu0 0
  %1098 = vperm.xlu0 %1097, %v386
  %v1099 = vpop.permute.xlu0 %1098
  %1102 = vset.pattern.permute.xlu0 0
  %1103 = vperm.xlu0 %1102, %v387
  %v1104 = vpop.permute.xlu0 %1103
  %1107 = vset.pattern.permute.xlu0 0
  %1108 = vperm.xlu0 %1107, %v388
  %v1109 = vpop.permute.xlu0 %1108
  %1112 = vset.pattern.permute.xlu0 0
  %1113 = vperm.xlu0 %1112, %v389
  %v1114 = vpop.permute.xlu0 %1113
  %1117 = vset.pattern.permute.xlu0 0
  %1118 = vperm.xlu0 %1117, %v390
  %v1119 = vpop.permute.xlu0 %1118
  %1122 = vset.pattern.permute.xlu0 0
  %1123 = vperm.xlu0 %1122, %v391
  %v1124 = vpop.permute.xlu0 %1123
  %1127 = vset.pattern.permute.xlu0 0
  %1128 = vperm.xlu0 %1127, %v392
  %v1129 = vpop.permute.xlu0 %1128
  %1132 = vset.pattern.permute.xlu0 0
  %1133 = vperm.xlu0 %1132, %v393
  %v1134 = vpop.permute.xlu0 %1133
  %1137 = vset.pattern.permute.xlu0 0
  %1138 = vperm.xlu0 %1137, %v394
  %v1139 = vpop.permute.xlu0 %1138
  %1142 = vset.pattern.permute.xlu0 0
  %1143 = vperm.xlu0 %1142, %v395
  %v1144 = vpop.permute.xlu0 %1143
  %1147 = vset.pattern.permute.xlu0 0
  %1148 = vperm.xlu0 %1147, %v396
  %v1149 = vpop.permute.xlu0 %1148
  %1152 = vset.pattern.permute.xlu0 0
  %1153 = vperm.xlu0 %1152, %v397
  %v1154 = vpop.permute.xlu0 %1153
  %1157 = vset.pattern.permute.xlu0 0
  %1158 = vperm.xlu0 %1157, %v398
  %v1159 = vpop.permute.xlu0 %1158
  %1162 = vset.pattern.permute.xlu0 0
  %1163 = vperm.xlu0 %1162, %v399
  %v1164 = vpop.permute.xlu0 %1163
  %1167 = vset.pattern.permute.xlu0 0
  %1168 = vperm.xlu0 %1167, %v400
  %v1169 = vpop.permute.xlu0 %1168
  %1172 = vset.pattern.permute.xlu0 0
  %1173 = vperm.xlu0 %1172, %v401
  %v1174 = vpop.permute.xlu0 %1173
  %1177 = vset.pattern.permute.xlu0 0
  %1178 = vperm.xlu0 %1177, %v402
  %v1179 = vpop.permute.xlu0 %1178
  %1182 = vset.pattern.permute.xlu0 0
  %1183 = vperm.xlu0 %1182, %v403
  %v1184 = vpop.permute.xlu0 %1183
  %1187 = vset.pattern.permute.xlu0 0
  %1188 = vperm.xlu0 %1187, %v404
  %v1189 = vpop.permute.xlu0 %1188
  %1192 = vset.pattern.permute.xlu0 0
  %1193 = vperm.xlu0 %1192, %v405
  %v1194 = vpop.permute.xlu0 %1193
  %1197 = vset.pattern.permute.xlu0 0
  %1198 = vperm.xlu0 %1197, %v406
  %v1199 = vpop.permute.xlu0 %1198
  %1202 = vset.pattern.permute.xlu0 0
  %1203 = vperm.xlu0 %1202, %v407
  %v1204 = vpop.permute.xlu0 %1203
  %1207 = vset.pattern.permute.xlu0 0
  %1208 = vperm.xlu0 %1207, %v408
  %v1209 = vpop.permute.xlu0 %1208
  %1212 = vset.pattern.permute.xlu0 0
  %1213 = vperm.xlu0 %1212, %v409
  %v1214 = vpop.permute.xlu0 %1213
  %1217 = vset.pattern.permute.xlu0 0
  %1218 = vperm.xlu0 %1217, %v410
  %v1219 = vpop.permute.xlu0 %1218
  %1222 = vset.pattern.permute.xlu0 0
  %1223 = vperm.xlu0 %1222, %v411
  %v1224 = vpop.permute.xlu0 %1223
  %1227 = vset.pattern.permute.xlu0 0
  %1228 = vperm.xlu0 %1227, %v412
  %v1229 = vpop.permute.xlu0 %1228
  %1232 = vset.pattern.permute.xlu0 0
  %1233 = vperm.xlu0 %1232, %v413
  %v1234 = vpop.permute.xlu0 %1233
  %1237 = vset.pattern.permute.xlu0 0
  %1238 = vperm.xlu0 %1237, %v414
  %v1239 = vpop.permute.xlu0 %1238
  %1242 = vset.pattern.permute.xlu0 0
  %1243 = vperm.xlu0 %1242, %v415
  %v1244 = vpop.permute.xlu0 %1243
  %1247 = vset.pattern.permute.xlu0 0
  %1248 = vperm.xlu0 %1247, %v416
  %v1249 = vpop.permute.xlu0 %1248
  %1252 = vset.pattern.permute.xlu0 0
  %1253 = vperm.xlu0 %1252, %v417
  %v1254 = vpop.permute.xlu0 %1253
  %1257 = vset.pattern.permute.xlu0 0
  %1258 = vperm.xlu0 %1257, %v418
  %v1259 = vpop.permute.xlu0 %1258
  %1262 = vset.pattern.permute.xlu0 0
  %1263 = vperm.xlu0 %1262, %v419
  %v1264 = vpop.permute.xlu0 %1263
  %1267 = vset.pattern.permute.xlu0 0
  %1268 = vperm.xlu0 %1267, %v420
  %v1269 = vpop.permute.xlu0 %1268
  %1272 = vset.pattern.permute.xlu0 0
  %1273 = vperm.xlu0 %1272, %v421
  %v1274 = vpop.permute.xlu0 %1273
  %1277 = vset.pattern.permute.xlu0 0
  %1278 = vperm.xlu0 %1277, %v422
  %v1279 = vpop.permute.xlu0 %1278
  %1282 = vset.pattern.permute.xlu0 0
  %1283 = vperm.xlu0 %1282, %v423
  %v1284 = vpop.permute.xlu0 %1283
  %1287 = vset.pattern.permute.xlu0 0
  %1288 = vperm.xlu0 %1287, %v424
  %v1289 = vpop.permute.xlu0 %1288
  %1292 = vset.pattern.permute.xlu0 0
  %1293 = vperm.xlu0 %1292, %v425
  %v1294 = vpop.permute.xlu0 %1293
  %1297 = vset.pattern.permute.xlu0 0
  %1298 = vperm.xlu0 %1297, %v426
  %v1299 = vpop.permute.xlu0 %1298
  %1302 = vset.pattern.permute.xlu0 0
  %1303 = vperm.xlu0 %1302, %v427
  %v1304 = vpop.permute.xlu0 %1303
  %1307 = vset.pattern.permute.xlu0 0
  %1308 = vperm.xlu0 %1307, %v428
  %v1309 = vpop.permute.xlu0 %1308
  %1312 = vset.pattern.permute.xlu0 0
  %1313 = vperm.xlu0 %1312, %v429
  %v1314 = vpop.permute.xlu0 %1313
  %1317 = vset.pattern.permute.xlu0 0
  %1318 = vperm.xlu0 %1317, %v430
  %v1319 = vpop.permute.xlu0 %1318
  %1322 = vset.pattern.permute.xlu0 0
  %1323 = vperm.xlu0 %1322, %v431
  %v1324 = vpop.permute.xlu0 %1323
  %1327 = vset.pattern.permute.xlu0 0
  %1328 = vperm.xlu0 %1327, %v432
  %v1329 = vpop.permute.xlu0 %1328
  %1332 = vset.pattern.permute.xlu0 0
  %1333 = vperm.xlu0 %1332, %v433
  %v1334 = vpop.permute.xlu0 %1333
  %1337 = vset.pattern.permute.xlu0 0
  %1338 = vperm.xlu0 %1337, %v434
  %v1339 = vpop.permute.xlu0 %1338
  %1342 = vset.pattern.permute.xlu0 0
  %1343 = vperm.xlu0 %1342, %v435
  %v1344 = vpop.permute.xlu0 %1343
  %1347 = vset.pattern.permute.xlu0 0
  %1348 = vperm.xlu0 %1347, %v436
  %v1349 = vpop.permute.xlu0 %1348
  %1352 = vset.pattern.permute.xlu0 0
  %1353 = vperm.xlu0 %1352, %v437
  %v1354 = vpop.permute.xlu0 %1353
  %1357 = vset.pattern.permute.xlu0 0
  %1358 = vperm.xlu0 %1357, %v438
  %v1359 = vpop.permute.xlu0 %1358
  %1362 = vset.pattern.permute.xlu0 0
  %1363 = vperm.xlu0 %1362, %v439
  %v1364 = vpop.permute.xlu0 %1363
  %1367 = vset.pattern.permute.xlu0 0
  %1368 = vperm.xlu0 %1367, %v440
  %v1369 = vpop.permute.xlu0 %1368
  %1372 = vset.pattern.permute.xlu0 0
  %1373 = vperm.xlu0 %1372, %v441
  %v1374 = vpop.permute.xlu0 %1373
  %1377 = vset.pattern.permute.xlu0 0
  %1378 = vperm.xlu0 %1377, %v442
  %v1379 = vpop.permute.xlu0 %1378
  %1382 = vset.pattern.permute.xlu0 0
  %1383 = vperm.xlu0 %1382, %v443
  %v1384 = vpop.permute.xlu0 %1383
  %1387 = vset.pattern.permute.xlu0 0
  %1388 = vperm.xlu0 %1387, %v444
  %v1389 = vpop.permute.xlu0 %1388
  %1392 = vset.pattern.permute.xlu0 0
  %1393 = vperm.xlu0 %1392, %v445
  %v1394 = vpop.permute.xlu0 %1393
  %1397 = vset.pattern.permute.xlu0 0
  %1398 = vperm.xlu0 %1397, %v446
  %v1399 = vpop.permute.xlu0 %1398
  %1402 = vset.pattern.permute.xlu0 0
  %1403 = vperm.xlu0 %1402, %v447
  %v1404 = vpop.permute.xlu0 %1403
  %1407 = vset.pattern.permute.xlu0 0
  %1408 = vperm.xlu0 %1407, %v448
  %v1409 = vpop.permute.xlu0 %1408
  %1412 = vset.pattern.permute.xlu0 0
  %1413 = vperm.xlu0 %1412, %v449
  %v1414 = vpop.permute.xlu0 %1413
  %1417 = vset.pattern.permute.xlu0 0
  %1418 = vperm.xlu0 %1417, %v450
  %v1419 = vpop.permute.xlu0 %1418
  %1422 = vset.pattern.permute.xlu0 0
  %1423 = vperm.xlu0 %1422, %v451
  %v1424 = vpop.permute.xlu0 %1423
  %1427 = vset.pattern.permute.xlu0 0
  %1428 = vperm.xlu0 %1427, %v452
  %v1429 = vpop.permute.xlu0 %1428
  %1432 = vset.pattern.permute.xlu0 0
  %1433 = vperm.xlu0 %1432, %v453
  %v1434 = vpop.permute.xlu0 %1433
  %1437 = vset.pattern.permute.xlu0 0
  %1438 = vperm.xlu0 %1437, %v454
  %v1439 = vpop.permute.xlu0 %1438
  %1442 = vset.pattern.permute.xlu0 0
  %1443 = vperm.xlu0 %1442, %v455
  %v1444 = vpop.permute.xlu0 %1443
  %1447 = vset.pattern.permute.xlu0 0
  %1448 = vperm.xlu0 %1447, %v456
  %v1449 = vpop.permute.xlu0 %1448
  %1452 = vset.pattern.permute.xlu0 0
  %1453 = vperm.xlu0 %1452, %v457
  %v1454 = vpop.permute.xlu0 %1453
  %1457 = vset.pattern.permute.xlu0 0
  %1458 = vperm.xlu0 %1457, %v458
  %v1459 = vpop.permute.xlu0 %1458
  %1462 = vset.pattern.permute.xlu0 0
  %1463 = vperm.xlu0 %1462, %v459
  %v1464 = vpop.permute.xlu0 %1463
  %1467 = vset.pattern.permute.xlu0 0
  %1468 = vperm.xlu0 %1467, %v460
  %v1469 = vpop.permute.xlu0 %1468
  %1472 = vset.pattern.permute.xlu0 0
  %1473 = vperm.xlu0 %1472, %v461
  %v1474 = vpop.permute.xlu0 %1473
  %1477 = vset.pattern.permute.xlu0 0
  %1478 = vperm.xlu0 %1477, %v462
  %v1479 = vpop.permute.xlu0 %1478
  %1482 = vset.pattern.permute.xlu0 0
  %1483 = vperm.xlu0 %1482, %v463
  %v1484 = vpop.permute.xlu0 %1483
  %1487 = vset.pattern.permute.xlu0 0
  %1488 = vperm.xlu0 %1487, %v464
  %v1489 = vpop.permute.xlu0 %1488
  %1492 = vset.pattern.permute.xlu0 0
  %1493 = vperm.xlu0 %1492, %v465
  %v1494 = vpop.permute.xlu0 %1493
  %1497 = vset.pattern.permute.xlu0 0
  %1498 = vperm.xlu0 %1497, %v466
  %v1499 = vpop.permute.xlu0 %1498
  %1502 = vset.pattern.permute.xlu0 0
  %1503 = vperm.xlu0 %1502, %v467
  %v1504 = vpop.permute.xlu0 %1503
  %1507 = vset.pattern.permute.xlu0 0
  %1508 = vperm.xlu0 %1507, %v468
  %v1509 = vpop.permute.xlu0 %1508
  %1512 = vset.pattern.permute.xlu0 0
  %1513 = vperm.xlu0 %1512, %v469
  %v1514 = vpop.permute.xlu0 %1513
  %1517 = vset.pattern.permute.xlu0 0
  %1518 = vperm.xlu0 %1517, %v470
  %v1519 = vpop.permute.xlu0 %1518
  %1522 = vset.pattern.permute.xlu0 0
  %1523 = vperm.xlu0 %1522, %v471
  %v1524 = vpop.permute.xlu0 %1523
  %1527 = vset.pattern.permute.xlu0 0
  %1528 = vperm.xlu0 %1527, %v472
  %v1529 = vpop.permute.xlu0 %1528
  %1532 = vset.pattern.permute.xlu0 0
  %1533 = vperm.xlu0 %1532, %v473
  %v1534 = vpop.permute.xlu0 %1533
  %1537 = vset.pattern.permute.xlu0 0
  %1538 = vperm.xlu0 %1537, %v474
  %v1539 = vpop.permute.xlu0 %1538
  %1542 = vset.pattern.permute.xlu0 0
  %1543 = vperm.xlu0 %1542, %v475
  %v1544 = vpop.permute.xlu0 %1543
  %1547 = vset.pattern.permute.xlu0 0
  %1548 = vperm.xlu0 %1547, %v476
  %v1549 = vpop.permute.xlu0 %1548
  %1552 = vset.pattern.permute.xlu0 0
  %1553 = vperm.xlu0 %1552, %v477
  %v1554 = vpop.permute.xlu0 %1553
  %1557 = vset.pattern.permute.xlu0 0
  %1558 = vperm.xlu0 %1557, %v478
  %v1559 = vpop.permute.xlu0 %1558
  %1562 = vset.pattern.permute.xlu0 0
  %1563 = vperm.xlu0 %1562, %v479
  %v1564 = vpop.permute.xlu0 %1563
  %1567 = vset.pattern.permute.xlu0 0
  %1568 = vperm.xlu0 %1567, %v480
  %v1569 = vpop.permute.xlu0 %1568
  %1572 = vset.pattern.permute.xlu0 0
  %1573 = vperm.xlu0 %1572, %v481
  %v1574 = vpop.permute.xlu0 %1573
  %1577 = vset.pattern.permute.xlu0 0
  %1578 = vperm.xlu0 %1577, %v482
  %v1579 = vpop.permute.xlu0 %1578
  %1582 = vset.pattern.permute.xlu0 0
  %1583 = vperm.xlu0 %1582, %v483
  %v1584 = vpop.permute.xlu0 %1583
  %1587 = vset.pattern.permute.xlu0 0
  %1588 = vperm.xlu0 %1587, %v484
  %v1589 = vpop.permute.xlu0 %1588
  %1592 = vset.pattern.permute.xlu0 0
  %1593 = vperm.xlu0 %1592, %v485
  %v1594 = vpop.permute.xlu0 %1593
  %1597 = vset.pattern.permute.xlu0 0
  %1598 = vperm.xlu0 %1597, %v486
  %v1599 = vpop.permute.xlu0 %1598
  %1602 = vset.pattern.permute.xlu0 0
  %1603 = vperm.xlu0 %1602, %v487
  %v1604 = vpop.permute.xlu0 %1603
  %1607 = vset.pattern.permute.xlu0 0
  %1608 = vperm.xlu0 %1607, %v488
  %v1609 = vpop.permute.xlu0 %1608
  %1612 = vset.pattern.permute.xlu0 0
  %1613 = vperm.xlu0 %1612, %v489
  %v1614 = vpop.permute.xlu0 %1613
  %1617 = vset.pattern.permute.xlu0 0
  %1618 = vperm.xlu0 %1617, %v490
  %v1619 = vpop.permute.xlu0 %1618
  %1622 = vset.pattern.permute.xlu0 0
  %1623 = vperm.xlu0 %1622, %v491
  %v1624 = vpop.permute.xlu0 %1623
  %1627 = vset.pattern.permute.xlu0 0
  %1628 = vperm.xlu0 %1627, %v492
  %v1629 = vpop.permute.xlu0 %1628
  %1632 = vset.pattern.permute.xlu0 0
  %1633 = vperm.xlu0 %1632, %v493
  %v1634 = vpop.permute.xlu0 %1633
  %1637 = vset.pattern.permute.xlu0 0
  %1638 = vperm.xlu0 %1637, %v494
  %v1639 = vpop.permute.xlu0 %1638
  %1642 = vset.pattern.permute.xlu0 0
  %1643 = vperm.xlu0 %1642, %v495
  %v1644 = vpop.permute.xlu0 %1643
  %1647 = vset.pattern.permute.xlu0 0
  %1648 = vperm.xlu0 %1647, %v496
  %v1649 = vpop.permute.xlu0 %1648
  %1652 = vset.pattern.permute.xlu0 0
  %1653 = vperm.xlu0 %1652, %v497
  %v1654 = vpop.permute.xlu0 %1653
  %1657 = vset.pattern.permute.xlu0 0
  %1658 = vperm.xlu0 %1657, %v498
  %v1659 = vpop.permute.xlu0 %1658
  %1662 = vset.pattern.permute.xlu0 0
  %1663 = vperm.xlu0 %1662, %v499
  %v1664 = vpop.permute.xlu0 %1663
  %1667 = vset.pattern.permute.xlu0 0
  %1668 = vperm.xlu0 %1667, %v500
  %v1669 = vpop.permute.xlu0 %1668
  %1672 = vset.pattern.permute.xlu0 0
  %1673 = vperm.xlu0 %1672, %v501
  %v1674 = vpop.permute.xlu0 %1673
  %1677 = vset.pattern.permute.xlu0 0
  %1678 = vperm.xlu0 %1677, %v502
  %v1679 = vpop.permute.xlu0 %1678
  %1682 = vset.pattern.permute.xlu0 0
  %1683 = vperm.xlu0 %1682, %v503
  %v1684 = vpop.permute.xlu0 %1683
  %1687 = vset.pattern.permute.xlu0 0
  %1688 = vperm.xlu0 %1687, %v504
  %v1689 = vpop.permute.xlu0 %1688
  %1692 = vset.pattern.permute.xlu0 0
  %1693 = vperm.xlu0 %1692, %v505
  %v1694 = vpop.permute.xlu0 %1693
  %1697 = vset.pattern.permute.xlu0 0
  %1698 = vperm.xlu0 %1697, %v506
  %v1699 = vpop.permute.xlu0 %1698
  %1702 = vset.pattern.permute.xlu0 0
  %1703 = vperm.xlu0 %1702, %v507
  %v1704 = vpop.permute.xlu0 %1703
  %1707 = vset.pattern.permute.xlu0 0
  %1708 = vperm.xlu0 %1707, %v508
  %v1709 = vpop.permute.xlu0 %1708
  %1712 = vset.pattern.permute.xlu0 0
  %1713 = vperm.xlu0 %1712, %v509
  %v1714 = vpop.permute.xlu0 %1713
  %1717 = vset.pattern.permute.xlu0 0
  %1718 = vperm.xlu0 %1717, %v510
  %v1719 = vpop.permute.xlu0 %1718
  %1722 = vset.pattern.permute.xlu0 0
  %1723 = vperm.xlu0 %1722, %v511
  %v1724 = vpop.permute.xlu0 %1723
  %1727 = vset.pattern.permute.xlu0 0
  %1728 = vperm.xlu0 %1727, %v512
  %v1729 = vpop.permute.xlu0 %1728
  %1732 = vset.pattern.permute.xlu0 0
  %1733 = vperm.xlu0 %1732, %v513
  %v1734 = vpop.permute.xlu0 %1733
  %1737 = vset.pattern.permute.xlu0 0
  %1738 = vperm.xlu0 %1737, %v514
  %v1739 = vpop.permute.xlu0 %1738
  %1742 = vset.pattern.permute.xlu0 0
  %1743 = vperm.xlu0 %1742, %v515
  %v1744 = vpop.permute.xlu0 %1743
  %1747 = vset.pattern.permute.xlu0 0
  %1748 = vperm.xlu0 %1747, %v516
  %v1749 = vpop.permute.xlu0 %1748
  %1752 = vset.pattern.permute.xlu0 0
  %1753 = vperm.xlu0 %1752, %v517
  %v1754 = vpop.permute.xlu0 %1753
  %1757 = vset.pattern.permute.xlu0 0
  %1758 = vperm.xlu0 %1757, %v518
  %v1759 = vpop.permute.xlu0 %1758
  %1762 = vset.pattern.permute.xlu0 0
  %1763 = vperm.xlu0 %1762, %v519
  %v1764 = vpop.permute.xlu0 %1763
  %1767 = vset.pattern.permute.xlu0 0
  %1768 = vperm.xlu0 %1767, %v520
  %v1769 = vpop.permute.xlu0 %1768
  %1772 = vset.pattern.permute.xlu0 0
  %1773 = vperm.xlu0 %1772, %v521
  %v1774 = vpop.permute.xlu0 %1773
  %1777 = vset.pattern.permute.xlu0 0
  %1778 = vperm.xlu0 %1777, %v522
  %v1779 = vpop.permute.xlu0 %1778
  %1782 = vset.pattern.permute.xlu0 0
  %1783 = vperm.xlu0 %1782, %v523
  %v1784 = vpop.permute.xlu0 %1783
  %1787 = vset.pattern.permute.xlu0 0
  %1788 = vperm.xlu0 %1787, %v524
  %v1789 = vpop.permute.xlu0 %1788
  %1792 = vset.pattern.permute.xlu0 0
  %1793 = vperm.xlu0 %1792, %v525
  %v1794 = vpop.permute.xlu0 %1793
  %1797 = vset.pattern.permute.xlu0 0
  %1798 = vperm.xlu0 %1797, %v526
  %v1799 = vpop.permute.xlu0 %1798
  %1802 = vset.pattern.permute.xlu0 0
  %1803 = vperm.xlu0 %1802, %v527
  %v1804 = vpop.permute.xlu0 %1803
  %1807 = vset.pattern.permute.xlu0 0
  %1808 = vperm.xlu0 %1807, %v528
  %v1809 = vpop.permute.xlu0 %1808
  %1812 = vset.pattern.permute.xlu0 0
  %1813 = vperm.xlu0 %1812, %v529
  %v1814 = vpop.permute.xlu0 %1813
  %1817 = vset.pattern.permute.xlu0 0
  %1818 = vperm.xlu0 %1817, %v530
  %v1819 = vpop.permute.xlu0 %1818
  %v1821 = vmul.f32 %v15, %v534
  %v1822 = vmul.f32 %v16, %v539
  %v1823 = vmul.f32 %v17, %v544
  %v1824 = vmul.f32 %v18, %v549
  %v1825 = vmul.f32 %v19, %v554
  %v1826 = vmul.f32 %v20, %v559
  %v1827 = vmul.f32 %v21, %v564
  %v1828 = vmul.f32 %v22, %v569
  %v1829 = vmul.f32 %v23, %v574
  %v1830 = vmul.f32 %v24, %v579
  %v1831 = vmul.f32 %v25, %v584
  %v1832 = vmul.f32 %v26, %v589
  %v1833 = vmul.f32 %v27, %v594
  %v1834 = vmul.f32 %v28, %v599
  %v1835 = vmul.f32 %v29, %v604
  %v1836 = vmul.f32 %v30, %v609
  %v1837 = vmul.f32 %v31, %v614
  %v1838 = vmul.f32 %v32, %v619
  %v1839 = vmul.f32 %v33, %v624
  %v1840 = vmul.f32 %v34, %v629
  %v1841 = vmul.f32 %v35, %v634
  %v1842 = vmul.f32 %v36, %v639
  %v1843 = vmul.f32 %v37, %v644
  %v1844 = vmul.f32 %v38, %v649
  %v1845 = vmul.f32 %v39, %v654
  %v1846 = vmul.f32 %v40, %v659
  %v1847 = vmul.f32 %v41, %v664
  %v1848 = vmul.f32 %v42, %v669
  %v1849 = vmul.f32 %v43, %v674
  %v1850 = vmul.f32 %v44, %v679
  %v1851 = vmul.f32 %v45, %v684
  %v1852 = vmul.f32 %v46, %v689
  %v1853 = vmul.f32 %v47, %v694
  %v1854 = vmul.f32 %v48, %v699
  %v1855 = vmul.f32 %v49, %v704
  %v1856 = vmul.f32 %v50, %v709
  %v1857 = vmul.f32 %v51, %v714
  %v1858 = vmul.f32 %v52, %v719
  %v1859 = vmul.f32 %v53, %v724
  %v1860 = vmul.f32 %v54, %v729
  %v1861 = vmul.f32 %v55, %v734
  %v1862 = vmul.f32 %v56, %v739
  %v1863 = vmul.f32 %v57, %v744
  %v1864 = vmul.f32 %v58, %v749
  %v1865 = vmul.f32 %v59, %v754
  %v1866 = vmul.f32 %v60, %v759
  %v1867 = vmul.f32 %v61, %v764
  %v1868 = vmul.f32 %v62, %v769
  %v1869 = vmul.f32 %v63, %v774
  %v1870 = vmul.f32 %v64, %v779
  %v1871 = vmul.f32 %v65, %v784
  %v1872 = vmul.f32 %v66, %v789
  %v1873 = vmul.f32 %v67, %v794
  %v1874 = vmul.f32 %v68, %v799
  %v1875 = vmul.f32 %v69, %v804
  %v1876 = vmul.f32 %v70, %v809
  %v1877 = vmul.f32 %v71, %v814
  %v1878 = vmul.f32 %v72, %v819
  %v1879 = vmul.f32 %v73, %v824
  %v1880 = vmul.f32 %v74, %v829
  %v1881 = vmul.f32 %v75, %v834
  %v1882 = vmul.f32 %v76, %v839
  %v1883 = vmul.f32 %v77, %v844
  %v1884 = vmul.f32 %v78, %v849
  %v1885 = vmul.f32 %v79, %v854
  %v1886 = vmul.f32 %v80, %v859
  %v1887 = vmul.f32 %v81, %v864
  %v1888 = vmul.f32 %v82, %v869
  %v1889 = vmul.f32 %v83, %v874
  %v1890 = vmul.f32 %v84, %v879
  %v1891 = vmul.f32 %v85, %v884
  %v1892 = vmul.f32 %v86, %v889
  %v1893 = vmul.f32 %v87, %v894
  %v1894 = vmul.f32 %v88, %v899
  %v1895 = vmul.f32 %v89, %v904
  %v1896 = vmul.f32 %v90, %v909
  %v1897 = vmul.f32 %v91, %v914
  %v1898 = vmul.f32 %v92, %v919
  %v1899 = vmul.f32 %v93, %v924
  %v1900 = vmul.f32 %v94, %v929
  %v1901 = vmul.f32 %v95, %v934
  %v1902 = vmul.f32 %v96, %v939
  %v1903 = vmul.f32 %v97, %v944
  %v1904 = vmul.f32 %v98, %v949
  %v1905 = vmul.f32 %v99, %v954
  %v1906 = vmul.f32 %v100, %v959
  %v1907 = vmul.f32 %v101, %v964
  %v1908 = vmul.f32 %v102, %v969
  %v1909 = vmul.f32 %v103, %v974
  %v1910 = vmul.f32 %v104, %v979
  %v1911 = vmul.f32 %v105, %v984
  %v1912 = vmul.f32 %v106, %v989
  %v1913 = vmul.f32 %v107, %v994
  %v1914 = vmul.f32 %v108, %v999
  %v1915 = vmul.f32 %v109, %v1004
  %v1916 = vmul.f32 %v110, %v1009
  %v1917 = vmul.f32 %v111, %v1014
  %v1918 = vmul.f32 %v112, %v1019
  %v1919 = vmul.f32 %v113, %v1024
  %v1920 = vmul.f32 %v114, %v1029
  %v1921 = vmul.f32 %v115, %v1034
  %v1922 = vmul.f32 %v116, %v1039
  %v1923 = vmul.f32 %v117, %v1044
  %v1924 = vmul.f32 %v118, %v1049
  %v1925 = vmul.f32 %v119, %v1054
  %v1926 = vmul.f32 %v120, %v1059
  %v1927 = vmul.f32 %v121, %v1064
  %v1928 = vmul.f32 %v122, %v1069
  %v1929 = vmul.f32 %v123, %v1074
  %v1930 = vmul.f32 %v124, %v1079
  %v1931 = vmul.f32 %v125, %v1084
  %v1932 = vmul.f32 %v126, %v1089
  %v1933 = vmul.f32 %v127, %v1094
  %v1934 = vmul.f32 %v128, %v1099
  %v1935 = vmul.f32 %v129, %v1104
  %v1936 = vmul.f32 %v130, %v1109
  %v1937 = vmul.f32 %v131, %v1114
  %v1938 = vmul.f32 %v132, %v1119
  %v1939 = vmul.f32 %v133, %v1124
  %v1940 = vmul.f32 %v134, %v1129
  %v1941 = vmul.f32 %v135, %v1134
  %v1942 = vmul.f32 %v136, %v1139
  %v1943 = vmul.f32 %v137, %v1144
  %v1944 = vmul.f32 %v138, %v1149
  %v1945 = vmul.f32 %v139, %v1154
  %v1946 = vmul.f32 %v140, %v1159
  %v1947 = vmul.f32 %v141, %v1164
  %v1948 = vmul.f32 %v142, %v1169
  %v1949 = vmul.f32 %v143, %v1174
  %v1950 = vmul.f32 %v144, %v1179
  %v1951 = vmul.f32 %v145, %v1184
  %v1952 = vmul.f32 %v146, %v1189
  %v1953 = vmul.f32 %v147, %v1194
  %v1954 = vmul.f32 %v148, %v1199
  %v1955 = vmul.f32 %v149, %v1204
  %v1956 = vmul.f32 %v150, %v1209
  %v1957 = vmul.f32 %v151, %v1214
  %v1958 = vmul.f32 %v152, %v1219
  %v1959 = vmul.f32 %v153, %v1224
  %v1960 = vmul.f32 %v154, %v1229
  %v1961 = vmul.f32 %v155, %v1234
  %v1962 = vmul.f32 %v156, %v1239
  %v1963 = vmul.f32 %v157, %v1244
  %v1964 = vmul.f32 %v158, %v1249
  %v1965 = vmul.f32 %v159, %v1254
  %v1966 = vmul.f32 %v160, %v1259
  %v1967 = vmul.f32 %v161, %v1264
  %v1968 = vmul.f32 %v162, %v1269
  %v1969 = vmul.f32 %v163, %v1274
  %v1970 = vmul.f32 %v164, %v1279
  %v1971 = vmul.f32 %v165, %v1284
  %v1972 = vmul.f32 %v166, %v1289
  %v1973 = vmul.f32 %v167, %v1294
  %v1974 = vmul.f32 %v168, %v1299
  %v1975 = vmul.f32 %v169, %v1304
  %v1976 = vmul.f32 %v170, %v1309
  %v1977 = vmul.f32 %v171, %v1314
  %v1978 = vmul.f32 %v172, %v1319
  %v1979 = vmul.f32 %v173, %v1324
  %v1980 = vmul.f32 %v174, %v1329
  %v1981 = vmul.f32 %v175, %v1334
  %v1982 = vmul.f32 %v176, %v1339
  %v1983 = vmul.f32 %v177, %v1344
  %v1984 = vmul.f32 %v178, %v1349
  %v1985 = vmul.f32 %v179, %v1354
  %v1986 = vmul.f32 %v180, %v1359
  %v1987 = vmul.f32 %v181, %v1364
  %v1988 = vmul.f32 %v182, %v1369
  %v1989 = vmul.f32 %v183, %v1374
  %v1990 = vmul.f32 %v184, %v1379
  %v1991 = vmul.f32 %v185, %v1384
  %v1992 = vmul.f32 %v186, %v1389
  %v1993 = vmul.f32 %v187, %v1394
  %v1994 = vmul.f32 %v188, %v1399
  %v1995 = vmul.f32 %v189, %v1404
  %v1996 = vmul.f32 %v190, %v1409
  %v1997 = vmul.f32 %v191, %v1414
  %v1998 = vmul.f32 %v192, %v1419
  %v1999 = vmul.f32 %v193, %v1424
  %v2000 = vmul.f32 %v194, %v1429
  %v2001 = vmul.f32 %v195, %v1434
  %v2002 = vmul.f32 %v196, %v1439
  %v2003 = vmul.f32 %v197, %v1444
  %v2004 = vmul.f32 %v198, %v1449
  %v2005 = vmul.f32 %v199, %v1454
  %v2006 = vmul.f32 %v200, %v1459
  %v2007 = vmul.f32 %v201, %v1464
  %v2008 = vmul.f32 %v202, %v1469
  %v2009 = vmul.f32 %v203, %v1474
  %v2010 = vmul.f32 %v204, %v1479
  %v2011 = vmul.f32 %v205, %v1484
  %v2012 = vmul.f32 %v206, %v1489
  %v2013 = vmul.f32 %v207, %v1494
  %v2014 = vmul.f32 %v208, %v1499
  %v2015 = vmul.f32 %v209, %v1504
  %v2016 = vmul.f32 %v210, %v1509
  %v2017 = vmul.f32 %v211, %v1514
  %v2018 = vmul.f32 %v212, %v1519
  %v2019 = vmul.f32 %v213, %v1524
  %v2020 = vmul.f32 %v214, %v1529
  %v2021 = vmul.f32 %v215, %v1534
  %v2022 = vmul.f32 %v216, %v1539
  %v2023 = vmul.f32 %v217, %v1544
  %v2024 = vmul.f32 %v218, %v1549
  %v2025 = vmul.f32 %v219, %v1554
  %v2026 = vmul.f32 %v220, %v1559
  %v2027 = vmul.f32 %v221, %v1564
  %v2028 = vmul.f32 %v222, %v1569
  %v2029 = vmul.f32 %v223, %v1574
  %v2030 = vmul.f32 %v224, %v1579
  %v2031 = vmul.f32 %v225, %v1584
  %v2032 = vmul.f32 %v226, %v1589
  %v2033 = vmul.f32 %v227, %v1594
  %v2034 = vmul.f32 %v228, %v1599
  %v2035 = vmul.f32 %v229, %v1604
  %v2036 = vmul.f32 %v230, %v1609
  %v2037 = vmul.f32 %v231, %v1614
  %v2038 = vmul.f32 %v232, %v1619
  %v2039 = vmul.f32 %v233, %v1624
  %v2040 = vmul.f32 %v234, %v1629
  %v2041 = vmul.f32 %v235, %v1634
  %v2042 = vmul.f32 %v236, %v1639
  %v2043 = vmul.f32 %v237, %v1644
  %v2044 = vmul.f32 %v238, %v1649
  %v2045 = vmul.f32 %v239, %v1654
  %v2046 = vmul.f32 %v240, %v1659
  %v2047 = vmul.f32 %v241, %v1664
  %v2048 = vmul.f32 %v242, %v1669
  %v2049 = vmul.f32 %v243, %v1674
  %v2050 = vmul.f32 %v244, %v1679
  %v2051 = vmul.f32 %v245, %v1684
  %v2052 = vmul.f32 %v246, %v1689
  %v2053 = vmul.f32 %v247, %v1694
  %v2054 = vmul.f32 %v248, %v1699
  %v2055 = vmul.f32 %v249, %v1704
  %v2056 = vmul.f32 %v250, %v1709
  %v2057 = vmul.f32 %v251, %v1714
  %v2058 = vmul.f32 %v252, %v1719
  %v2059 = vmul.f32 %v253, %v1724
  %v2060 = vmul.f32 %v254, %v1729
  %v2061 = vmul.f32 %v255, %v1734
  %v2062 = vmul.f32 %v256, %v1739
  %v2063 = vmul.f32 %v257, %v1744
  %v2064 = vmul.f32 %v258, %v1749
  %v2065 = vmul.f32 %v259, %v1754
  %v2066 = vmul.f32 %v260, %v1759
  %v2067 = vmul.f32 %v261, %v1764
  %v2068 = vmul.f32 %v262, %v1769
  %v2069 = vmul.f32 %v263, %v1774
  %v2070 = vmul.f32 %v264, %v1779
  %v2071 = vmul.f32 %v265, %v1784
  %v2072 = vmul.f32 %v266, %v1789
  %v2073 = vmul.f32 %v267, %v1794
  %v2074 = vmul.f32 %v268, %v1799
  %v2075 = vmul.f32 %v269, %v1804
  %v2076 = vmul.f32 %v270, %v1809
  %v2077 = vmul.f32 %v271, %v1814
  %v2078 = vmul.f32 %v272, %v1819
  %v2079 = vpack.c.bf16 %v1822, %v1821
  %v2080 = vpack.c.bf16 %v1824, %v1823
  %v2081 = vpack.c.bf16 %v1826, %v1825
  %v2082 = vpack.c.bf16 %v1828, %v1827
  %v2083 = vpack.c.bf16 %v1830, %v1829
  %v2084 = vpack.c.bf16 %v1832, %v1831
  %v2085 = vpack.c.bf16 %v1834, %v1833
  %v2086 = vpack.c.bf16 %v1836, %v1835
  %v2087 = vpack.c.bf16 %v1838, %v1837
  %v2088 = vpack.c.bf16 %v1840, %v1839
  %v2089 = vpack.c.bf16 %v1842, %v1841
  %v2090 = vpack.c.bf16 %v1844, %v1843
  %v2091 = vpack.c.bf16 %v1846, %v1845
  %v2092 = vpack.c.bf16 %v1848, %v1847
  %v2093 = vpack.c.bf16 %v1850, %v1849
  %v2094 = vpack.c.bf16 %v1852, %v1851
  %v2095 = vpack.c.bf16 %v1854, %v1853
  %v2096 = vpack.c.bf16 %v1856, %v1855
  %v2097 = vpack.c.bf16 %v1858, %v1857
  %v2098 = vpack.c.bf16 %v1860, %v1859
  %v2099 = vpack.c.bf16 %v1862, %v1861
  %v2100 = vpack.c.bf16 %v1864, %v1863
  %v2101 = vpack.c.bf16 %v1866, %v1865
  %v2102 = vpack.c.bf16 %v1868, %v1867
  %v2103 = vpack.c.bf16 %v1870, %v1869
  %v2104 = vpack.c.bf16 %v1872, %v1871
  %v2105 = vpack.c.bf16 %v1874, %v1873
  %v2106 = vpack.c.bf16 %v1876, %v1875
  %v2107 = vpack.c.bf16 %v1878, %v1877
  %v2108 = vpack.c.bf16 %v1880, %v1879
  %v2109 = vpack.c.bf16 %v1882, %v1881
  %v2110 = vpack.c.bf16 %v1884, %v1883
  %v2111 = vpack.c.bf16 %v1886, %v1885
  %v2112 = vpack.c.bf16 %v1888, %v1887
  %v2113 = vpack.c.bf16 %v1890, %v1889
  %v2114 = vpack.c.bf16 %v1892, %v1891
  %v2115 = vpack.c.bf16 %v1894, %v1893
  %v2116 = vpack.c.bf16 %v1896, %v1895
  %v2117 = vpack.c.bf16 %v1898, %v1897
  %v2118 = vpack.c.bf16 %v1900, %v1899
  %v2119 = vpack.c.bf16 %v1902, %v1901
  %v2120 = vpack.c.bf16 %v1904, %v1903
  %v2121 = vpack.c.bf16 %v1906, %v1905
  %v2122 = vpack.c.bf16 %v1908, %v1907
  %v2123 = vpack.c.bf16 %v1910, %v1909
  %v2124 = vpack.c.bf16 %v1912, %v1911
  %v2125 = vpack.c.bf16 %v1914, %v1913
  %v2126 = vpack.c.bf16 %v1916, %v1915
  %v2127 = vpack.c.bf16 %v1918, %v1917
  %v2128 = vpack.c.bf16 %v1920, %v1919
  %v2129 = vpack.c.bf16 %v1922, %v1921
  %v2130 = vpack.c.bf16 %v1924, %v1923
  %v2131 = vpack.c.bf16 %v1926, %v1925
  %v2132 = vpack.c.bf16 %v1928, %v1927
  %v2133 = vpack.c.bf16 %v1930, %v1929
  %v2134 = vpack.c.bf16 %v1932, %v1931
  %v2135 = vpack.c.bf16 %v1934, %v1933
  %v2136 = vpack.c.bf16 %v1936, %v1935
  %v2137 = vpack.c.bf16 %v1938, %v1937
  %v2138 = vpack.c.bf16 %v1940, %v1939
  %v2139 = vpack.c.bf16 %v1942, %v1941
  %v2140 = vpack.c.bf16 %v1944, %v1943
  %v2141 = vpack.c.bf16 %v1946, %v1945
  %v2142 = vpack.c.bf16 %v1948, %v1947
  %v2143 = vpack.c.bf16 %v1950, %v1949
  %v2144 = vpack.c.bf16 %v1952, %v1951
  %v2145 = vpack.c.bf16 %v1954, %v1953
  %v2146 = vpack.c.bf16 %v1956, %v1955
  %v2147 = vpack.c.bf16 %v1958, %v1957
  %v2148 = vpack.c.bf16 %v1960, %v1959
  %v2149 = vpack.c.bf16 %v1962, %v1961
  %v2150 = vpack.c.bf16 %v1964, %v1963
  %v2151 = vpack.c.bf16 %v1966, %v1965
  %v2152 = vpack.c.bf16 %v1968, %v1967
  %v2153 = vpack.c.bf16 %v1970, %v1969
  %v2154 = vpack.c.bf16 %v1972, %v1971
  %v2155 = vpack.c.bf16 %v1974, %v1973
  %v2156 = vpack.c.bf16 %v1976, %v1975
  %v2157 = vpack.c.bf16 %v1978, %v1977
  %v2158 = vpack.c.bf16 %v1980, %v1979
  %v2159 = vpack.c.bf16 %v1982, %v1981
  %v2160 = vpack.c.bf16 %v1984, %v1983
  %v2161 = vpack.c.bf16 %v1986, %v1985
  %v2162 = vpack.c.bf16 %v1988, %v1987
  %v2163 = vpack.c.bf16 %v1990, %v1989
  %v2164 = vpack.c.bf16 %v1992, %v1991
  %v2165 = vpack.c.bf16 %v1994, %v1993
  %v2166 = vpack.c.bf16 %v1996, %v1995
  %v2167 = vpack.c.bf16 %v1998, %v1997
  %v2168 = vpack.c.bf16 %v2000, %v1999
  %v2169 = vpack.c.bf16 %v2002, %v2001
  %v2170 = vpack.c.bf16 %v2004, %v2003
  %v2171 = vpack.c.bf16 %v2006, %v2005
  %v2172 = vpack.c.bf16 %v2008, %v2007
  %v2173 = vpack.c.bf16 %v2010, %v2009
  %v2174 = vpack.c.bf16 %v2012, %v2011
  %v2175 = vpack.c.bf16 %v2014, %v2013
  %v2176 = vpack.c.bf16 %v2016, %v2015
  %v2177 = vpack.c.bf16 %v2018, %v2017
  %v2178 = vpack.c.bf16 %v2020, %v2019
  %v2179 = vpack.c.bf16 %v2022, %v2021
  %v2180 = vpack.c.bf16 %v2024, %v2023
  %v2181 = vpack.c.bf16 %v2026, %v2025
  %v2182 = vpack.c.bf16 %v2028, %v2027
  %v2183 = vpack.c.bf16 %v2030, %v2029
  %v2184 = vpack.c.bf16 %v2032, %v2031
  %v2185 = vpack.c.bf16 %v2034, %v2033
  %v2186 = vpack.c.bf16 %v2036, %v2035
  %v2187 = vpack.c.bf16 %v2038, %v2037
  %v2188 = vpack.c.bf16 %v2040, %v2039
  %v2189 = vpack.c.bf16 %v2042, %v2041
  %v2190 = vpack.c.bf16 %v2044, %v2043
  %v2191 = vpack.c.bf16 %v2046, %v2045
  %v2192 = vpack.c.bf16 %v2048, %v2047
  %v2193 = vpack.c.bf16 %v2050, %v2049
  %v2194 = vpack.c.bf16 %v2052, %v2051
  %v2195 = vpack.c.bf16 %v2054, %v2053
  %v2196 = vpack.c.bf16 %v2056, %v2055
  %v2197 = vpack.c.bf16 %v2058, %v2057
  %v2198 = vpack.c.bf16 %v2060, %v2059
  %v2199 = vpack.c.bf16 %v2062, %v2061
  %v2200 = vpack.c.bf16 %v2064, %v2063
  %v2201 = vpack.c.bf16 %v2066, %v2065
  %v2202 = vpack.c.bf16 %v2068, %v2067
  %v2203 = vpack.c.bf16 %v2070, %v2069
  %v2204 = vpack.c.bf16 %v2072, %v2071
  %v2205 = vpack.c.bf16 %v2074, %v2073
  %v2206 = vpack.c.bf16 %v2076, %v2075
  %v2207 = vpack.c.bf16 %v2078, %v2077
  %v2208 = vld [vmem:[%s2] sm:$0xff]
  %v2209 = vld [vmem:[%s2 + $0x8] sm:$0xff]
  %v2210 = vld [vmem:[%s2 + $0x10] sm:$0xff]
  %v2211 = vld [vmem:[%s2 + $0x18] sm:$0xff]
  %v2212 = vld [vmem:[%s2 + $0x20] sm:$0xff]
  %v2213 = vld [vmem:[%s2 + $0x28] sm:$0xff]
  %v2214 = vld [vmem:[%s2 + $0x30] sm:$0xff]
  %v2215 = vld [vmem:[%s2 + $0x38] sm:$0xff]
  %v2216 = vld [vmem:[%s2 + $0x40] sm:$0xf]
  %v2217 = vld [vmem:[%s2 + $0x44] sm:$0xff]
  %v2218 = vld [vmem:[%s2 + $0x4c] sm:$0xff]
  %v2219 = vld [vmem:[%s2 + $0x54] sm:$0xff]
  %v2220 = vld [vmem:[%s2 + $0x5c] sm:$0xff]
  %v2221 = vld [vmem:[%s2 + $0x64] sm:$0xff]
  %v2222 = vld [vmem:[%s2 + $0x6c] sm:$0xff]
  %v2223 = vld [vmem:[%s2 + $0x74] sm:$0xff]
  %v2224 = vld [vmem:[%s2 + $0x7c] sm:$0xff]
  %v2225 = vld [vmem:[%s2 + $0x84] sm:$0xf]
  %v2226 = vld [vmem:[%s2 + $0x88] sm:$0xff]
  %v2227 = vld [vmem:[%s2 + $0x90] sm:$0xff]
  %v2228 = vld [vmem:[%s2 + $0x98] sm:$0xff]
  %v2229 = vld [vmem:[%s2 + $0xa0] sm:$0xff]
  %v2230 = vld [vmem:[%s2 + $0xa8] sm:$0xff]
  %v2231 = vld [vmem:[%s2 + $0xb0] sm:$0xff]
  %v2232 = vld [vmem:[%s2 + $0xb8] sm:$0xff]
  %v2233 = vld [vmem:[%s2 + $0xc0] sm:$0xff]
  %v2234 = vld [vmem:[%s2 + $0xc8] sm:$0xf]
  %v2235 = vld [vmem:[%s2 + $0xcc] sm:$0xff]
  %v2236 = vld [vmem:[%s2 + $0xd4] sm:$0xff]
  %v2237 = vld [vmem:[%s2 + $0xdc] sm:$0xff]
  %v2238 = vld [vmem:[%s2 + $0xe4] sm:$0xff]
  %v2239 = vld [vmem:[%s2 + $0xec] sm:$0xff]
  %v2240 = vld [vmem:[%s2 + $0xf4] sm:$0xff]
  %v2241 = vld [vmem:[%s2 + $0xfc] sm:$0xff]
  %v2242 = vld [vmem:[%s2 + $0x104] sm:$0xff]
  %v2243 = vld [vmem:[%s2 + $0x10c] sm:$0xf]
  %v2244 = vld [vmem:[%s2 + $0x110] sm:$0xff]
  %v2245 = vld [vmem:[%s2 + $0x118] sm:$0xff]
  %v2246 = vld [vmem:[%s2 + $0x120] sm:$0xff]
  %v2247 = vld [vmem:[%s2 + $0x128] sm:$0xff]
  %v2248 = vld [vmem:[%s2 + $0x130] sm:$0xff]
  %v2249 = vld [vmem:[%s2 + $0x138] sm:$0xff]
  %v2250 = vld [vmem:[%s2 + $0x140] sm:$0xff]
  %v2251 = vld [vmem:[%s2 + $0x148] sm:$0xff]
  %v2252 = vld [vmem:[%s2 + $0x150] sm:$0xf]
  %v2253 = vld [vmem:[%s2 + $0x154] sm:$0xff]
  %v2254 = vld [vmem:[%s2 + $0x15c] sm:$0xff]
  %v2255 = vld [vmem:[%s2 + $0x164] sm:$0xff]
  %v2256 = vld [vmem:[%s2 + $0x16c] sm:$0xff]
  %v2257 = vld [vmem:[%s2 + $0x174] sm:$0xff]
  %v2258 = vld [vmem:[%s2 + $0x17c] sm:$0xff]
  %v2259 = vld [vmem:[%s2 + $0x184] sm:$0xff]
  %v2260 = vld [vmem:[%s2 + $0x18c] sm:$0xff]
  %v2261 = vld [vmem:[%s2 + $0x194] sm:$0xf]
  %v2262 = vld [vmem:[%s2 + $0x198] sm:$0xff]
  %v2263 = vld [vmem:[%s2 + $0x1a0] sm:$0xff]
  %v2264 = vld [vmem:[%s2 + $0x1a8] sm:$0xff]
  %v2265 = vld [vmem:[%s2 + $0x1b0] sm:$0xff]
  %v2266 = vld [vmem:[%s2 + $0x1b8] sm:$0xff]
  %v2267 = vld [vmem:[%s2 + $0x1c0] sm:$0xff]
  %v2268 = vld [vmem:[%s2 + $0x1c8] sm:$0xff]
  %v2269 = vld [vmem:[%s2 + $0x1d0] sm:$0xff]
  %v2270 = vld [vmem:[%s2 + $0x1d8] sm:$0xf]
  %v2271 = vld [vmem:[%s2 + $0x1dc] sm:$0xff]
  %v2272 = vld [vmem:[%s2 + $0x1e4] sm:$0xff]
  %v2273 = vld [vmem:[%s2 + $0x1ec] sm:$0xff]
  %v2274 = vld [vmem:[%s2 + $0x1f4] sm:$0xff]
  %v2275 = vld [vmem:[%s2 + $0x1fc] sm:$0xff]
  %v2276 = vld [vmem:[%s2 + $0x204] sm:$0xff]
  %v2277 = vld [vmem:[%s2 + $0x20c] sm:$0xff]
  %v2278 = vld [vmem:[%s2 + $0x214] sm:$0xff]
  %v2279 = vld [vmem:[%s2 + $0x21c] sm:$0xf]
  %v2280 = vld [vmem:[%s2 + $0x220] sm:$0xff]
  %v2281 = vld [vmem:[%s2 + $0x228] sm:$0xff]
  %v2282 = vld [vmem:[%s2 + $0x230] sm:$0xff]
  %v2283 = vld [vmem:[%s2 + $0x238] sm:$0xff]
  %v2284 = vld [vmem:[%s2 + $0x240] sm:$0xff]
  %v2285 = vld [vmem:[%s2 + $0x248] sm:$0xff]
  %v2286 = vld [vmem:[%s2 + $0x250] sm:$0xff]
  %v2287 = vld [vmem:[%s2 + $0x258] sm:$0xff]
  %v2288 = vld [vmem:[%s2 + $0x260] sm:$0xf]
  %v2289 = vld [vmem:[%s2 + $0x264] sm:$0xff]
  %v2290 = vld [vmem:[%s2 + $0x26c] sm:$0xff]
  %v2291 = vld [vmem:[%s2 + $0x274] sm:$0xff]
  %v2292 = vld [vmem:[%s2 + $0x27c] sm:$0xff]
  %v2293 = vld [vmem:[%s2 + $0x284] sm:$0xff]
  %v2294 = vld [vmem:[%s2 + $0x28c] sm:$0xff]
  %v2295 = vld [vmem:[%s2 + $0x294] sm:$0xff]
  %v2296 = vld [vmem:[%s2 + $0x29c] sm:$0xff]
  %v2297 = vld [vmem:[%s2 + $0x2a4] sm:$0xf]
  %v2298 = vld [vmem:[%s2 + $0x2a8] sm:$0xff]
  %v2299 = vld [vmem:[%s2 + $0x2b0] sm:$0xff]
  %v2300 = vld [vmem:[%s2 + $0x2b8] sm:$0xff]
  %v2301 = vld [vmem:[%s2 + $0x2c0] sm:$0xff]
  %v2302 = vld [vmem:[%s2 + $0x2c8] sm:$0xff]
  %v2303 = vld [vmem:[%s2 + $0x2d0] sm:$0xff]
  %v2304 = vld [vmem:[%s2 + $0x2d8] sm:$0xff]
  %v2305 = vld [vmem:[%s2 + $0x2e0] sm:$0xff]
  %v2306 = vld [vmem:[%s2 + $0x2e8] sm:$0xf]
  %v2307 = vld [vmem:[%s2 + $0x2ec] sm:$0xff]
  %v2308 = vld [vmem:[%s2 + $0x2f4] sm:$0xff]
  %v2309 = vld [vmem:[%s2 + $0x2fc] sm:$0xff]
  %v2310 = vld [vmem:[%s2 + $0x304] sm:$0xff]
  %v2311 = vld [vmem:[%s2 + $0x30c] sm:$0xff]
  %v2312 = vld [vmem:[%s2 + $0x314] sm:$0xff]
  %v2313 = vld [vmem:[%s2 + $0x31c] sm:$0xff]
  %v2314 = vld [vmem:[%s2 + $0x324] sm:$0xff]
  %v2315 = vld [vmem:[%s2 + $0x32c] sm:$0xf]
  %v2316 = vld [vmem:[%s2 + $0x330] sm:$0xff]
  %v2317 = vld [vmem:[%s2 + $0x338] sm:$0xff]
  %v2318 = vld [vmem:[%s2 + $0x340] sm:$0xff]
  %v2319 = vld [vmem:[%s2 + $0x348] sm:$0xff]
  %v2320 = vld [vmem:[%s2 + $0x350] sm:$0xff]
  %v2321 = vld [vmem:[%s2 + $0x358] sm:$0xff]
  %v2322 = vld [vmem:[%s2 + $0x360] sm:$0xff]
  %v2323 = vld [vmem:[%s2 + $0x368] sm:$0xff]
  %v2324 = vld [vmem:[%s2 + $0x370] sm:$0xf]
  %v2325 = vld [vmem:[%s2 + $0x374] sm:$0xff]
  %v2326 = vld [vmem:[%s2 + $0x37c] sm:$0xff]
  %v2327 = vld [vmem:[%s2 + $0x384] sm:$0xff]
  %v2328 = vld [vmem:[%s2 + $0x38c] sm:$0xff]
  %v2329 = vld [vmem:[%s2 + $0x394] sm:$0xff]
  %v2330 = vld [vmem:[%s2 + $0x39c] sm:$0xff]
  %v2331 = vld [vmem:[%s2 + $0x3a4] sm:$0xff]
  %v2332 = vld [vmem:[%s2 + $0x3ac] sm:$0xff]
  %v2333 = vld [vmem:[%s2 + $0x3b4] sm:$0xf]
  %v2334 = vld [vmem:[%s2 + $0x3b8] sm:$0xff]
  %v2335 = vld [vmem:[%s2 + $0x3c0] sm:$0xff]
  %v2336 = vld [vmem:[%s2 + $0x3c8] sm:$0xff]
  %v2337 = vld [vmem:[%s2 + $0x3d0] sm:$0xff]
  %v2338 = vld [vmem:[%s2 + $0x3d8] sm:$0xff]
  %v2339 = vld [vmem:[%s2 + $0x3e0] sm:$0xff]
  %v2340 = vld [vmem:[%s2 + $0x3e8] sm:$0xff]
  %v2341 = vld [vmem:[%s2 + $0x3f0] sm:$0xff]
  %v2342 = vld [vmem:[%s2 + $0x3f8] sm:$0xf]
  %v2343 = vld [vmem:[%s2 + $0x3fc] sm:$0xff]
  %v2344 = vld [vmem:[%s2 + $0x404] sm:$0xff]
  %v2345 = vld [vmem:[%s2 + $0x40c] sm:$0xff]
  %v2346 = vld [vmem:[%s2 + $0x414] sm:$0xff]
  %v2347 = vld [vmem:[%s2 + $0x41c] sm:$0xff]
  %v2348 = vld [vmem:[%s2 + $0x424] sm:$0xff]
  %v2349 = vld [vmem:[%s2 + $0x42c] sm:$0xff]
  %v2350 = vld [vmem:[%s2 + $0x434] sm:$0xff]
  %v2351 = vld [vmem:[%s2 + $0x43c] sm:$0xf]
  %v2352 = vld [vmem:[%s2 + $0x440] sm:$0xff]
  %v2353 = vld [vmem:[%s2 + $0x448] sm:$0xff]
  %v2354 = vld [vmem:[%s2 + $0x450] sm:$0xff]
  %v2355 = vld [vmem:[%s2 + $0x458] sm:$0xff]
  %v2356 = vld [vmem:[%s2 + $0x460] sm:$0xff]
  %v2357 = vld [vmem:[%s2 + $0x468] sm:$0xff]
  %v2358 = vld [vmem:[%s2 + $0x470] sm:$0xff]
  %v2359 = vld [vmem:[%s2 + $0x478] sm:$0xff]
  %v2360 = vld [vmem:[%s2 + $0x480] sm:$0xf]
  %v2361 = vld [vmem:[%s2 + $0x484] sm:$0xff]
  %v2362 = vld [vmem:[%s2 + $0x48c] sm:$0xff]
  %v2363 = vld [vmem:[%s2 + $0x494] sm:$0xff]
  %v2364 = vld [vmem:[%s2 + $0x49c] sm:$0xff]
  %v2365 = vld [vmem:[%s2 + $0x4a4] sm:$0xff]
  %v2366 = vld [vmem:[%s2 + $0x4ac] sm:$0xff]
  %v2367 = vld [vmem:[%s2 + $0x4b4] sm:$0xff]
  %v2368 = vld [vmem:[%s2 + $0x4bc] sm:$0xff]
  %v2369 = vld [vmem:[%s2 + $0x4c4] sm:$0xf]
  %v2370 = vld [vmem:[%s2 + $0x4c8] sm:$0xff]
  %v2371 = vld [vmem:[%s2 + $0x4d0] sm:$0xff]
  %v2372 = vld [vmem:[%s2 + $0x4d8] sm:$0xff]
  %v2373 = vld [vmem:[%s2 + $0x4e0] sm:$0xff]
  %v2374 = vld [vmem:[%s2 + $0x4e8] sm:$0xff]
  %v2375 = vld [vmem:[%s2 + $0x4f0] sm:$0xff]
  %v2376 = vld [vmem:[%s2 + $0x4f8] sm:$0xff]
  %v2377 = vld [vmem:[%s2 + $0x500] sm:$0xff]
  %v2378 = vld [vmem:[%s2 + $0x508] sm:$0xf]
  %v2379 = vld [vmem:[%s2 + $0x50c] sm:$0xff]
  %v2380 = vld [vmem:[%s2 + $0x514] sm:$0xff]
  %v2381 = vld [vmem:[%s2 + $0x51c] sm:$0xff]
  %v2382 = vld [vmem:[%s2 + $0x524] sm:$0xff]
  %v2383 = vld [vmem:[%s2 + $0x52c] sm:$0xff]
  %v2384 = vld [vmem:[%s2 + $0x534] sm:$0xff]
  %v2385 = vld [vmem:[%s2 + $0x53c] sm:$0xff]
  %v2386 = vld [vmem:[%s2 + $0x544] sm:$0xff]
  %v2387 = vld [vmem:[%s2 + $0x54c] sm:$0xf]
  %v2388 = vld [vmem:[%s2 + $0x550] sm:$0xff]
  %v2389 = vld [vmem:[%s2 + $0x558] sm:$0xff]
  %v2390 = vld [vmem:[%s2 + $0x560] sm:$0xff]
  %v2391 = vld [vmem:[%s2 + $0x568] sm:$0xff]
  %v2392 = vld [vmem:[%s2 + $0x570] sm:$0xff]
  %v2393 = vld [vmem:[%s2 + $0x578] sm:$0xff]
  %v2394 = vld [vmem:[%s2 + $0x580] sm:$0xff]
  %v2395 = vld [vmem:[%s2 + $0x588] sm:$0xff]
  %v2396 = vld [vmem:[%s2 + $0x590] sm:$0xf]
  %v2397 = vld [vmem:[%s2 + $0x594] sm:$0xff]
  %v2398 = vld [vmem:[%s2 + $0x59c] sm:$0xff]
  %v2399 = vld [vmem:[%s2 + $0x5a4] sm:$0xff]
  %v2400 = vld [vmem:[%s2 + $0x5ac] sm:$0xff]
  %v2401 = vld [vmem:[%s2 + $0x5b4] sm:$0xff]
  %v2402 = vld [vmem:[%s2 + $0x5bc] sm:$0xff]
  %v2403 = vld [vmem:[%s2 + $0x5c4] sm:$0xff]
  %v2404 = vld [vmem:[%s2 + $0x5cc] sm:$0xff]
  %v2405 = vld [vmem:[%s2 + $0x5d4] sm:$0xf]
  %v2406 = vld [vmem:[%s2 + $0x5d8] sm:$0xff]
  %v2407 = vld [vmem:[%s2 + $0x5e0] sm:$0xff]
  %v2408 = vld [vmem:[%s2 + $0x5e8] sm:$0xff]
  %v2409 = vld [vmem:[%s2 + $0x5f0] sm:$0xff]
  %v2410 = vld [vmem:[%s2 + $0x5f8] sm:$0xff]
  %v2411 = vld [vmem:[%s2 + $0x600] sm:$0xff]
  %v2412 = vld [vmem:[%s2 + $0x608] sm:$0xff]
  %v2413 = vld [vmem:[%s2 + $0x610] sm:$0xff]
  %v2414 = vld [vmem:[%s2 + $0x618] sm:$0xf]
  %v2415 = vld [vmem:[%s2 + $0x61c] sm:$0xff]
  %v2416 = vld [vmem:[%s2 + $0x624] sm:$0xff]
  %v2417 = vld [vmem:[%s2 + $0x62c] sm:$0xff]
  %v2418 = vld [vmem:[%s2 + $0x634] sm:$0xff]
  %v2419 = vld [vmem:[%s2 + $0x63c] sm:$0xff]
  %v2420 = vld [vmem:[%s2 + $0x644] sm:$0xff]
  %v2421 = vld [vmem:[%s2 + $0x64c] sm:$0xff]
  %v2422 = vld [vmem:[%s2 + $0x654] sm:$0xff]
  %v2423 = vld [vmem:[%s2 + $0x65c] sm:$0xf]
  %v2424 = vld [vmem:[%s2 + $0x660] sm:$0xff]
  %v2425 = vld [vmem:[%s2 + $0x668] sm:$0xff]
  %v2426 = vld [vmem:[%s2 + $0x670] sm:$0xff]
  %v2427 = vld [vmem:[%s2 + $0x678] sm:$0xff]
  %v2428 = vld [vmem:[%s2 + $0x680] sm:$0xff]
  %v2429 = vld [vmem:[%s2 + $0x688] sm:$0xff]
  %v2430 = vld [vmem:[%s2 + $0x690] sm:$0xff]
  %v2431 = vld [vmem:[%s2 + $0x698] sm:$0xff]
  %v2432 = vld [vmem:[%s2 + $0x6a0] sm:$0xf]
  %v2433 = vld [vmem:[%s2 + $0x6a4] sm:$0xff]
  %v2434 = vld [vmem:[%s2 + $0x6ac] sm:$0xff]
  %v2435 = vld [vmem:[%s2 + $0x6b4] sm:$0xff]
  %v2436 = vld [vmem:[%s2 + $0x6bc] sm:$0xff]
  %v2437 = vld [vmem:[%s2 + $0x6c4] sm:$0xff]
  %v2438 = vld [vmem:[%s2 + $0x6cc] sm:$0xff]
  %v2439 = vld [vmem:[%s2 + $0x6d4] sm:$0xff]
  %v2440 = vld [vmem:[%s2 + $0x6dc] sm:$0xff]
  %v2441 = vld [vmem:[%s2 + $0x6e4] sm:$0xf]
  %v2442 = vld [vmem:[%s2 + $0x6e8] sm:$0xff]
  %v2443 = vld [vmem:[%s2 + $0x6f0] sm:$0xff]
  %v2444 = vld [vmem:[%s2 + $0x6f8] sm:$0xff]
  %v2445 = vld [vmem:[%s2 + $0x700] sm:$0xff]
  %v2446 = vld [vmem:[%s2 + $0x708] sm:$0xff]
  %v2447 = vld [vmem:[%s2 + $0x710] sm:$0xff]
  %v2448 = vld [vmem:[%s2 + $0x718] sm:$0xff]
  %v2449 = vld [vmem:[%s2 + $0x720] sm:$0xff]
  %v2450 = vld [vmem:[%s2 + $0x728] sm:$0xf]
  %v2451 = vld [vmem:[%s2 + $0x72c] sm:$0xff]
  %v2452 = vld [vmem:[%s2 + $0x734] sm:$0xff]
  %v2453 = vld [vmem:[%s2 + $0x73c] sm:$0xff]
  %v2454 = vld [vmem:[%s2 + $0x744] sm:$0xff]
  %v2455 = vld [vmem:[%s2 + $0x74c] sm:$0xff]
  %v2456 = vld [vmem:[%s2 + $0x754] sm:$0xff]
  %v2457 = vld [vmem:[%s2 + $0x75c] sm:$0xff]
  %v2458 = vld [vmem:[%s2 + $0x764] sm:$0xff]
  %v2459 = vld [vmem:[%s2 + $0x76c] sm:$0xf]
  %v2460 = vld [vmem:[%s2 + $0x770] sm:$0xff]
  %v2461 = vld [vmem:[%s2 + $0x778] sm:$0xff]
  %v2462 = vld [vmem:[%s2 + $0x780] sm:$0xff]
  %v2463 = vld [vmem:[%s2 + $0x788] sm:$0xff]
  %v2464 = vld [vmem:[%s2 + $0x790] sm:$0xff]
  %v2465 = vld [vmem:[%s2 + $0x798] sm:$0xff]
  %v2466 = vld [vmem:[%s2 + $0x7a0] sm:$0xff]
  %v2467 = vld [vmem:[%s2 + $0x7a8] sm:$0xff]
  %v2468 = vld [vmem:[%s2 + $0x7b0] sm:$0xf]
  %v2469 = vld [vmem:[%s2 + $0x7b4] sm:$0xff]
  %v2470 = vld [vmem:[%s2 + $0x7bc] sm:$0xff]
  %v2471 = vld [vmem:[%s2 + $0x7c4] sm:$0xff]
  %v2472 = vld [vmem:[%s2 + $0x7cc] sm:$0xff]
  %v2473 = vld [vmem:[%s2 + $0x7d4] sm:$0xff]
  %v2474 = vld [vmem:[%s2 + $0x7dc] sm:$0xff]
  %v2475 = vld [vmem:[%s2 + $0x7e4] sm:$0xff]
  %v2476 = vld [vmem:[%s2 + $0x7ec] sm:$0xff]
  %v2477 = vld [vmem:[%s2 + $0x7f4] sm:$0xf]
  %v2478 = vld [vmem:[%s2 + $0x7f8] sm:$0xff]
  %v2479 = vld [vmem:[%s2 + $0x800] sm:$0xff]
  %v2480 = vld [vmem:[%s2 + $0x808] sm:$0xff]
  %v2481 = vld [vmem:[%s2 + $0x810] sm:$0xff]
  %v2482 = vld [vmem:[%s2 + $0x818] sm:$0xff]
  %v2483 = vld [vmem:[%s2 + $0x820] sm:$0xff]
  %v2484 = vld [vmem:[%s2 + $0x828] sm:$0xff]
  %v2485 = vld [vmem:[%s2 + $0x830] sm:$0xff]
  %v2486 = vld [vmem:[%s2 + $0x838] sm:$0xf]
  %v2487 = vld [vmem:[%s2 + $0x83c] sm:$0xff]
  %v2488 = vld [vmem:[%s2 + $0x844] sm:$0xff]
  %v2489 = vld [vmem:[%s2 + $0x84c] sm:$0xff]
  %v2490 = vld [vmem:[%s2 + $0x854] sm:$0xff]
  %v2491 = vld [vmem:[%s2 + $0x85c] sm:$0xff]
  %v2492 = vld [vmem:[%s2 + $0x864] sm:$0xff]
  %v2493 = vld [vmem:[%s2 + $0x86c] sm:$0xff]
  %v2494 = vld [vmem:[%s2 + $0x874] sm:$0xff]
  %v2495 = vld [vmem:[%s2 + $0x87c] sm:$0xf]
  %v2496 = vld [vmem:[%s2 + $0x880] sm:$0xff]
  %v2497 = vld [vmem:[%s2 + $0x888] sm:$0xff]
  %v2498 = vld [vmem:[%s2 + $0x890] sm:$0xff]
  %v2499 = vld [vmem:[%s2 + $0x898] sm:$0xff]
  %v2500 = vld [vmem:[%s2 + $0x8a0] sm:$0xff]
  %v2501 = vld [vmem:[%s2 + $0x8a8] sm:$0xff]
  %v2502 = vld [vmem:[%s2 + $0x8b0] sm:$0xff]
  %v2503 = vld [vmem:[%s2 + $0x8b8] sm:$0xff]
  %v2504 = vld [vmem:[%s2 + $0x8c0] sm:$0xf]
  %v2505 = vld [vmem:[%s2 + $0x8c4] sm:$0xff]
  %v2506 = vld [vmem:[%s2 + $0x8cc] sm:$0xff]
  %v2507 = vld [vmem:[%s2 + $0x8d4] sm:$0xff]
  %v2508 = vld [vmem:[%s2 + $0x8dc] sm:$0xff]
  %v2509 = vld [vmem:[%s2 + $0x8e4] sm:$0xff]
  %v2510 = vld [vmem:[%s2 + $0x8ec] sm:$0xff]
  %v2511 = vld [vmem:[%s2 + $0x8f4] sm:$0xff]
  %v2512 = vld [vmem:[%s2 + $0x8fc] sm:$0xff]
  %v2513 = vld [vmem:[%s2 + $0x904] sm:$0xf]
  %v2514 = vld [vmem:[%s2 + $0x908] sm:$0xff]
  %v2515 = vld [vmem:[%s2 + $0x910] sm:$0xff]
  %v2516 = vld [vmem:[%s2 + $0x918] sm:$0xff]
  %v2517 = vld [vmem:[%s2 + $0x920] sm:$0xff]
  %v2518 = vld [vmem:[%s2 + $0x928] sm:$0xff]
  %v2519 = vld [vmem:[%s2 + $0x930] sm:$0xff]
  %v2520 = vld [vmem:[%s2 + $0x938] sm:$0xff]
  %v2521 = vld [vmem:[%s2 + $0x940] sm:$0xff]
  %v2522 = vld [vmem:[%s2 + $0x948] sm:$0xf]
  %v2523 = vld [vmem:[%s2 + $0x94c] sm:$0xff]
  %v2524 = vld [vmem:[%s2 + $0x954] sm:$0xff]
  %v2525 = vld [vmem:[%s2 + $0x95c] sm:$0xff]
  %v2526 = vld [vmem:[%s2 + $0x964] sm:$0xff]
  %v2527 = vld [vmem:[%s2 + $0x96c] sm:$0xff]
  %v2528 = vld [vmem:[%s2 + $0x974] sm:$0xff]
  %v2529 = vld [vmem:[%s2 + $0x97c] sm:$0xff]
  %v2530 = vld [vmem:[%s2 + $0x984] sm:$0xff]
  %v2531 = vld [vmem:[%s2 + $0x98c] sm:$0xf]
  %v2532 = vld [vmem:[%s2 + $0x990] sm:$0xff]
  %v2533 = vld [vmem:[%s2 + $0x998] sm:$0xff]
  %v2534 = vld [vmem:[%s2 + $0x9a0] sm:$0xff]
  %v2535 = vld [vmem:[%s2 + $0x9a8] sm:$0xff]
  %v2536 = vld [vmem:[%s2 + $0x9b0] sm:$0xff]
  %v2537 = vld [vmem:[%s2 + $0x9b8] sm:$0xff]
  %v2538 = vld [vmem:[%s2 + $0x9c0] sm:$0xff]
  %v2539 = vld [vmem:[%s2 + $0x9c8] sm:$0xff]
  %v2540 = vld [vmem:[%s2 + $0x9d0] sm:$0xf]
  %v2541 = vld [vmem:[%s2 + $0x9d4] sm:$0xff]
  %v2542 = vld [vmem:[%s2 + $0x9dc] sm:$0xff]
  %v2543 = vld [vmem:[%s2 + $0x9e4] sm:$0xff]
  %v2544 = vld [vmem:[%s2 + $0x9ec] sm:$0xff]
  %v2545 = vld [vmem:[%s2 + $0x9f4] sm:$0xff]
  %v2546 = vld [vmem:[%s2 + $0x9fc] sm:$0xff]
  %v2547 = vld [vmem:[%s2 + $0xa04] sm:$0xff]
  %v2548 = vld [vmem:[%s2 + $0xa0c] sm:$0xff]
  %v2549 = vld [vmem:[%s2 + $0xa14] sm:$0xf]
  %v2550 = vld [vmem:[%s2 + $0xa18] sm:$0xff]
  %v2551 = vld [vmem:[%s2 + $0xa20] sm:$0xff]
  %v2552 = vld [vmem:[%s2 + $0xa28] sm:$0xff]
  %v2553 = vld [vmem:[%s2 + $0xa30] sm:$0xff]
  %v2554 = vld [vmem:[%s2 + $0xa38] sm:$0xff]
  %v2555 = vld [vmem:[%s2 + $0xa40] sm:$0xff]
  %v2556 = vld [vmem:[%s2 + $0xa48] sm:$0xff]
  %v2557 = vld [vmem:[%s2 + $0xa50] sm:$0xff]
  %v2558 = vld [vmem:[%s2 + $0xa58] sm:$0xf]
  %v2559 = vld [vmem:[%s2 + $0xa5c] sm:$0xff]
  %v2560 = vld [vmem:[%s2 + $0xa64] sm:$0xff]
  %v2561 = vld [vmem:[%s2 + $0xa6c] sm:$0xff]
  %v2562 = vld [vmem:[%s2 + $0xa74] sm:$0xff]
  %v2563 = vld [vmem:[%s2 + $0xa7c] sm:$0xff]
  %v2564 = vld [vmem:[%s2 + $0xa84] sm:$0xff]
  %v2565 = vld [vmem:[%s2 + $0xa8c] sm:$0xff]
  %v2566 = vld [vmem:[%s2 + $0xa94] sm:$0xff]
  %v2567 = vld [vmem:[%s2 + $0xa9c] sm:$0xf]
  %v2568 = vld [vmem:[%s2 + $0xaa0] sm:$0xff]
  %v2569 = vld [vmem:[%s2 + $0xaa8] sm:$0xff]
  %v2570 = vld [vmem:[%s2 + $0xab0] sm:$0xff]
  %v2571 = vld [vmem:[%s2 + $0xab8] sm:$0xff]
  %v2572 = vld [vmem:[%s2 + $0xac0] sm:$0xff]
  %v2573 = vld [vmem:[%s2 + $0xac8] sm:$0xff]
  %v2574 = vld [vmem:[%s2 + $0xad0] sm:$0xff]
  %v2575 = vld [vmem:[%s2 + $0xad8] sm:$0xff]
  %v2576 = vld [vmem:[%s2 + $0xae0] sm:$0xf]
  %v2577 = vld [vmem:[%s2 + $0xae4] sm:$0xff]
  %v2578 = vld [vmem:[%s2 + $0xaec] sm:$0xff]
  %v2579 = vld [vmem:[%s2 + $0xaf4] sm:$0xff]
  %v2580 = vld [vmem:[%s2 + $0xafc] sm:$0xff]
  %v2581 = vld [vmem:[%s2 + $0xb04] sm:$0xff]
  %v2582 = vld [vmem:[%s2 + $0xb0c] sm:$0xff]
  %v2583 = vld [vmem:[%s2 + $0xb14] sm:$0xff]
  %v2584 = vld [vmem:[%s2 + $0xb1c] sm:$0xff]
  %v2585 = vld [vmem:[%s2 + $0xb24] sm:$0xf]
  %v2586 = vld [vmem:[%s2 + $0xb28] sm:$0xff]
  %v2587 = vld [vmem:[%s2 + $0xb30] sm:$0xff]
  %v2588 = vld [vmem:[%s2 + $0xb38] sm:$0xff]
  %v2589 = vld [vmem:[%s2 + $0xb40] sm:$0xff]
  %v2590 = vld [vmem:[%s2 + $0xb48] sm:$0xff]
  %v2591 = vld [vmem:[%s2 + $0xb50] sm:$0xff]
  %v2592 = vld [vmem:[%s2 + $0xb58] sm:$0xff]
  %v2593 = vld [vmem:[%s2 + $0xb60] sm:$0xff]
  %v2594 = vld [vmem:[%s2 + $0xb68] sm:$0xf]
  %v2982 = vunpack.c.l.b16 %v2208
  %v2983 = vunpack.c.h.b16 %v2208
  %v2984 = vunpack.c.l.b16 %v2209
  %v2985 = vunpack.c.h.b16 %v2209
  %v2986 = vunpack.c.l.b16 %v2210
  %v2987 = vunpack.c.h.b16 %v2210
  %v2988 = vunpack.c.l.b16 %v2211
  %v2989 = vunpack.c.h.b16 %v2211
  %v2990 = vunpack.c.l.b16 %v2212
  %v2991 = vunpack.c.h.b16 %v2212
  %v2992 = vunpack.c.l.b16 %v2213
  %v2993 = vunpack.c.h.b16 %v2213
  %v2994 = vunpack.c.l.b16 %v2214
  %v2995 = vunpack.c.h.b16 %v2214
  %v2996 = vunpack.c.l.b16 %v2215
  %v2997 = vunpack.c.h.b16 %v2215
  %v2998 = vunpack.c.l.b16 %v2216
  %v2999 = vunpack.c.l.b16 %v2217
  %v3000 = vunpack.c.h.b16 %v2217
  %v3001 = vunpack.c.l.b16 %v2218
  %v3002 = vunpack.c.h.b16 %v2218
  %v3003 = vunpack.c.l.b16 %v2219
  %v3004 = vunpack.c.h.b16 %v2219
  %v3005 = vunpack.c.l.b16 %v2220
  %v3006 = vunpack.c.h.b16 %v2220
  %v3007 = vunpack.c.l.b16 %v2221
  %v3008 = vunpack.c.h.b16 %v2221
  %v3009 = vunpack.c.l.b16 %v2222
  %v3010 = vunpack.c.h.b16 %v2222
  %v3011 = vunpack.c.l.b16 %v2223
  %v3012 = vunpack.c.h.b16 %v2223
  %v3013 = vunpack.c.l.b16 %v2224
  %v3014 = vunpack.c.h.b16 %v2224
  %v3015 = vunpack.c.l.b16 %v2225
  %v3016 = vunpack.c.l.b16 %v2226
  %v3017 = vunpack.c.h.b16 %v2226
  %v3018 = vunpack.c.l.b16 %v2227
  %v3019 = vunpack.c.h.b16 %v2227
  %v3020 = vunpack.c.l.b16 %v2228
  %v3021 = vunpack.c.h.b16 %v2228
  %v3022 = vunpack.c.l.b16 %v2229
  %v3023 = vunpack.c.h.b16 %v2229
  %v3024 = vunpack.c.l.b16 %v2230
  %v3025 = vunpack.c.h.b16 %v2230
  %v3026 = vunpack.c.l.b16 %v2231
  %v3027 = vunpack.c.h.b16 %v2231
  %v3028 = vunpack.c.l.b16 %v2232
  %v3029 = vunpack.c.h.b16 %v2232
  %v3030 = vunpack.c.l.b16 %v2233
  %v3031 = vunpack.c.h.b16 %v2233
  %v3032 = vunpack.c.l.b16 %v2234
  %v3033 = vunpack.c.l.b16 %v2235
  %v3034 = vunpack.c.h.b16 %v2235
  %v3035 = vunpack.c.l.b16 %v2236
  %v3036 = vunpack.c.h.b16 %v2236
  %v3037 = vunpack.c.l.b16 %v2237
  %v3038 = vunpack.c.h.b16 %v2237
  %v3039 = vunpack.c.l.b16 %v2238
  %v3040 = vunpack.c.h.b16 %v2238
  %v3041 = vunpack.c.l.b16 %v2239
  %v3042 = vunpack.c.h.b16 %v2239
  %v3043 = vunpack.c.l.b16 %v2240
  %v3044 = vunpack.c.h.b16 %v2240
  %v3045 = vunpack.c.l.b16 %v2241
  %v3046 = vunpack.c.h.b16 %v2241
  %v3047 = vunpack.c.l.b16 %v2242
  %v3048 = vunpack.c.h.b16 %v2242
  %v3049 = vunpack.c.l.b16 %v2243
  %v3050 = vunpack.c.l.b16 %v2244
  %v3051 = vunpack.c.h.b16 %v2244
  %v3052 = vunpack.c.l.b16 %v2245
  %v3053 = vunpack.c.h.b16 %v2245
  %v3054 = vunpack.c.l.b16 %v2246
  %v3055 = vunpack.c.h.b16 %v2246
  %v3056 = vunpack.c.l.b16 %v2247
  %v3057 = vunpack.c.h.b16 %v2247
  %v3058 = vunpack.c.l.b16 %v2248
  %v3059 = vunpack.c.h.b16 %v2248
  %v3060 = vunpack.c.l.b16 %v2249
  %v3061 = vunpack.c.h.b16 %v2249
  %v3062 = vunpack.c.l.b16 %v2250
  %v3063 = vunpack.c.h.b16 %v2250
  %v3064 = vunpack.c.l.b16 %v2251
  %v3065 = vunpack.c.h.b16 %v2251
  %v3066 = vunpack.c.l.b16 %v2252
  %v3067 = vunpack.c.l.b16 %v2253
  %v3068 = vunpack.c.h.b16 %v2253
  %v3069 = vunpack.c.l.b16 %v2254
  %v3070 = vunpack.c.h.b16 %v2254
  %v3071 = vunpack.c.l.b16 %v2255
  %v3072 = vunpack.c.h.b16 %v2255
  %v3073 = vunpack.c.l.b16 %v2256
  %v3074 = vunpack.c.h.b16 %v2256
  %v3075 = vunpack.c.l.b16 %v2257
  %v3076 = vunpack.c.h.b16 %v2257
  %v3077 = vunpack.c.l.b16 %v2258
  %v3078 = vunpack.c.h.b16 %v2258
  %v3079 = vunpack.c.l.b16 %v2259
  %v3080 = vunpack.c.h.b16 %v2259
  %v3081 = vunpack.c.l.b16 %v2260
  %v3082 = vunpack.c.h.b16 %v2260
  %v3083 = vunpack.c.l.b16 %v2261
  %v3084 = vunpack.c.l.b16 %v2262
  %v3085 = vunpack.c.h.b16 %v2262
  %v3086 = vunpack.c.l.b16 %v2263
  %v3087 = vunpack.c.h.b16 %v2263
  %v3088 = vunpack.c.l.b16 %v2264
  %v3089 = vunpack.c.h.b16 %v2264
  %v3090 = vunpack.c.l.b16 %v2265
  %v3091 = vunpack.c.h.b16 %v2265
  %v3092 = vunpack.c.l.b16 %v2266
  %v3093 = vunpack.c.h.b16 %v2266
  %v3094 = vunpack.c.l.b16 %v2267
  %v3095 = vunpack.c.h.b16 %v2267
  %v3096 = vunpack.c.l.b16 %v2268
  %v3097 = vunpack.c.h.b16 %v2268
  %v3098 = vunpack.c.l.b16 %v2269
  %v3099 = vunpack.c.h.b16 %v2269
  %v3100 = vunpack.c.l.b16 %v2270
  %v3101 = vunpack.c.l.b16 %v2271
  %v3102 = vunpack.c.h.b16 %v2271
  %v3103 = vunpack.c.l.b16 %v2272
  %v3104 = vunpack.c.h.b16 %v2272
  %v3105 = vunpack.c.l.b16 %v2273
  %v3106 = vunpack.c.h.b16 %v2273
  %v3107 = vunpack.c.l.b16 %v2274
  %v3108 = vunpack.c.h.b16 %v2274
  %v3109 = vunpack.c.l.b16 %v2275
  %v3110 = vunpack.c.h.b16 %v2275
  %v3111 = vunpack.c.l.b16 %v2276
  %v3112 = vunpack.c.h.b16 %v2276
  %v3113 = vunpack.c.l.b16 %v2277
  %v3114 = vunpack.c.h.b16 %v2277
  %v3115 = vunpack.c.l.b16 %v2278
  %v3116 = vunpack.c.h.b16 %v2278
  %v3117 = vunpack.c.l.b16 %v2279
  %v3118 = vunpack.c.l.b16 %v2280
  %v3119 = vunpack.c.h.b16 %v2280
  %v3120 = vunpack.c.l.b16 %v2281
  %v3121 = vunpack.c.h.b16 %v2281
  %v3122 = vunpack.c.l.b16 %v2282
  %v3123 = vunpack.c.h.b16 %v2282
  %v3124 = vunpack.c.l.b16 %v2283
  %v3125 = vunpack.c.h.b16 %v2283
  %v3126 = vunpack.c.l.b16 %v2284
  %v3127 = vunpack.c.h.b16 %v2284
  %v3128 = vunpack.c.l.b16 %v2285
  %v3129 = vunpack.c.h.b16 %v2285
  %v3130 = vunpack.c.l.b16 %v2286
  %v3131 = vunpack.c.h.b16 %v2286
  %v3132 = vunpack.c.l.b16 %v2287
  %v3133 = vunpack.c.h.b16 %v2287
  %v3134 = vunpack.c.l.b16 %v2288
  %v3135 = vunpack.c.l.b16 %v2289
  %v3136 = vunpack.c.h.b16 %v2289
  %v3137 = vunpack.c.l.b16 %v2290
  %v3138 = vunpack.c.h.b16 %v2290
  %v3139 = vunpack.c.l.b16 %v2291
  %v3140 = vunpack.c.h.b16 %v2291
  %v3141 = vunpack.c.l.b16 %v2292
  %v3142 = vunpack.c.h.b16 %v2292
  %v3143 = vunpack.c.l.b16 %v2293
  %v3144 = vunpack.c.h.b16 %v2293
  %v3145 = vunpack.c.l.b16 %v2294
  %v3146 = vunpack.c.h.b16 %v2294
  %v3147 = vunpack.c.l.b16 %v2295
  %v3148 = vunpack.c.h.b16 %v2295
  %v3149 = vunpack.c.l.b16 %v2296
  %v3150 = vunpack.c.h.b16 %v2296
  %v3151 = vunpack.c.l.b16 %v2297
  %v3152 = vunpack.c.l.b16 %v2298
  %v3153 = vunpack.c.h.b16 %v2298
  %v3154 = vunpack.c.l.b16 %v2299
  %v3155 = vunpack.c.h.b16 %v2299
  %v3156 = vunpack.c.l.b16 %v2300
  %v3157 = vunpack.c.h.b16 %v2300
  %v3158 = vunpack.c.l.b16 %v2301
  %v3159 = vunpack.c.h.b16 %v2301
  %v3160 = vunpack.c.l.b16 %v2302
  %v3161 = vunpack.c.h.b16 %v2302
  %v3162 = vunpack.c.l.b16 %v2303
  %v3163 = vunpack.c.h.b16 %v2303
  %v3164 = vunpack.c.l.b16 %v2304
  %v3165 = vunpack.c.h.b16 %v2304
  %v3166 = vunpack.c.l.b16 %v2305
  %v3167 = vunpack.c.h.b16 %v2305
  %v3168 = vunpack.c.l.b16 %v2306
  %v3169 = vunpack.c.l.b16 %v2307
  %v3170 = vunpack.c.h.b16 %v2307
  %v3171 = vunpack.c.l.b16 %v2308
  %v3172 = vunpack.c.h.b16 %v2308
  %v3173 = vunpack.c.l.b16 %v2309
  %v3174 = vunpack.c.h.b16 %v2309
  %v3175 = vunpack.c.l.b16 %v2310
  %v3176 = vunpack.c.h.b16 %v2310
  %v3177 = vunpack.c.l.b16 %v2311
  %v3178 = vunpack.c.h.b16 %v2311
  %v3179 = vunpack.c.l.b16 %v2312
  %v3180 = vunpack.c.h.b16 %v2312
  %v3181 = vunpack.c.l.b16 %v2313
  %v3182 = vunpack.c.h.b16 %v2313
  %v3183 = vunpack.c.l.b16 %v2314
  %v3184 = vunpack.c.h.b16 %v2314
  %v3185 = vunpack.c.l.b16 %v2315
  %v3186 = vunpack.c.l.b16 %v2316
  %v3187 = vunpack.c.h.b16 %v2316
  %v3188 = vunpack.c.l.b16 %v2317
  %v3189 = vunpack.c.h.b16 %v2317
  %v3190 = vunpack.c.l.b16 %v2318
  %v3191 = vunpack.c.h.b16 %v2318
  %v3192 = vunpack.c.l.b16 %v2319
  %v3193 = vunpack.c.h.b16 %v2319
  %v3194 = vunpack.c.l.b16 %v2320
  %v3195 = vunpack.c.h.b16 %v2320
  %v3196 = vunpack.c.l.b16 %v2321
  %v3197 = vunpack.c.h.b16 %v2321
  %v3198 = vunpack.c.l.b16 %v2322
  %v3199 = vunpack.c.h.b16 %v2322
  %v3200 = vunpack.c.l.b16 %v2323
  %v3201 = vunpack.c.h.b16 %v2323
  %v3202 = vunpack.c.l.b16 %v2324
  %v3203 = vunpack.c.l.b16 %v2325
  %v3204 = vunpack.c.h.b16 %v2325
  %v3205 = vunpack.c.l.b16 %v2326
  %v3206 = vunpack.c.h.b16 %v2326
  %v3207 = vunpack.c.l.b16 %v2327
  %v3208 = vunpack.c.h.b16 %v2327
  %v3209 = vunpack.c.l.b16 %v2328
  %v3210 = vunpack.c.h.b16 %v2328
  %v3211 = vunpack.c.l.b16 %v2329
  %v3212 = vunpack.c.h.b16 %v2329
  %v3213 = vunpack.c.l.b16 %v2330
  %v3214 = vunpack.c.h.b16 %v2330
  %v3215 = vunpack.c.l.b16 %v2331
  %v3216 = vunpack.c.h.b16 %v2331
  %v3217 = vunpack.c.l.b16 %v2332
  %v3218 = vunpack.c.h.b16 %v2332
  %v3219 = vunpack.c.l.b16 %v2333
  %v3220 = vunpack.c.l.b16 %v2334
  %v3221 = vunpack.c.h.b16 %v2334
  %v3222 = vunpack.c.l.b16 %v2335
  %v3223 = vunpack.c.h.b16 %v2335
  %v3224 = vunpack.c.l.b16 %v2336
  %v3225 = vunpack.c.h.b16 %v2336
  %v3226 = vunpack.c.l.b16 %v2337
  %v3227 = vunpack.c.h.b16 %v2337
  %v3228 = vunpack.c.l.b16 %v2338
  %v3229 = vunpack.c.h.b16 %v2338
  %v3230 = vunpack.c.l.b16 %v2339
  %v3231 = vunpack.c.h.b16 %v2339
  %v3232 = vunpack.c.l.b16 %v2340
  %v3233 = vunpack.c.h.b16 %v2340
  %v3234 = vunpack.c.l.b16 %v2341
  %v3235 = vunpack.c.h.b16 %v2341
  %v3236 = vunpack.c.l.b16 %v2342
  %v3237 = vunpack.c.l.b16 %v2343
  %v3238 = vunpack.c.h.b16 %v2343
  %v3239 = vunpack.c.l.b16 %v2344
  %v3240 = vunpack.c.h.b16 %v2344
  %v3241 = vunpack.c.l.b16 %v2345
  %v3242 = vunpack.c.h.b16 %v2345
  %v3243 = vunpack.c.l.b16 %v2346
  %v3244 = vunpack.c.h.b16 %v2346
  %v3245 = vunpack.c.l.b16 %v2347
  %v3246 = vunpack.c.h.b16 %v2347
  %v3247 = vunpack.c.l.b16 %v2348
  %v3248 = vunpack.c.h.b16 %v2348
  %v3249 = vunpack.c.l.b16 %v2349
  %v3250 = vunpack.c.h.b16 %v2349
  %v3251 = vunpack.c.l.b16 %v2350
  %v3252 = vunpack.c.h.b16 %v2350
  %v3253 = vunpack.c.l.b16 %v2351
  %v3254 = vunpack.c.l.b16 %v2352
  %v3255 = vunpack.c.h.b16 %v2352
  %v3256 = vunpack.c.l.b16 %v2353
  %v3257 = vunpack.c.h.b16 %v2353
  %v3258 = vunpack.c.l.b16 %v2354
  %v3259 = vunpack.c.h.b16 %v2354
  %v3260 = vunpack.c.l.b16 %v2355
  %v3261 = vunpack.c.h.b16 %v2355
  %v3262 = vunpack.c.l.b16 %v2356
  %v3263 = vunpack.c.h.b16 %v2356
  %v3264 = vunpack.c.l.b16 %v2357
  %v3265 = vunpack.c.h.b16 %v2357
  %v3266 = vunpack.c.l.b16 %v2358
  %v3267 = vunpack.c.h.b16 %v2358
  %v3268 = vunpack.c.l.b16 %v2359
  %v3269 = vunpack.c.h.b16 %v2359
  %v3270 = vunpack.c.l.b16 %v2360
  %v3271 = vunpack.c.l.b16 %v2361
  %v3272 = vunpack.c.h.b16 %v2361
  %v3273 = vunpack.c.l.b16 %v2362
  %v3274 = vunpack.c.h.b16 %v2362
  %v3275 = vunpack.c.l.b16 %v2363
  %v3276 = vunpack.c.h.b16 %v2363
  %v3277 = vunpack.c.l.b16 %v2364
  %v3278 = vunpack.c.h.b16 %v2364
  %v3279 = vunpack.c.l.b16 %v2365
  %v3280 = vunpack.c.h.b16 %v2365
  %v3281 = vunpack.c.l.b16 %v2366
  %v3282 = vunpack.c.h.b16 %v2366
  %v3283 = vunpack.c.l.b16 %v2367
  %v3284 = vunpack.c.h.b16 %v2367
  %v3285 = vunpack.c.l.b16 %v2368
  %v3286 = vunpack.c.h.b16 %v2368
  %v3287 = vunpack.c.l.b16 %v2369
  %v3288 = vunpack.c.l.b16 %v2370
  %v3289 = vunpack.c.h.b16 %v2370
  %v3290 = vunpack.c.l.b16 %v2371
  %v3291 = vunpack.c.h.b16 %v2371
  %v3292 = vunpack.c.l.b16 %v2372
  %v3293 = vunpack.c.h.b16 %v2372
  %v3294 = vunpack.c.l.b16 %v2373
  %v3295 = vunpack.c.h.b16 %v2373
  %v3296 = vunpack.c.l.b16 %v2374
  %v3297 = vunpack.c.h.b16 %v2374
  %v3298 = vunpack.c.l.b16 %v2375
  %v3299 = vunpack.c.h.b16 %v2375
  %v3300 = vunpack.c.l.b16 %v2376
  %v3301 = vunpack.c.h.b16 %v2376
  %v3302 = vunpack.c.l.b16 %v2377
  %v3303 = vunpack.c.h.b16 %v2377
  %v3304 = vunpack.c.l.b16 %v2378
  %v3305 = vunpack.c.l.b16 %v2379
  %v3306 = vunpack.c.h.b16 %v2379
  %v3307 = vunpack.c.l.b16 %v2380
  %v3308 = vunpack.c.h.b16 %v2380
  %v3309 = vunpack.c.l.b16 %v2381
  %v3310 = vunpack.c.h.b16 %v2381
  %v3311 = vunpack.c.l.b16 %v2382
  %v3312 = vunpack.c.h.b16 %v2382
  %v3313 = vunpack.c.l.b16 %v2383
  %v3314 = vunpack.c.h.b16 %v2383
  %v3315 = vunpack.c.l.b16 %v2384
  %v3316 = vunpack.c.h.b16 %v2384
  %v3317 = vunpack.c.l.b16 %v2385
  %v3318 = vunpack.c.h.b16 %v2385
  %v3319 = vunpack.c.l.b16 %v2386
  %v3320 = vunpack.c.h.b16 %v2386
  %v3321 = vunpack.c.l.b16 %v2387
  %v3322 = vunpack.c.l.b16 %v2388
  %v3323 = vunpack.c.h.b16 %v2388
  %v3324 = vunpack.c.l.b16 %v2389
  %v3325 = vunpack.c.h.b16 %v2389
  %v3326 = vunpack.c.l.b16 %v2390
  %v3327 = vunpack.c.h.b16 %v2390
  %v3328 = vunpack.c.l.b16 %v2391
  %v3329 = vunpack.c.h.b16 %v2391
  %v3330 = vunpack.c.l.b16 %v2392
  %v3331 = vunpack.c.h.b16 %v2392
  %v3332 = vunpack.c.l.b16 %v2393
  %v3333 = vunpack.c.h.b16 %v2393
  %v3334 = vunpack.c.l.b16 %v2394
  %v3335 = vunpack.c.h.b16 %v2394
  %v3336 = vunpack.c.l.b16 %v2395
  %v3337 = vunpack.c.h.b16 %v2395
  %v3338 = vunpack.c.l.b16 %v2396
  %v3339 = vunpack.c.l.b16 %v2397
  %v3340 = vunpack.c.h.b16 %v2397
  %v3341 = vunpack.c.l.b16 %v2398
  %v3342 = vunpack.c.h.b16 %v2398
  %v3343 = vunpack.c.l.b16 %v2399
  %v3344 = vunpack.c.h.b16 %v2399
  %v3345 = vunpack.c.l.b16 %v2400
  %v3346 = vunpack.c.h.b16 %v2400
  %v3347 = vunpack.c.l.b16 %v2401
  %v3348 = vunpack.c.h.b16 %v2401
  %v3349 = vunpack.c.l.b16 %v2402
  %v3350 = vunpack.c.h.b16 %v2402
  %v3351 = vunpack.c.l.b16 %v2403
  %v3352 = vunpack.c.h.b16 %v2403
  %v3353 = vunpack.c.l.b16 %v2404
  %v3354 = vunpack.c.h.b16 %v2404
  %v3355 = vunpack.c.l.b16 %v2405
  %v3356 = vunpack.c.l.b16 %v2406
  %v3357 = vunpack.c.h.b16 %v2406
  %v3358 = vunpack.c.l.b16 %v2407
  %v3359 = vunpack.c.h.b16 %v2407
  %v3360 = vunpack.c.l.b16 %v2408
  %v3361 = vunpack.c.h.b16 %v2408
  %v3362 = vunpack.c.l.b16 %v2409
  %v3363 = vunpack.c.h.b16 %v2409
  %v3364 = vunpack.c.l.b16 %v2410
  %v3365 = vunpack.c.h.b16 %v2410
  %v3366 = vunpack.c.l.b16 %v2411
  %v3367 = vunpack.c.h.b16 %v2411
  %v3368 = vunpack.c.l.b16 %v2412
  %v3369 = vunpack.c.h.b16 %v2412
  %v3370 = vunpack.c.l.b16 %v2413
  %v3371 = vunpack.c.h.b16 %v2413
  %v3372 = vunpack.c.l.b16 %v2414
  %v3373 = vunpack.c.l.b16 %v2415
  %v3374 = vunpack.c.h.b16 %v2415
  %v3375 = vunpack.c.l.b16 %v2416
  %v3376 = vunpack.c.h.b16 %v2416
  %v3377 = vunpack.c.l.b16 %v2417
  %v3378 = vunpack.c.h.b16 %v2417
  %v3379 = vunpack.c.l.b16 %v2418
  %v3380 = vunpack.c.h.b16 %v2418
  %v3381 = vunpack.c.l.b16 %v2419
  %v3382 = vunpack.c.h.b16 %v2419
  %v3383 = vunpack.c.l.b16 %v2420
  %v3384 = vunpack.c.h.b16 %v2420
  %v3385 = vunpack.c.l.b16 %v2421
  %v3386 = vunpack.c.h.b16 %v2421
  %v3387 = vunpack.c.l.b16 %v2422
  %v3388 = vunpack.c.h.b16 %v2422
  %v3389 = vunpack.c.l.b16 %v2423
  %v3390 = vunpack.c.l.b16 %v2424
  %v3391 = vunpack.c.h.b16 %v2424
  %v3392 = vunpack.c.l.b16 %v2425
  %v3393 = vunpack.c.h.b16 %v2425
  %v3394 = vunpack.c.l.b16 %v2426
  %v3395 = vunpack.c.h.b16 %v2426
  %v3396 = vunpack.c.l.b16 %v2427
  %v3397 = vunpack.c.h.b16 %v2427
  %v3398 = vunpack.c.l.b16 %v2428
  %v3399 = vunpack.c.h.b16 %v2428
  %v3400 = vunpack.c.l.b16 %v2429
  %v3401 = vunpack.c.h.b16 %v2429
  %v3402 = vunpack.c.l.b16 %v2430
  %v3403 = vunpack.c.h.b16 %v2430
  %v3404 = vunpack.c.l.b16 %v2431
  %v3405 = vunpack.c.h.b16 %v2431
  %v3406 = vunpack.c.l.b16 %v2432
  %v3407 = vunpack.c.l.b16 %v2433
  %v3408 = vunpack.c.h.b16 %v2433
  %v3409 = vunpack.c.l.b16 %v2434
  %v3410 = vunpack.c.h.b16 %v2434
  %v3411 = vunpack.c.l.b16 %v2435
  %v3412 = vunpack.c.h.b16 %v2435
  %v3413 = vunpack.c.l.b16 %v2436
  %v3414 = vunpack.c.h.b16 %v2436
  %v3415 = vunpack.c.l.b16 %v2437
  %v3416 = vunpack.c.h.b16 %v2437
  %v3417 = vunpack.c.l.b16 %v2438
  %v3418 = vunpack.c.h.b16 %v2438
  %v3419 = vunpack.c.l.b16 %v2439
  %v3420 = vunpack.c.h.b16 %v2439
  %v3421 = vunpack.c.l.b16 %v2440
  %v3422 = vunpack.c.h.b16 %v2440
  %v3423 = vunpack.c.l.b16 %v2441
  %v3424 = vunpack.c.l.b16 %v2442
  %v3425 = vunpack.c.h.b16 %v2442
  %v3426 = vunpack.c.l.b16 %v2443
  %v3427 = vunpack.c.h.b16 %v2443
  %v3428 = vunpack.c.l.b16 %v2444
  %v3429 = vunpack.c.h.b16 %v2444
  %v3430 = vunpack.c.l.b16 %v2445
  %v3431 = vunpack.c.h.b16 %v2445
  %v3432 = vunpack.c.l.b16 %v2446
  %v3433 = vunpack.c.h.b16 %v2446
  %v3434 = vunpack.c.l.b16 %v2447
  %v3435 = vunpack.c.h.b16 %v2447
  %v3436 = vunpack.c.l.b16 %v2448
  %v3437 = vunpack.c.h.b16 %v2448
  %v3438 = vunpack.c.l.b16 %v2449
  %v3439 = vunpack.c.h.b16 %v2449
  %v3440 = vunpack.c.l.b16 %v2450
  %v3441 = vunpack.c.l.b16 %v2451
  %v3442 = vunpack.c.h.b16 %v2451
  %v3443 = vunpack.c.l.b16 %v2452
  %v3444 = vunpack.c.h.b16 %v2452
  %v3445 = vunpack.c.l.b16 %v2453
  %v3446 = vunpack.c.h.b16 %v2453
  %v3447 = vunpack.c.l.b16 %v2454
  %v3448 = vunpack.c.h.b16 %v2454
  %v3449 = vunpack.c.l.b16 %v2455
  %v3450 = vunpack.c.h.b16 %v2455
  %v3451 = vunpack.c.l.b16 %v2456
  %v3452 = vunpack.c.h.b16 %v2456
  %v3453 = vunpack.c.l.b16 %v2457
  %v3454 = vunpack.c.h.b16 %v2457
  %v3455 = vunpack.c.l.b16 %v2458
  %v3456 = vunpack.c.h.b16 %v2458
  %v3457 = vunpack.c.l.b16 %v2459
  %v3458 = vunpack.c.l.b16 %v2460
  %v3459 = vunpack.c.h.b16 %v2460
  %v3460 = vunpack.c.l.b16 %v2461
  %v3461 = vunpack.c.h.b16 %v2461
  %v3462 = vunpack.c.l.b16 %v2462
  %v3463 = vunpack.c.h.b16 %v2462
  %v3464 = vunpack.c.l.b16 %v2463
  %v3465 = vunpack.c.h.b16 %v2463
  %v3466 = vunpack.c.l.b16 %v2464
  %v3467 = vunpack.c.h.b16 %v2464
  %v3468 = vunpack.c.l.b16 %v2465
  %v3469 = vunpack.c.h.b16 %v2465
  %v3470 = vunpack.c.l.b16 %v2466
  %v3471 = vunpack.c.h.b16 %v2466
  %v3472 = vunpack.c.l.b16 %v2467
  %v3473 = vunpack.c.h.b16 %v2467
  %v3474 = vunpack.c.l.b16 %v2468
  %v3475 = vunpack.c.l.b16 %v2469
  %v3476 = vunpack.c.h.b16 %v2469
  %v3477 = vunpack.c.l.b16 %v2470
  %v3478 = vunpack.c.h.b16 %v2470
  %v3479 = vunpack.c.l.b16 %v2471
  %v3480 = vunpack.c.h.b16 %v2471
  %v3481 = vunpack.c.l.b16 %v2472
  %v3482 = vunpack.c.h.b16 %v2472
  %v3483 = vunpack.c.l.b16 %v2473
  %v3484 = vunpack.c.h.b16 %v2473
  %v3485 = vunpack.c.l.b16 %v2474
  %v3486 = vunpack.c.h.b16 %v2474
  %v3487 = vunpack.c.l.b16 %v2475
  %v3488 = vunpack.c.h.b16 %v2475
  %v3489 = vunpack.c.l.b16 %v2476
  %v3490 = vunpack.c.h.b16 %v2476
  %v3491 = vunpack.c.l.b16 %v2477
  %v3492 = vunpack.c.l.b16 %v2478
  %v3493 = vunpack.c.h.b16 %v2478
  %v3494 = vunpack.c.l.b16 %v2479
  %v3495 = vunpack.c.h.b16 %v2479
  %v3496 = vunpack.c.l.b16 %v2480
  %v3497 = vunpack.c.h.b16 %v2480
  %v3498 = vunpack.c.l.b16 %v2481
  %v3499 = vunpack.c.h.b16 %v2481
  %v3500 = vunpack.c.l.b16 %v2482
  %v3501 = vunpack.c.h.b16 %v2482
  %v3502 = vunpack.c.l.b16 %v2483
  %v3503 = vunpack.c.h.b16 %v2483
  %v3504 = vunpack.c.l.b16 %v2484
  %v3505 = vunpack.c.h.b16 %v2484
  %v3506 = vunpack.c.l.b16 %v2485
  %v3507 = vunpack.c.h.b16 %v2485
  %v3508 = vunpack.c.l.b16 %v2486
  %v3509 = vunpack.c.l.b16 %v2487
  %v3510 = vunpack.c.h.b16 %v2487
  %v3511 = vunpack.c.l.b16 %v2488
  %v3512 = vunpack.c.h.b16 %v2488
  %v3513 = vunpack.c.l.b16 %v2489
  %v3514 = vunpack.c.h.b16 %v2489
  %v3515 = vunpack.c.l.b16 %v2490
  %v3516 = vunpack.c.h.b16 %v2490
  %v3517 = vunpack.c.l.b16 %v2491
  %v3518 = vunpack.c.h.b16 %v2491
  %v3519 = vunpack.c.l.b16 %v2492
  %v3520 = vunpack.c.h.b16 %v2492
  %v3521 = vunpack.c.l.b16 %v2493
  %v3522 = vunpack.c.h.b16 %v2493
  %v3523 = vunpack.c.l.b16 %v2494
  %v3524 = vunpack.c.h.b16 %v2494
  %v3525 = vunpack.c.l.b16 %v2495
  %v3526 = vunpack.c.l.b16 %v2496
  %v3527 = vunpack.c.h.b16 %v2496
  %v3528 = vunpack.c.l.b16 %v2497
  %v3529 = vunpack.c.h.b16 %v2497
  %v3530 = vunpack.c.l.b16 %v2498
  %v3531 = vunpack.c.h.b16 %v2498
  %v3532 = vunpack.c.l.b16 %v2499
  %v3533 = vunpack.c.h.b16 %v2499
  %v3534 = vunpack.c.l.b16 %v2500
  %v3535 = vunpack.c.h.b16 %v2500
  %v3536 = vunpack.c.l.b16 %v2501
  %v3537 = vunpack.c.h.b16 %v2501
  %v3538 = vunpack.c.l.b16 %v2502
  %v3539 = vunpack.c.h.b16 %v2502
  %v3540 = vunpack.c.l.b16 %v2503
  %v3541 = vunpack.c.h.b16 %v2503
  %v3542 = vunpack.c.l.b16 %v2504
  %v3543 = vunpack.c.l.b16 %v2505
  %v3544 = vunpack.c.h.b16 %v2505
  %v3545 = vunpack.c.l.b16 %v2506
  %v3546 = vunpack.c.h.b16 %v2506
  %v3547 = vunpack.c.l.b16 %v2507
  %v3548 = vunpack.c.h.b16 %v2507
  %v3549 = vunpack.c.l.b16 %v2508
  %v3550 = vunpack.c.h.b16 %v2508
  %v3551 = vunpack.c.l.b16 %v2509
  %v3552 = vunpack.c.h.b16 %v2509
  %v3553 = vunpack.c.l.b16 %v2510
  %v3554 = vunpack.c.h.b16 %v2510
  %v3555 = vunpack.c.l.b16 %v2511
  %v3556 = vunpack.c.h.b16 %v2511
  %v3557 = vunpack.c.l.b16 %v2512
  %v3558 = vunpack.c.h.b16 %v2512
  %v3559 = vunpack.c.l.b16 %v2513
  %v3560 = vunpack.c.l.b16 %v2514
  %v3561 = vunpack.c.h.b16 %v2514
  %v3562 = vunpack.c.l.b16 %v2515
  %v3563 = vunpack.c.h.b16 %v2515
  %v3564 = vunpack.c.l.b16 %v2516
  %v3565 = vunpack.c.h.b16 %v2516
  %v3566 = vunpack.c.l.b16 %v2517
  %v3567 = vunpack.c.h.b16 %v2517
  %v3568 = vunpack.c.l.b16 %v2518
  %v3569 = vunpack.c.h.b16 %v2518
  %v3570 = vunpack.c.l.b16 %v2519
  %v3571 = vunpack.c.h.b16 %v2519
  %v3572 = vunpack.c.l.b16 %v2520
  %v3573 = vunpack.c.h.b16 %v2520
  %v3574 = vunpack.c.l.b16 %v2521
  %v3575 = vunpack.c.h.b16 %v2521
  %v3576 = vunpack.c.l.b16 %v2522
  %v3577 = vunpack.c.l.b16 %v2523
  %v3578 = vunpack.c.h.b16 %v2523
  %v3579 = vunpack.c.l.b16 %v2524
  %v3580 = vunpack.c.h.b16 %v2524
  %v3581 = vunpack.c.l.b16 %v2525
  %v3582 = vunpack.c.h.b16 %v2525
  %v3583 = vunpack.c.l.b16 %v2526
  %v3584 = vunpack.c.h.b16 %v2526
  %v3585 = vunpack.c.l.b16 %v2527
  %v3586 = vunpack.c.h.b16 %v2527
  %v3587 = vunpack.c.l.b16 %v2528
  %v3588 = vunpack.c.h.b16 %v2528
  %v3589 = vunpack.c.l.b16 %v2529
  %v3590 = vunpack.c.h.b16 %v2529
  %v3591 = vunpack.c.l.b16 %v2530
  %v3592 = vunpack.c.h.b16 %v2530
  %v3593 = vunpack.c.l.b16 %v2531
  %v3594 = vunpack.c.l.b16 %v2532
  %v3595 = vunpack.c.h.b16 %v2532
  %v3596 = vunpack.c.l.b16 %v2533
  %v3597 = vunpack.c.h.b16 %v2533
  %v3598 = vunpack.c.l.b16 %v2534
  %v3599 = vunpack.c.h.b16 %v2534
  %v3600 = vunpack.c.l.b16 %v2535
  %v3601 = vunpack.c.h.b16 %v2535
  %v3602 = vunpack.c.l.b16 %v2536
  %v3603 = vunpack.c.h.b16 %v2536
  %v3604 = vunpack.c.l.b16 %v2537
  %v3605 = vunpack.c.h.b16 %v2537
  %v3606 = vunpack.c.l.b16 %v2538
  %v3607 = vunpack.c.h.b16 %v2538
  %v3608 = vunpack.c.l.b16 %v2539
  %v3609 = vunpack.c.h.b16 %v2539
  %v3610 = vunpack.c.l.b16 %v2540
  %v3611 = vunpack.c.l.b16 %v2541
  %v3612 = vunpack.c.h.b16 %v2541
  %v3613 = vunpack.c.l.b16 %v2542
  %v3614 = vunpack.c.h.b16 %v2542
  %v3615 = vunpack.c.l.b16 %v2543
  %v3616 = vunpack.c.h.b16 %v2543
  %v3617 = vunpack.c.l.b16 %v2544
  %v3618 = vunpack.c.h.b16 %v2544
  %v3619 = vunpack.c.l.b16 %v2545
  %v3620 = vunpack.c.h.b16 %v2545
  %v3621 = vunpack.c.l.b16 %v2546
  %v3622 = vunpack.c.h.b16 %v2546
  %v3623 = vunpack.c.l.b16 %v2547
  %v3624 = vunpack.c.h.b16 %v2547
  %v3625 = vunpack.c.l.b16 %v2548
  %v3626 = vunpack.c.h.b16 %v2548
  %v3627 = vunpack.c.l.b16 %v2549
  %v3628 = vunpack.c.l.b16 %v2550
  %v3629 = vunpack.c.h.b16 %v2550
  %v3630 = vunpack.c.l.b16 %v2551
  %v3631 = vunpack.c.h.b16 %v2551
  %v3632 = vunpack.c.l.b16 %v2552
  %v3633 = vunpack.c.h.b16 %v2552
  %v3634 = vunpack.c.l.b16 %v2553
  %v3635 = vunpack.c.h.b16 %v2553
  %v3636 = vunpack.c.l.b16 %v2554
  %v3637 = vunpack.c.h.b16 %v2554
  %v3638 = vunpack.c.l.b16 %v2555
  %v3639 = vunpack.c.h.b16 %v2555
  %v3640 = vunpack.c.l.b16 %v2556
  %v3641 = vunpack.c.h.b16 %v2556
  %v3642 = vunpack.c.l.b16 %v2557
  %v3643 = vunpack.c.h.b16 %v2557
  %v3644 = vunpack.c.l.b16 %v2558
  %v3645 = vunpack.c.l.b16 %v2559
  %v3646 = vunpack.c.h.b16 %v2559
  %v3647 = vunpack.c.l.b16 %v2560
  %v3648 = vunpack.c.h.b16 %v2560
  %v3649 = vunpack.c.l.b16 %v2561
  %v3650 = vunpack.c.h.b16 %v2561
  %v3651 = vunpack.c.l.b16 %v2562
  %v3652 = vunpack.c.h.b16 %v2562
  %v3653 = vunpack.c.l.b16 %v2563
  %v3654 = vunpack.c.h.b16 %v2563
  %v3655 = vunpack.c.l.b16 %v2564
  %v3656 = vunpack.c.h.b16 %v2564
  %v3657 = vunpack.c.l.b16 %v2565
  %v3658 = vunpack.c.h.b16 %v2565
  %v3659 = vunpack.c.l.b16 %v2566
  %v3660 = vunpack.c.h.b16 %v2566
  %v3661 = vunpack.c.l.b16 %v2567
  %v3662 = vunpack.c.l.b16 %v2568
  %v3663 = vunpack.c.h.b16 %v2568
  %v3664 = vunpack.c.l.b16 %v2569
  %v3665 = vunpack.c.h.b16 %v2569
  %v3666 = vunpack.c.l.b16 %v2570
  %v3667 = vunpack.c.h.b16 %v2570
  %v3668 = vunpack.c.l.b16 %v2571
  %v3669 = vunpack.c.h.b16 %v2571
  %v3670 = vunpack.c.l.b16 %v2572
  %v3671 = vunpack.c.h.b16 %v2572
  %v3672 = vunpack.c.l.b16 %v2573
  %v3673 = vunpack.c.h.b16 %v2573
  %v3674 = vunpack.c.l.b16 %v2574
  %v3675 = vunpack.c.h.b16 %v2574
  %v3676 = vunpack.c.l.b16 %v2575
  %v3677 = vunpack.c.h.b16 %v2575
  %v3678 = vunpack.c.l.b16 %v2576
  %v3679 = vunpack.c.l.b16 %v2577
  %v3680 = vunpack.c.h.b16 %v2577
  %v3681 = vunpack.c.l.b16 %v2578
  %v3682 = vunpack.c.h.b16 %v2578
  %v3683 = vunpack.c.l.b16 %v2579
  %v3684 = vunpack.c.h.b16 %v2579
  %v3685 = vunpack.c.l.b16 %v2580
  %v3686 = vunpack.c.h.b16 %v2580
  %v3687 = vunpack.c.l.b16 %v2581
  %v3688 = vunpack.c.h.b16 %v2581
  %v3689 = vunpack.c.l.b16 %v2582
  %v3690 = vunpack.c.h.b16 %v2582
  %v3691 = vunpack.c.l.b16 %v2583
  %v3692 = vunpack.c.h.b16 %v2583
  %v3693 = vunpack.c.l.b16 %v2584
  %v3694 = vunpack.c.h.b16 %v2584
  %v3695 = vunpack.c.l.b16 %v2585
  %v3696 = vunpack.c.l.b16 %v2586
  %v3697 = vunpack.c.h.b16 %v2586
  %v3698 = vunpack.c.l.b16 %v2587
  %v3699 = vunpack.c.h.b16 %v2587
  %v3700 = vunpack.c.l.b16 %v2588
  %v3701 = vunpack.c.h.b16 %v2588
  %v3702 = vunpack.c.l.b16 %v2589
  %v3703 = vunpack.c.h.b16 %v2589
  %v3704 = vunpack.c.l.b16 %v2590
  %v3705 = vunpack.c.h.b16 %v2590
  %v3706 = vunpack.c.l.b16 %v2591
  %v3707 = vunpack.c.h.b16 %v2591
  %v3708 = vunpack.c.l.b16 %v2592
  %v3709 = vunpack.c.h.b16 %v2592
  %v3710 = vunpack.c.l.b16 %v2593
  %v3711 = vunpack.c.h.b16 %v2593
  %v3712 = vunpack.c.l.b16 %v2594
  %v3713 = vpack.c.b16 %v2999, %v2982
  %v3714 = vpack.c.b16 %v3000, %v2983
  %v3715 = vpack.c.b16 %v3001, %v2984
  %v3716 = vpack.c.b16 %v3002, %v2985
  %v3717 = vpack.c.b16 %v3003, %v2986
  %v3718 = vpack.c.b16 %v3004, %v2987
  %v3719 = vpack.c.b16 %v3005, %v2988
  %v3720 = vpack.c.b16 %v3006, %v2989
  %v3721 = vpack.c.b16 %v3007, %v2990
  %v3722 = vpack.c.b16 %v3008, %v2991
  %v3723 = vpack.c.b16 %v3009, %v2992
  %v3724 = vpack.c.b16 %v3010, %v2993
  %v3725 = vpack.c.b16 %v3011, %v2994
  %v3726 = vpack.c.b16 %v3012, %v2995
  %v3727 = vpack.c.b16 %v3013, %v2996
  %v3728 = vpack.c.b16 %v3014, %v2997
  %v3729 = vpack.c.b16 %v3015, %v2998
  %v3730 = vpack.c.b16 %v3033, %v3016
  %v3731 = vpack.c.b16 %v3034, %v3017
  %v3732 = vpack.c.b16 %v3035, %v3018
  %v3733 = vpack.c.b16 %v3036, %v3019
  %v3734 = vpack.c.b16 %v3037, %v3020
  %v3735 = vpack.c.b16 %v3038, %v3021
  %v3736 = vpack.c.b16 %v3039, %v3022
  %v3737 = vpack.c.b16 %v3040, %v3023
  %v3738 = vpack.c.b16 %v3041, %v3024
  %v3739 = vpack.c.b16 %v3042, %v3025
  %v3740 = vpack.c.b16 %v3043, %v3026
  %v3741 = vpack.c.b16 %v3044, %v3027
  %v3742 = vpack.c.b16 %v3045, %v3028
  %v3743 = vpack.c.b16 %v3046, %v3029
  %v3744 = vpack.c.b16 %v3047, %v3030
  %v3745 = vpack.c.b16 %v3048, %v3031
  %v3746 = vpack.c.b16 %v3049, %v3032
  %v3747 = vpack.c.b16 %v3067, %v3050
  %v3748 = vpack.c.b16 %v3068, %v3051
  %v3749 = vpack.c.b16 %v3069, %v3052
  %v3750 = vpack.c.b16 %v3070, %v3053
  %v3751 = vpack.c.b16 %v3071, %v3054
  %v3752 = vpack.c.b16 %v3072, %v3055
  %v3753 = vpack.c.b16 %v3073, %v3056
  %v3754 = vpack.c.b16 %v3074, %v3057
  %v3755 = vpack.c.b16 %v3075, %v3058
  %v3756 = vpack.c.b16 %v3076, %v3059
  %v3757 = vpack.c.b16 %v3077, %v3060
  %v3758 = vpack.c.b16 %v3078, %v3061
  %v3759 = vpack.c.b16 %v3079, %v3062
  %v3760 = vpack.c.b16 %v3080, %v3063
  %v3761 = vpack.c.b16 %v3081, %v3064
  %v3762 = vpack.c.b16 %v3082, %v3065
  %v3763 = vpack.c.b16 %v3083, %v3066
  %v3764 = vpack.c.b16 %v3101, %v3084
  %v3765 = vpack.c.b16 %v3102, %v3085
  %v3766 = vpack.c.b16 %v3103, %v3086
  %v3767 = vpack.c.b16 %v3104, %v3087
  %v3768 = vpack.c.b16 %v3105, %v3088
  %v3769 = vpack.c.b16 %v3106, %v3089
  %v3770 = vpack.c.b16 %v3107, %v3090
  %v3771 = vpack.c.b16 %v3108, %v3091
  %v3772 = vpack.c.b16 %v3109, %v3092
  %v3773 = vpack.c.b16 %v3110, %v3093
  %v3774 = vpack.c.b16 %v3111, %v3094
  %v3775 = vpack.c.b16 %v3112, %v3095
  %v3776 = vpack.c.b16 %v3113, %v3096
  %v3777 = vpack.c.b16 %v3114, %v3097
  %v3778 = vpack.c.b16 %v3115, %v3098
  %v3779 = vpack.c.b16 %v3116, %v3099
  %v3780 = vpack.c.b16 %v3117, %v3100
  %v3781 = vpack.c.b16 %v3135, %v3118
  %v3782 = vpack.c.b16 %v3136, %v3119
  %v3783 = vpack.c.b16 %v3137, %v3120
  %v3784 = vpack.c.b16 %v3138, %v3121
  %v3785 = vpack.c.b16 %v3139, %v3122
  %v3786 = vpack.c.b16 %v3140, %v3123
  %v3787 = vpack.c.b16 %v3141, %v3124
  %v3788 = vpack.c.b16 %v3142, %v3125
  %v3789 = vpack.c.b16 %v3143, %v3126
  %v3790 = vpack.c.b16 %v3144, %v3127
  %v3791 = vpack.c.b16 %v3145, %v3128
  %v3792 = vpack.c.b16 %v3146, %v3129
  %v3793 = vpack.c.b16 %v3147, %v3130
  %v3794 = vpack.c.b16 %v3148, %v3131
  %v3795 = vpack.c.b16 %v3149, %v3132
  %v3796 = vpack.c.b16 %v3150, %v3133
  %v3797 = vpack.c.b16 %v3151, %v3134
  %v3798 = vpack.c.b16 %v3169, %v3152
  %v3799 = vpack.c.b16 %v3170, %v3153
  %v3800 = vpack.c.b16 %v3171, %v3154
  %v3801 = vpack.c.b16 %v3172, %v3155
  %v3802 = vpack.c.b16 %v3173, %v3156
  %v3803 = vpack.c.b16 %v3174, %v3157
  %v3804 = vpack.c.b16 %v3175, %v3158
  %v3805 = vpack.c.b16 %v3176, %v3159
  %v3806 = vpack.c.b16 %v3177, %v3160
  %v3807 = vpack.c.b16 %v3178, %v3161
  %v3808 = vpack.c.b16 %v3179, %v3162
  %v3809 = vpack.c.b16 %v3180, %v3163
  %v3810 = vpack.c.b16 %v3181, %v3164
  %v3811 = vpack.c.b16 %v3182, %v3165
  %v3812 = vpack.c.b16 %v3183, %v3166
  %v3813 = vpack.c.b16 %v3184, %v3167
  %v3814 = vpack.c.b16 %v3185, %v3168
  %v3815 = vpack.c.b16 %v3203, %v3186
  %v3816 = vpack.c.b16 %v3204, %v3187
  %v3817 = vpack.c.b16 %v3205, %v3188
  %v3818 = vpack.c.b16 %v3206, %v3189
  %v3819 = vpack.c.b16 %v3207, %v3190
  %v3820 = vpack.c.b16 %v3208, %v3191
  %v3821 = vpack.c.b16 %v3209, %v3192
  %v3822 = vpack.c.b16 %v3210, %v3193
  %v3823 = vpack.c.b16 %v3211, %v3194
  %v3824 = vpack.c.b16 %v3212, %v3195
  %v3825 = vpack.c.b16 %v3213, %v3196
  %v3826 = vpack.c.b16 %v3214, %v3197
  %v3827 = vpack.c.b16 %v3215, %v3198
  %v3828 = vpack.c.b16 %v3216, %v3199
  %v3829 = vpack.c.b16 %v3217, %v3200
  %v3830 = vpack.c.b16 %v3218, %v3201
  %v3831 = vpack.c.b16 %v3219, %v3202
  %v3832 = vpack.c.b16 %v3237, %v3220
  %v3833 = vpack.c.b16 %v3238, %v3221
  %v3834 = vpack.c.b16 %v3239, %v3222
  %v3835 = vpack.c.b16 %v3240, %v3223
  %v3836 = vpack.c.b16 %v3241, %v3224
  %v3837 = vpack.c.b16 %v3242, %v3225
  %v3838 = vpack.c.b16 %v3243, %v3226
  %v3839 = vpack.c.b16 %v3244, %v3227
  %v3840 = vpack.c.b16 %v3245, %v3228
  %v3841 = vpack.c.b16 %v3246, %v3229
  %v3842 = vpack.c.b16 %v3247, %v3230
  %v3843 = vpack.c.b16 %v3248, %v3231
  %v3844 = vpack.c.b16 %v3249, %v3232
  %v3845 = vpack.c.b16 %v3250, %v3233
  %v3846 = vpack.c.b16 %v3251, %v3234
  %v3847 = vpack.c.b16 %v3252, %v3235
  %v3848 = vpack.c.b16 %v3253, %v3236
  %v3849 = vpack.c.b16 %v3271, %v3254
  %v3850 = vpack.c.b16 %v3272, %v3255
  %v3851 = vpack.c.b16 %v3273, %v3256
  %v3852 = vpack.c.b16 %v3274, %v3257
  %v3853 = vpack.c.b16 %v3275, %v3258
  %v3854 = vpack.c.b16 %v3276, %v3259
  %v3855 = vpack.c.b16 %v3277, %v3260
  %v3856 = vpack.c.b16 %v3278, %v3261
  %v3857 = vpack.c.b16 %v3279, %v3262
  %v3858 = vpack.c.b16 %v3280, %v3263
  %v3859 = vpack.c.b16 %v3281, %v3264
  %v3860 = vpack.c.b16 %v3282, %v3265
  %v3861 = vpack.c.b16 %v3283, %v3266
  %v3862 = vpack.c.b16 %v3284, %v3267
  %v3863 = vpack.c.b16 %v3285, %v3268
  %v3864 = vpack.c.b16 %v3286, %v3269
  %v3865 = vpack.c.b16 %v3287, %v3270
  %v3866 = vpack.c.b16 %v3305, %v3288
  %v3867 = vpack.c.b16 %v3306, %v3289
  %v3868 = vpack.c.b16 %v3307, %v3290
  %v3869 = vpack.c.b16 %v3308, %v3291
  %v3870 = vpack.c.b16 %v3309, %v3292
  %v3871 = vpack.c.b16 %v3310, %v3293
  %v3872 = vpack.c.b16 %v3311, %v3294
  %v3873 = vpack.c.b16 %v3312, %v3295
  %v3874 = vpack.c.b16 %v3313, %v3296
  %v3875 = vpack.c.b16 %v3314, %v3297
  %v3876 = vpack.c.b16 %v3315, %v3298
  %v3877 = vpack.c.b16 %v3316, %v3299
  %v3878 = vpack.c.b16 %v3317, %v3300
  %v3879 = vpack.c.b16 %v3318, %v3301
  %v3880 = vpack.c.b16 %v3319, %v3302
  %v3881 = vpack.c.b16 %v3320, %v3303
  %v3882 = vpack.c.b16 %v3321, %v3304
  %v3883 = vpack.c.b16 %v3339, %v3322
  %v3884 = vpack.c.b16 %v3340, %v3323
  %v3885 = vpack.c.b16 %v3341, %v3324
  %v3886 = vpack.c.b16 %v3342, %v3325
  %v3887 = vpack.c.b16 %v3343, %v3326
  %v3888 = vpack.c.b16 %v3344, %v3327
  %v3889 = vpack.c.b16 %v3345, %v3328
  %v3890 = vpack.c.b16 %v3346, %v3329
  %v3891 = vpack.c.b16 %v3347, %v3330
  %v3892 = vpack.c.b16 %v3348, %v3331
  %v3893 = vpack.c.b16 %v3349, %v3332
  %v3894 = vpack.c.b16 %v3350, %v3333
  %v3895 = vpack.c.b16 %v3351, %v3334
  %v3896 = vpack.c.b16 %v3352, %v3335
  %v3897 = vpack.c.b16 %v3353, %v3336
  %v3898 = vpack.c.b16 %v3354, %v3337
  %v3899 = vpack.c.b16 %v3355, %v3338
  %v3900 = vpack.c.b16 %v3373, %v3356
  %v3901 = vpack.c.b16 %v3374, %v3357
  %v3902 = vpack.c.b16 %v3375, %v3358
  %v3903 = vpack.c.b16 %v3376, %v3359
  %v3904 = vpack.c.b16 %v3377, %v3360
  %v3905 = vpack.c.b16 %v3378, %v3361
  %v3906 = vpack.c.b16 %v3379, %v3362
  %v3907 = vpack.c.b16 %v3380, %v3363
  %v3908 = vpack.c.b16 %v3381, %v3364
  %v3909 = vpack.c.b16 %v3382, %v3365
  %v3910 = vpack.c.b16 %v3383, %v3366
  %v3911 = vpack.c.b16 %v3384, %v3367
  %v3912 = vpack.c.b16 %v3385, %v3368
  %v3913 = vpack.c.b16 %v3386, %v3369
  %v3914 = vpack.c.b16 %v3387, %v3370
  %v3915 = vpack.c.b16 %v3388, %v3371
  %v3916 = vpack.c.b16 %v3389, %v3372
  %v3917 = vpack.c.b16 %v3407, %v3390
  %v3918 = vpack.c.b16 %v3408, %v3391
  %v3919 = vpack.c.b16 %v3409, %v3392
  %v3920 = vpack.c.b16 %v3410, %v3393
  %v3921 = vpack.c.b16 %v3411, %v3394
  %v3922 = vpack.c.b16 %v3412, %v3395
  %v3923 = vpack.c.b16 %v3413, %v3396
  %v3924 = vpack.c.b16 %v3414, %v3397
  %v3925 = vpack.c.b16 %v3415, %v3398
  %v3926 = vpack.c.b16 %v3416, %v3399
  %v3927 = vpack.c.b16 %v3417, %v3400
  %v3928 = vpack.c.b16 %v3418, %v3401
  %v3929 = vpack.c.b16 %v3419, %v3402
  %v3930 = vpack.c.b16 %v3420, %v3403
  %v3931 = vpack.c.b16 %v3421, %v3404
  %v3932 = vpack.c.b16 %v3422, %v3405
  %v3933 = vpack.c.b16 %v3423, %v3406
  %v3934 = vpack.c.b16 %v3441, %v3424
  %v3935 = vpack.c.b16 %v3442, %v3425
  %v3936 = vpack.c.b16 %v3443, %v3426
  %v3937 = vpack.c.b16 %v3444, %v3427
  %v3938 = vpack.c.b16 %v3445, %v3428
  %v3939 = vpack.c.b16 %v3446, %v3429
  %v3940 = vpack.c.b16 %v3447, %v3430
  %v3941 = vpack.c.b16 %v3448, %v3431
  %v3942 = vpack.c.b16 %v3449, %v3432
  %v3943 = vpack.c.b16 %v3450, %v3433
  %v3944 = vpack.c.b16 %v3451, %v3434
  %v3945 = vpack.c.b16 %v3452, %v3435
  %v3946 = vpack.c.b16 %v3453, %v3436
  %v3947 = vpack.c.b16 %v3454, %v3437
  %v3948 = vpack.c.b16 %v3455, %v3438
  %v3949 = vpack.c.b16 %v3456, %v3439
  %v3950 = vpack.c.b16 %v3457, %v3440
  %v3951 = vpack.c.b16 %v3475, %v3458
  %v3952 = vpack.c.b16 %v3476, %v3459
  %v3953 = vpack.c.b16 %v3477, %v3460
  %v3954 = vpack.c.b16 %v3478, %v3461
  %v3955 = vpack.c.b16 %v3479, %v3462
  %v3956 = vpack.c.b16 %v3480, %v3463
  %v3957 = vpack.c.b16 %v3481, %v3464
  %v3958 = vpack.c.b16 %v3482, %v3465
  %v3959 = vpack.c.b16 %v3483, %v3466
  %v3960 = vpack.c.b16 %v3484, %v3467
  %v3961 = vpack.c.b16 %v3485, %v3468
  %v3962 = vpack.c.b16 %v3486, %v3469
  %v3963 = vpack.c.b16 %v3487, %v3470
  %v3964 = vpack.c.b16 %v3488, %v3471
  %v3965 = vpack.c.b16 %v3489, %v3472
  %v3966 = vpack.c.b16 %v3490, %v3473
  %v3967 = vpack.c.b16 %v3491, %v3474
  %v3968 = vpack.c.b16 %v3509, %v3492
  %v3969 = vpack.c.b16 %v3510, %v3493
  %v3970 = vpack.c.b16 %v3511, %v3494
  %v3971 = vpack.c.b16 %v3512, %v3495
  %v3972 = vpack.c.b16 %v3513, %v3496
  %v3973 = vpack.c.b16 %v3514, %v3497
  %v3974 = vpack.c.b16 %v3515, %v3498
  %v3975 = vpack.c.b16 %v3516, %v3499
  %v3976 = vpack.c.b16 %v3517, %v3500
  %v3977 = vpack.c.b16 %v3518, %v3501
  %v3978 = vpack.c.b16 %v3519, %v3502
  %v3979 = vpack.c.b16 %v3520, %v3503
  %v3980 = vpack.c.b16 %v3521, %v3504
  %v3981 = vpack.c.b16 %v3522, %v3505
  %v3982 = vpack.c.b16 %v3523, %v3506
  %v3983 = vpack.c.b16 %v3524, %v3507
  %v3984 = vpack.c.b16 %v3525, %v3508
  %v3985 = vpack.c.b16 %v3543, %v3526
  %v3986 = vpack.c.b16 %v3544, %v3527
  %v3987 = vpack.c.b16 %v3545, %v3528
  %v3988 = vpack.c.b16 %v3546, %v3529
  %v3989 = vpack.c.b16 %v3547, %v3530
  %v3990 = vpack.c.b16 %v3548, %v3531
  %v3991 = vpack.c.b16 %v3549, %v3532
  %v3992 = vpack.c.b16 %v3550, %v3533
  %v3993 = vpack.c.b16 %v3551, %v3534
  %v3994 = vpack.c.b16 %v3552, %v3535
  %v3995 = vpack.c.b16 %v3553, %v3536
  %v3996 = vpack.c.b16 %v3554, %v3537
  %v3997 = vpack.c.b16 %v3555, %v3538
  %v3998 = vpack.c.b16 %v3556, %v3539
  %v3999 = vpack.c.b16 %v3557, %v3540
  %v4000 = vpack.c.b16 %v3558, %v3541
  %v4001 = vpack.c.b16 %v3559, %v3542
  %v4002 = vpack.c.b16 %v3577, %v3560
  %v4003 = vpack.c.b16 %v3578, %v3561
  %v4004 = vpack.c.b16 %v3579, %v3562
  %v4005 = vpack.c.b16 %v3580, %v3563
  %v4006 = vpack.c.b16 %v3581, %v3564
  %v4007 = vpack.c.b16 %v3582, %v3565
  %v4008 = vpack.c.b16 %v3583, %v3566
  %v4009 = vpack.c.b16 %v3584, %v3567
  %v4010 = vpack.c.b16 %v3585, %v3568
  %v4011 = vpack.c.b16 %v3586, %v3569
  %v4012 = vpack.c.b16 %v3587, %v3570
  %v4013 = vpack.c.b16 %v3588, %v3571
  %v4014 = vpack.c.b16 %v3589, %v3572
  %v4015 = vpack.c.b16 %v3590, %v3573
  %v4016 = vpack.c.b16 %v3591, %v3574
  %v4017 = vpack.c.b16 %v3592, %v3575
  %v4018 = vpack.c.b16 %v3593, %v3576
  %v4019 = vpack.c.b16 %v3611, %v3594
  %v4020 = vpack.c.b16 %v3612, %v3595
  %v4021 = vpack.c.b16 %v3613, %v3596
  %v4022 = vpack.c.b16 %v3614, %v3597
  %v4023 = vpack.c.b16 %v3615, %v3598
  %v4024 = vpack.c.b16 %v3616, %v3599
  %v4025 = vpack.c.b16 %v3617, %v3600
  %v4026 = vpack.c.b16 %v3618, %v3601
  %v4027 = vpack.c.b16 %v3619, %v3602
  %v4028 = vpack.c.b16 %v3620, %v3603
  %v4029 = vpack.c.b16 %v3621, %v3604
  %v4030 = vpack.c.b16 %v3622, %v3605
  %v4031 = vpack.c.b16 %v3623, %v3606
  %v4032 = vpack.c.b16 %v3624, %v3607
  %v4033 = vpack.c.b16 %v3625, %v3608
  %v4034 = vpack.c.b16 %v3626, %v3609
  %v4035 = vpack.c.b16 %v3627, %v3610
  %v4036 = vpack.c.b16 %v3645, %v3628
  %v4037 = vpack.c.b16 %v3646, %v3629
  %v4038 = vpack.c.b16 %v3647, %v3630
  %v4039 = vpack.c.b16 %v3648, %v3631
  %v4040 = vpack.c.b16 %v3649, %v3632
  %v4041 = vpack.c.b16 %v3650, %v3633
  %v4042 = vpack.c.b16 %v3651, %v3634
  %v4043 = vpack.c.b16 %v3652, %v3635
  %v4044 = vpack.c.b16 %v3653, %v3636
  %v4045 = vpack.c.b16 %v3654, %v3637
  %v4046 = vpack.c.b16 %v3655, %v3638
  %v4047 = vpack.c.b16 %v3656, %v3639
  %v4048 = vpack.c.b16 %v3657, %v3640
  %v4049 = vpack.c.b16 %v3658, %v3641
  %v4050 = vpack.c.b16 %v3659, %v3642
  %v4051 = vpack.c.b16 %v3660, %v3643
  %v4052 = vpack.c.b16 %v3661, %v3644
  %v4053 = vpack.c.b16 %v3679, %v3662
  %v4054 = vpack.c.b16 %v3680, %v3663
  %v4055 = vpack.c.b16 %v3681, %v3664
  %v4056 = vpack.c.b16 %v3682, %v3665
  %v4057 = vpack.c.b16 %v3683, %v3666
  %v4058 = vpack.c.b16 %v3684, %v3667
  %v4059 = vpack.c.b16 %v3685, %v3668
  %v4060 = vpack.c.b16 %v3686, %v3669
  %v4061 = vpack.c.b16 %v3687, %v3670
  %v4062 = vpack.c.b16 %v3688, %v3671
  %v4063 = vpack.c.b16 %v3689, %v3672
  %v4064 = vpack.c.b16 %v3690, %v3673
  %v4065 = vpack.c.b16 %v3691, %v3674
  %v4066 = vpack.c.b16 %v3692, %v3675
  %v4067 = vpack.c.b16 %v3693, %v3676
  %v4068 = vpack.c.b16 %v3694, %v3677
  %v4069 = vpack.c.b16 %v3695, %v3678
  %v4070 = vpack.c.b16 %v3696, %v3696
  %v4071 = vpack.c.b16 %v3697, %v3697
  %v4072 = vpack.c.b16 %v3698, %v3698
  %v4073 = vpack.c.b16 %v3699, %v3699
  %v4074 = vpack.c.b16 %v3700, %v3700
  %v4075 = vpack.c.b16 %v3701, %v3701
  %v4076 = vpack.c.b16 %v3702, %v3702
  %v4077 = vpack.c.b16 %v3703, %v3703
  %v4078 = vpack.c.b16 %v3704, %v3704
  %v4079 = vpack.c.b16 %v3705, %v3705
  %v4080 = vpack.c.b16 %v3706, %v3706
  %v4081 = vpack.c.b16 %v3707, %v3707
  %v4082 = vpack.c.b16 %v3708, %v3708
  %v4083 = vpack.c.b16 %v3709, %v3709
  %v4084 = vpack.c.b16 %v3710, %v3710
  %v4085 = vpack.c.b16 %v3711, %v3711
  %v4086 = vpack.c.b16 %v3712, %v3712
  %vm4439 = vcmask 130048
  %v4441 = vsel %vm4439, %v3729, 0
  %v4444 = vsel %vm4439, %v3746, 0
  %v4447 = vsel %vm4439, %v3763, 0
  %v4450 = vsel %vm4439, %v3780, 0
  %v4453 = vsel %vm4439, %v3797, 0
  %v4456 = vsel %vm4439, %v3814, 0
  %v4459 = vsel %vm4439, %v3831, 0
  %v4462 = vsel %vm4439, %v3848, 0
  %v4465 = vsel %vm4439, %v3865, 0
  %v4468 = vsel %vm4439, %v3882, 0
  %v4471 = vsel %vm4439, %v3899, 0
  %v4474 = vsel %vm4439, %v3916, 0
  %v4477 = vsel %vm4439, %v3933, 0
  %v4480 = vsel %vm4439, %v3950, 0
  %v4483 = vsel %vm4439, %v3967, 0
  %v4486 = vsel %vm4439, %v3984, 0
  %v4489 = vsel %vm4439, %v4001, 0
  %v4492 = vsel %vm4439, %v4018, 0
  %v4495 = vsel %vm4439, %v4035, 0
  %v4498 = vsel %vm4439, %v4052, 0
  %v4501 = vsel %vm4439, %v4069, 0
  %v4504 = vsel %vm4439, %v4086, 0
  %4506 = vmatprep.subr.bf16.mxu0 0
  %4507 = vmatpush1.bf16.msra.mxu0 %v2079
  %4508 = vmatprep.subr.bf16.mxu0 0
  %4509 = vmatpush1.bf16.msra.mxu0 %v2080
  %4510 = vmatprep.subr.bf16.mxu0 0
  %4511 = vmatpush1.bf16.msra.mxu0 %v2081
  %4512 = vmatprep.subr.bf16.mxu0 0
  %4513 = vmatpush1.bf16.msra.mxu0 %v2082
  %4514 = vmatprep.subr.bf16.mxu0 0
  %4515 = vmatpush1.bf16.msra.mxu0 %v2083
  %4516 = vmatprep.subr.bf16.mxu0 0
  %4517 = vmatpush1.bf16.msra.mxu0 %v2084
  %4518 = vmatprep.subr.bf16.mxu0 0
  %4519 = vmatpush1.bf16.msra.mxu0 %v2085
  %4520 = vmatprep.subr.bf16.mxu0 0
  %4521 = vmatpush1.bf16.msra.mxu0 %v2086
  %4522 = vmatprep.subr.bf16.mxu0 0
  %4523 = vmatpush1.bf16.msra.mxu0 %v2087
  %4524 = vmatprep.subr.bf16.mxu0 0
  %4525 = vmatpush1.bf16.msra.mxu0 %v2088
  %4526 = vmatprep.subr.bf16.mxu0 0
  %4527 = vmatpush1.bf16.msra.mxu0 %v2089
  %4528 = vmatprep.subr.bf16.mxu0 0
  %4529 = vmatpush1.bf16.msra.mxu0 %v2090
  %4530 = vmatprep.subr.bf16.mxu0 0
  %4531 = vmatpush1.bf16.msra.mxu0 %v2091
  %4532 = vmatprep.subr.bf16.mxu0 0
  %4533 = vmatpush1.bf16.msra.mxu0 %v2092
  %4534 = vmatprep.subr.bf16.mxu0 0
  %4535 = vmatpush1.bf16.msra.mxu0 %v2093
  %4536 = vmatprep.subr.bf16.mxu0 0
  %4537 = vmatpush1.bf16.msra.mxu0 %v2094
  %4538 = vmatprep.mubr.bf16.mxu0 %v3714
  %4539 = vmatmul.mubr.bf16.gmra.mrb[0].mxu0 %v3713
  %v4540 = vpop.f32.mrb[0].mxu0
  %v4541 = vadd.f32 0.0, %v4540
  %v4542 = vpop.f32.mrb[0].mxu0
  %v4543 = vpop.f32.mrb[0].mxu0
  %v4544 = vadd.f32 0.0, %v4543
  %v4545 = vpop.f32.mrb[0].mxu0
  %4546 = vmatprep.mubr.bf16.mxu0 %v3731
  %4547 = vmatmul.mubr.bf16.gmra.mrb[0].mxu0 %v3730
  %v4548 = vpop.f32.mrb[0].mxu0
  %v4549 = vadd.f32 0.0, %v4548
  %v4550 = vpop.f32.mrb[0].mxu0
  %v4551 = vpop.f32.mrb[0].mxu0
  %v4552 = vadd.f32 0.0, %v4551
  %v4553 = vpop.f32.mrb[0].mxu0
  %4554 = vmatprep.mubr.bf16.mxu0 %v3748
  %4555 = vmatmul.mubr.bf16.gmra.mrb[0].mxu0 %v3747
  %v4556 = vpop.f32.mrb[0].mxu0
  %v4557 = vadd.f32 0.0, %v4556
  %v4558 = vpop.f32.mrb[0].mxu0
  %v4559 = vpop.f32.mrb[0].mxu0
  %v4560 = vadd.f32 0.0, %v4559
  %v4561 = vpop.f32.mrb[0].mxu0
  %4562 = vmatprep.mubr.bf16.mxu0 %v3765
  %4563 = vmatmul.mubr.bf16.gmra.mrb[0].mxu0 %v3764
  %v4564 = vpop.f32.mrb[0].mxu0
  %v4565 = vadd.f32 0.0, %v4564
  %v4566 = vpop.f32.mrb[0].mxu0
  %v4567 = vpop.f32.mrb[0].mxu0
  %v4568 = vadd.f32 0.0, %v4567
  %v4569 = vpop.f32.mrb[0].mxu0
  %4570 = vmatprep.mubr.bf16.mxu0 %v3782
  %4571 = vmatmul.mubr.bf16.gmra.mrb[0].mxu0 %v3781
  %v4572 = vpop.f32.mrb[0].mxu0
  %v4573 = vadd.f32 0.0, %v4572
  %v4574 = vpop.f32.mrb[0].mxu0
  %v4575 = vpop.f32.mrb[0].mxu0
  %v4576 = vadd.f32 0.0, %v4575
  %v4577 = vpop.f32.mrb[0].mxu0
  %4578 = vmatprep.mubr.bf16.mxu0 %v3799
  %4579 = vmatmul.mubr.bf16.gmra.mrb[0].mxu0 %v3798
  %v4580 = vpop.f32.mrb[0].mxu0
  %v4581 = vadd.f32 0.0, %v4580
  %v4582 = vpop.f32.mrb[0].mxu0
  %v4583 = vpop.f32.mrb[0].mxu0
  %v4584 = vadd.f32 0.0, %v4583
  %v4585 = vpop.f32.mrb[0].mxu0
  %4586 = vmatprep.mubr.bf16.mxu0 %v3816
  %4587 = vmatmul.mubr.bf16.gmra.mrb[0].mxu0 %v3815
  %v4588 = vpop.f32.mrb[0].mxu0
  %v4589 = vadd.f32 0.0, %v4588
  %v4590 = vpop.f32.mrb[0].mxu0
  %v4591 = vpop.f32.mrb[0].mxu0
  %v4592 = vadd.f32 0.0, %v4591
  %v4593 = vpop.f32.mrb[0].mxu0
  %4594 = vmatprep.mubr.bf16.mxu0 %v3833
  %4595 = vmatmul.mubr.bf16.gmra.mrb[0].mxu0 %v3832
  %v4596 = vpop.f32.mrb[0].mxu0
  %v4597 = vadd.f32 0.0, %v4596
  %v4598 = vpop.f32.mrb[0].mxu0
  %v4599 = vpop.f32.mrb[0].mxu0
  %v4600 = vadd.f32 0.0, %v4599
  %v4601 = vpop.f32.mrb[0].mxu0
  %4602 = vmatprep.mubr.bf16.mxu0 %v3850
  %4603 = vmatmul.mubr.bf16.gmra.mrb[0].mxu0 %v3849
  %v4604 = vpop.f32.mrb[0].mxu0
  %v4605 = vadd.f32 0.0, %v4604
  %v4606 = vpop.f32.mrb[0].mxu0
  %v4607 = vpop.f32.mrb[0].mxu0
  %v4608 = vadd.f32 0.0, %v4607
  %v4609 = vpop.f32.mrb[0].mxu0
  %4610 = vmatprep.mubr.bf16.mxu0 %v3867
  %4611 = vmatmul.mubr.bf16.gmra.mrb[0].mxu0 %v3866
  %v4612 = vpop.f32.mrb[0].mxu0
  %v4613 = vadd.f32 0.0, %v4612
  %v4614 = vpop.f32.mrb[0].mxu0
  %v4615 = vpop.f32.mrb[0].mxu0
  %v4616 = vadd.f32 0.0, %v4615
  %v4617 = vpop.f32.mrb[0].mxu0
  %4618 = vmatprep.mubr.bf16.mxu0 %v3884
  %4619 = vmatmul.mubr.bf16.gmra.mrb[0].mxu0 %v3883
  %v4620 = vpop.f32.mrb[0].mxu0
  %v4621 = vadd.f32 0.0, %v4620
  %v4622 = vpop.f32.mrb[0].mxu0
  %v4623 = vpop.f32.mrb[0].mxu0
  %v4624 = vadd.f32 0.0, %v4623
  %v4625 = vpop.f32.mrb[0].mxu0
  %4626 = vmatprep.mubr.bf16.mxu0 %v3901
  %4627 = vmatmul.mubr.bf16.gmra.mrb[0].mxu0 %v3900
  %v4628 = vpop.f32.mrb[0].mxu0
  %v4629 = vadd.f32 0.0, %v4628
  %v4630 = vpop.f32.mrb[0].mxu0
  %v4631 = vpop.f32.mrb[0].mxu0
  %v4632 = vadd.f32 0.0, %v4631
  %v4633 = vpop.f32.mrb[0].mxu0
  %4634 = vmatprep.mubr.bf16.mxu0 %v3918
  %4635 = vmatmul.mubr.bf16.gmra.mrb[0].mxu0 %v3917
  %v4636 = vpop.f32.mrb[0].mxu0
  %v4637 = vadd.f32 0.0, %v4636
  %v4638 = vpop.f32.mrb[0].mxu0
  %v4639 = vpop.f32.mrb[0].mxu0
  %v4640 = vadd.f32 0.0, %v4639
  %v4641 = vpop.f32.mrb[0].mxu0
  %4642 = vmatprep.mubr.bf16.mxu0 %v3935
  %4643 = vmatmul.mubr.bf16.gmra.mrb[0].mxu0 %v3934
  %v4644 = vpop.f32.mrb[0].mxu0
  %v4645 = vadd.f32 0.0, %v4644
  %v4646 = vpop.f32.mrb[0].mxu0
  %v4647 = vpop.f32.mrb[0].mxu0
  %v4648 = vadd.f32 0.0, %v4647
  %v4649 = vpop.f32.mrb[0].mxu0
  %4650 = vmatprep.mubr.bf16.mxu0 %v3952
  %4651 = vmatmul.mubr.bf16.gmra.mrb[0].mxu0 %v3951
  %v4652 = vpop.f32.mrb[0].mxu0
  %v4653 = vadd.f32 0.0, %v4652
  %v4654 = vpop.f32.mrb[0].mxu0
  %v4655 = vpop.f32.mrb[0].mxu0
  %v4656 = vadd.f32 0.0, %v4655
  %v4657 = vpop.f32.mrb[0].mxu0
  %4658 = vmatprep.mubr.bf16.mxu0 %v3969
  %4659 = vmatmul.mubr.bf16.gmra.mrb[0].mxu0 %v3968
  %v4660 = vpop.f32.mrb[0].mxu0
  %v4661 = vadd.f32 0.0, %v4660
  %v4662 = vpop.f32.mrb[0].mxu0
  %v4663 = vpop.f32.mrb[0].mxu0
  %v4664 = vadd.f32 0.0, %v4663
  %v4665 = vpop.f32.mrb[0].mxu0
  %4666 = vmatprep.mubr.bf16.mxu0 %v3986
  %4667 = vmatmul.mubr.bf16.gmra.mrb[0].mxu0 %v3985
  %v4668 = vpop.f32.mrb[0].mxu0
  %v4669 = vadd.f32 0.0, %v4668
  %v4670 = vpop.f32.mrb[0].mxu0
  %v4671 = vpop.f32.mrb[0].mxu0
  %v4672 = vadd.f32 0.0, %v4671
  %v4673 = vpop.f32.mrb[0].mxu0
  %4674 = vmatprep.mubr.bf16.mxu0 %v4003
  %4675 = vmatmul.mubr.bf16.gmra.mrb[0].mxu0 %v4002
  %v4676 = vpop.f32.mrb[0].mxu0
  %v4677 = vadd.f32 0.0, %v4676
  %v4678 = vpop.f32.mrb[0].mxu0
  %v4679 = vpop.f32.mrb[0].mxu0
  %v4680 = vadd.f32 0.0, %v4679
  %v4681 = vpop.f32.mrb[0].mxu0
  %4682 = vmatprep.mubr.bf16.mxu0 %v4020
  %4683 = vmatmul.mubr.bf16.gmra.mrb[0].mxu0 %v4019
  %v4684 = vpop.f32.mrb[0].mxu0
  %v4685 = vadd.f32 0.0, %v4684
  %v4686 = vpop.f32.mrb[0].mxu0
  %v4687 = vpop.f32.mrb[0].mxu0
  %v4688 = vadd.f32 0.0, %v4687
  %v4689 = vpop.f32.mrb[0].mxu0
  %4690 = vmatprep.mubr.bf16.mxu0 %v4037
  %4691 = vmatmul.mubr.bf16.gmra.mrb[0].mxu0 %v4036
  %v4692 = vpop.f32.mrb[0].mxu0
  %v4693 = vadd.f32 0.0, %v4692
  %v4694 = vpop.f32.mrb[0].mxu0
  %v4695 = vpop.f32.mrb[0].mxu0
  %v4696 = vadd.f32 0.0, %v4695
  %v4697 = vpop.f32.mrb[0].mxu0
  %4698 = vmatprep.mubr.bf16.mxu0 %v4054
  %4699 = vmatmul.mubr.bf16.gmra.mrb[0].mxu0 %v4053
  %v4700 = vpop.f32.mrb[0].mxu0
  %v4701 = vadd.f32 0.0, %v4700
  %v4702 = vpop.f32.mrb[0].mxu0
  %v4703 = vpop.f32.mrb[0].mxu0
  %v4704 = vadd.f32 0.0, %v4703
  %v4705 = vpop.f32.mrb[0].mxu0
  %4706 = vmatprep.mubr.bf16.mxu0 %v4071
  %4707 = vmatmul.mubr.bf16.gmra.mrb[0].mxu0 %v4070
  %v4708 = vpop.f32.mrb[0].mxu0
  %v4709 = vadd.f32 0.0, %v4708
  %v4710 = vpop.f32.mrb[0].mxu0
  %v4711 = vpop.f32.mrb[0].mxu0
  %v4712 = vpop.f32.mrb[0].mxu0
  %4713 = vdwg.mxu0
  %4714 = vmatprep.subr.bf16.mxu0 0
  %4715 = vmatpush1.bf16.msra.mxu0 %v2095
  %4716 = vmatprep.subr.bf16.mxu0 0
  %4717 = vmatpush1.bf16.msra.mxu0 %v2096
  %4718 = vmatprep.subr.bf16.mxu0 0
  %4719 = vmatpush1.bf16.msra.mxu0 %v2097
  %4720 = vmatprep.subr.bf16.mxu0 0
  %4721 = vmatpush1.bf16.msra.mxu0 %v2098
  %4722 = vmatprep.subr.bf16.mxu0 0
  %4723 = vmatpush1.bf16.msra.mxu0 %v2099
  %4724 = vmatprep.subr.bf16.mxu0 0
  %4725 = vmatpush1.bf16.msra.mxu0 %v2100
  %4726 = vmatprep.subr.bf16.mxu0 0
  %4727 = vmatpush1.bf16.msra.mxu0 %v2101
  %4728 = vmatprep.subr.bf16.mxu0 0
  %4729 = vmatpush1.bf16.msra.mxu0 %v2102
  %4730 = vmatprep.subr.bf16.mxu0 0
  %4731 = vmatpush1.bf16.msra.mxu0 %v2103
  %4732 = vmatprep.subr.bf16.mxu0 0
  %4733 = vmatpush1.bf16.msra.mxu0 %v2104
  %4734 = vmatprep.subr.bf16.mxu0 0
  %4735 = vmatpush1.bf16.msra.mxu0 %v2105
  %4736 = vmatprep.subr.bf16.mxu0 0
  %4737 = vmatpush1.bf16.msra.mxu0 %v2106
  %4738 = vmatprep.subr.bf16.mxu0 0
  %4739 = vmatpush1.bf16.msra.mxu0 %v2107
  %4740 = vmatprep.subr.bf16.mxu0 0
  %4741 = vmatpush1.bf16.msra.mxu0 %v2108
  %4742 = vmatprep.subr.bf16.mxu0 0
  %4743 = vmatpush1.bf16.msra.mxu0 %v2109
  %4744 = vmatprep.subr.bf16.mxu0 0
  %4745 = vmatpush1.bf16.msra.mxu0 %v2110
  %4746 = vmatprep.mubr.bf16.mxu0 %v3716
  %4747 = vmatmul.mubr.bf16.gmra.mrb[0].mxu0 %v3715
  %v4748 = vpop.f32.mrb[0].mxu0
  %v4749 = vadd.f32 %v4541, %v4748
  %v4750 = vpop.f32.mrb[0].mxu0
  %v4751 = vpop.f32.mrb[0].mxu0
  %v4752 = vadd.f32 %v4544, %v4751
  %v4753 = vpop.f32.mrb[0].mxu0
  %4754 = vmatprep.mubr.bf16.mxu0 %v3733
  %4755 = vmatmul.mubr.bf16.gmra.mrb[0].mxu0 %v3732
  %v4756 = vpop.f32.mrb[0].mxu0
  %v4757 = vadd.f32 %v4549, %v4756
  %v4758 = vpop.f32.mrb[0].mxu0
  %v4759 = vpop.f32.mrb[0].mxu0
  %v4760 = vadd.f32 %v4552, %v4759
  %v4761 = vpop.f32.mrb[0].mxu0
  %4762 = vmatprep.mubr.bf16.mxu0 %v3750
  %4763 = vmatmul.mubr.bf16.gmra.mrb[0].mxu0 %v3749
  %v4764 = vpop.f32.mrb[0].mxu0
  %v4765 = vadd.f32 %v4557, %v4764
  %v4766 = vpop.f32.mrb[0].mxu0
  %v4767 = vpop.f32.mrb[0].mxu0
  %v4768 = vadd.f32 %v4560, %v4767
  %v4769 = vpop.f32.mrb[0].mxu0
  %4770 = vmatprep.mubr.bf16.mxu0 %v3767
  %4771 = vmatmul.mubr.bf16.gmra.mrb[0].mxu0 %v3766
  %v4772 = vpop.f32.mrb[0].mxu0
  %v4773 = vadd.f32 %v4565, %v4772
  %v4774 = vpop.f32.mrb[0].mxu0
  %v4775 = vpop.f32.mrb[0].mxu0
  %v4776 = vadd.f32 %v4568, %v4775
  %v4777 = vpop.f32.mrb[0].mxu0
  %4778 = vmatprep.mubr.bf16.mxu0 %v3784
  %4779 = vmatmul.mubr.bf16.gmra.mrb[0].mxu0 %v3783
  %v4780 = vpop.f32.mrb[0].mxu0
  %v4781 = vadd.f32 %v4573, %v4780
  %v4782 = vpop.f32.mrb[0].mxu0
  %v4783 = vpop.f32.mrb[0].mxu0
  %v4784 = vadd.f32 %v4576, %v4783
  %v4785 = vpop.f32.mrb[0].mxu0
  %4786 = vmatprep.mubr.bf16.mxu0 %v3801
  %4787 = vmatmul.mubr.bf16.gmra.mrb[0].mxu0 %v3800
  %v4788 = vpop.f32.mrb[0].mxu0
  %v4789 = vadd.f32 %v4581, %v4788
  %v4790 = vpop.f32.mrb[0].mxu0
  %v4791 = vpop.f32.mrb[0].mxu0
  %v4792 = vadd.f32 %v4584, %v4791
  %v4793 = vpop.f32.mrb[0].mxu0
  %4794 = vmatprep.mubr.bf16.mxu0 %v3818
  %4795 = vmatmul.mubr.bf16.gmra.mrb[0].mxu0 %v3817
  %v4796 = vpop.f32.mrb[0].mxu0
  %v4797 = vadd.f32 %v4589, %v4796
  %v4798 = vpop.f32.mrb[0].mxu0
  %v4799 = vpop.f32.mrb[0].mxu0
  %v4800 = vadd.f32 %v4592, %v4799
  %v4801 = vpop.f32.mrb[0].mxu0
  %4802 = vmatprep.mubr.bf16.mxu0 %v3835
  %4803 = vmatmul.mubr.bf16.gmra.mrb[0].mxu0 %v3834
  %v4804 = vpop.f32.mrb[0].mxu0
  %v4805 = vadd.f32 %v4597, %v4804
  %v4806 = vpop.f32.mrb[0].mxu0
  %v4807 = vpop.f32.mrb[0].mxu0
  %v4808 = vadd.f32 %v4600, %v4807
  %v4809 = vpop.f32.mrb[0].mxu0
  %4810 = vmatprep.mubr.bf16.mxu0 %v3852
  %4811 = vmatmul.mubr.bf16.gmra.mrb[0].mxu0 %v3851
  %v4812 = vpop.f32.mrb[0].mxu0
  %v4813 = vadd.f32 %v4605, %v4812
  %v4814 = vpop.f32.mrb[0].mxu0
  %v4815 = vpop.f32.mrb[0].mxu0
  %v4816 = vadd.f32 %v4608, %v4815
  %v4817 = vpop.f32.mrb[0].mxu0
  %4818 = vmatprep.mubr.bf16.mxu0 %v3869
  %4819 = vmatmul.mubr.bf16.gmra.mrb[0].mxu0 %v3868
  %v4820 = vpop.f32.mrb[0].mxu0
  %v4821 = vadd.f32 %v4613, %v4820
  %v4822 = vpop.f32.mrb[0].mxu0
  %v4823 = vpop.f32.mrb[0].mxu0
  %v4824 = vadd.f32 %v4616, %v4823
  %v4825 = vpop.f32.mrb[0].mxu0
  %4826 = vmatprep.mubr.bf16.mxu0 %v3886
  %4827 = vmatmul.mubr.bf16.gmra.mrb[0].mxu0 %v3885
  %v4828 = vpop.f32.mrb[0].mxu0
  %v4829 = vadd.f32 %v4621, %v4828
  %v4830 = vpop.f32.mrb[0].mxu0
  %v4831 = vpop.f32.mrb[0].mxu0
  %v4832 = vadd.f32 %v4624, %v4831
  %v4833 = vpop.f32.mrb[0].mxu0
  %4834 = vmatprep.mubr.bf16.mxu0 %v3903
  %4835 = vmatmul.mubr.bf16.gmra.mrb[0].mxu0 %v3902
  %v4836 = vpop.f32.mrb[0].mxu0
  %v4837 = vadd.f32 %v4629, %v4836
  %v4838 = vpop.f32.mrb[0].mxu0
  %v4839 = vpop.f32.mrb[0].mxu0
  %v4840 = vadd.f32 %v4632, %v4839
  %v4841 = vpop.f32.mrb[0].mxu0
  %4842 = vmatprep.mubr.bf16.mxu0 %v3920
  %4843 = vmatmul.mubr.bf16.gmra.mrb[0].mxu0 %v3919
  %v4844 = vpop.f32.mrb[0].mxu0
  %v4845 = vadd.f32 %v4637, %v4844
  %v4846 = vpop.f32.mrb[0].mxu0
  %v4847 = vpop.f32.mrb[0].mxu0
  %v4848 = vadd.f32 %v4640, %v4847
  %v4849 = vpop.f32.mrb[0].mxu0
  %4850 = vmatprep.mubr.bf16.mxu0 %v3937
  %4851 = vmatmul.mubr.bf16.gmra.mrb[0].mxu0 %v3936
  %v4852 = vpop.f32.mrb[0].mxu0
  %v4853 = vadd.f32 %v4645, %v4852
  %v4854 = vpop.f32.mrb[0].mxu0
  %v4855 = vpop.f32.mrb[0].mxu0
  %v4856 = vadd.f32 %v4648, %v4855
  %v4857 = vpop.f32.mrb[0].mxu0
  %4858 = vmatprep.mubr.bf16.mxu0 %v3954
  %4859 = vmatmul.mubr.bf16.gmra.mrb[0].mxu0 %v3953
  %v4860 = vpop.f32.mrb[0].mxu0
  %v4861 = vadd.f32 %v4653, %v4860
  %v4862 = vpop.f32.mrb[0].mxu0
  %v4863 = vpop.f32.mrb[0].mxu0
  %v4864 = vadd.f32 %v4656, %v4863
  %v4865 = vpop.f32.mrb[0].mxu0
  %4866 = vmatprep.mubr.bf16.mxu0 %v3971
  %4867 = vmatmul.mubr.bf16.gmra.mrb[0].mxu0 %v3970
  %v4868 = vpop.f32.mrb[0].mxu0
  %v4869 = vadd.f32 %v4661, %v4868
  %v4870 = vpop.f32.mrb[0].mxu0
  %v4871 = vpop.f32.mrb[0].mxu0
  %v4872 = vadd.f32 %v4664, %v4871
  %v4873 = vpop.f32.mrb[0].mxu0
  %4874 = vmatprep.mubr.bf16.mxu0 %v3988
  %4875 = vmatmul.mubr.bf16.gmra.mrb[0].mxu0 %v3987
  %v4876 = vpop.f32.mrb[0].mxu0
  %v4877 = vadd.f32 %v4669, %v4876
  %v4878 = vpop.f32.mrb[0].mxu0
  %v4879 = vpop.f32.mrb[0].mxu0
  %v4880 = vadd.f32 %v4672, %v4879
  %v4881 = vpop.f32.mrb[0].mxu0
  %4882 = vmatprep.mubr.bf16.mxu0 %v4005
  %4883 = vmatmul.mubr.bf16.gmra.mrb[0].mxu0 %v4004
  %v4884 = vpop.f32.mrb[0].mxu0
  %v4885 = vadd.f32 %v4677, %v4884
  %v4886 = vpop.f32.mrb[0].mxu0
  %v4887 = vpop.f32.mrb[0].mxu0
  %v4888 = vadd.f32 %v4680, %v4887
  %v4889 = vpop.f32.mrb[0].mxu0
  %4890 = vmatprep.mubr.bf16.mxu0 %v4022
  %4891 = vmatmul.mubr.bf16.gmra.mrb[0].mxu0 %v4021
  %v4892 = vpop.f32.mrb[0].mxu0
  %v4893 = vadd.f32 %v4685, %v4892
  %v4894 = vpop.f32.mrb[0].mxu0
  %v4895 = vpop.f32.mrb[0].mxu0
  %v4896 = vadd.f32 %v4688, %v4895
  %v4897 = vpop.f32.mrb[0].mxu0
  %4898 = vmatprep.mubr.bf16.mxu0 %v4039
  %4899 = vmatmul.mubr.bf16.gmra.mrb[0].mxu0 %v4038
  %v4900 = vpop.f32.mrb[0].mxu0
  %v4901 = vadd.f32 %v4693, %v4900
  %v4902 = vpop.f32.mrb[0].mxu0
  %v4903 = vpop.f32.mrb[0].mxu0
  %v4904 = vadd.f32 %v4696, %v4903
  %v4905 = vpop.f32.mrb[0].mxu0
  %4906 = vmatprep.mubr.bf16.mxu0 %v4056
  %4907 = vmatmul.mubr.bf16.gmra.mrb[0].mxu0 %v4055
  %v4908 = vpop.f32.mrb[0].mxu0
  %v4909 = vadd.f32 %v4701, %v4908
  %v4910 = vpop.f32.mrb[0].mxu0
  %v4911 = vpop.f32.mrb[0].mxu0
  %v4912 = vadd.f32 %v4704, %v4911
  %v4913 = vpop.f32.mrb[0].mxu0
  %4914 = vmatprep.mubr.bf16.mxu0 %v4073
  %4915 = vmatmul.mubr.bf16.gmra.mrb[0].mxu0 %v4072
  %v4916 = vpop.f32.mrb[0].mxu0
  %v4917 = vadd.f32 %v4709, %v4916
  %v4918 = vpop.f32.mrb[0].mxu0
  %v4919 = vpop.f32.mrb[0].mxu0
  %v4920 = vpop.f32.mrb[0].mxu0
  %4921 = vdwg.mxu0
  %4922 = vmatprep.subr.bf16.mxu0 0
  %4923 = vmatpush1.bf16.msra.mxu0 %v2111
  %4924 = vmatprep.subr.bf16.mxu0 0
  %4925 = vmatpush1.bf16.msra.mxu0 %v2112
  %4926 = vmatprep.subr.bf16.mxu0 0
  %4927 = vmatpush1.bf16.msra.mxu0 %v2113
  %4928 = vmatprep.subr.bf16.mxu0 0
  %4929 = vmatpush1.bf16.msra.mxu0 %v2114
  %4930 = vmatprep.subr.bf16.mxu0 0
  %4931 = vmatpush1.bf16.msra.mxu0 %v2115
  %4932 = vmatprep.subr.bf16.mxu0 0
  %4933 = vmatpush1.bf16.msra.mxu0 %v2116
  %4934 = vmatprep.subr.bf16.mxu0 0
  %4935 = vmatpush1.bf16.msra.mxu0 %v2117
  %4936 = vmatprep.subr.bf16.mxu0 0
  %4937 = vmatpush1.bf16.msra.mxu0 %v2118
  %4938 = vmatprep.subr.bf16.mxu0 0
  %4939 = vmatpush1.bf16.msra.mxu0 %v2119
  %4940 = vmatprep.subr.bf16.mxu0 0
  %4941 = vmatpush1.bf16.msra.mxu0 %v2120
  %4942 = vmatprep.subr.bf16.mxu0 0
  %4943 = vmatpush1.bf16.msra.mxu0 %v2121
  %4944 = vmatprep.subr.bf16.mxu0 0
  %4945 = vmatpush1.bf16.msra.mxu0 %v2122
  %4946 = vmatprep.subr.bf16.mxu0 0
  %4947 = vmatpush1.bf16.msra.mxu0 %v2123
  %4948 = vmatprep.subr.bf16.mxu0 0
  %4949 = vmatpush1.bf16.msra.mxu0 %v2124
  %4950 = vmatprep.subr.bf16.mxu0 0
  %4951 = vmatpush1.bf16.msra.mxu0 %v2125
  %4952 = vmatprep.subr.bf16.mxu0 0
  %4953 = vmatpush1.bf16.msra.mxu0 %v2126
  %4954 = vmatprep.mubr.bf16.mxu0 %v3718
  %4955 = vmatmul.mubr.bf16.gmra.mrb[0].mxu0 %v3717
  %v4956 = vpop.f32.mrb[0].mxu0
  %v4957 = vadd.f32 %v4749, %v4956
  %v4958 = vpop.f32.mrb[0].mxu0
  %v4959 = vpop.f32.mrb[0].mxu0
  %v4960 = vadd.f32 %v4752, %v4959
  %v4961 = vpop.f32.mrb[0].mxu0
  %4962 = vmatprep.mubr.bf16.mxu0 %v3735
  %4963 = vmatmul.mubr.bf16.gmra.mrb[0].mxu0 %v3734
  %v4964 = vpop.f32.mrb[0].mxu0
  %v4965 = vadd.f32 %v4757, %v4964
  %v4966 = vpop.f32.mrb[0].mxu0
  %v4967 = vpop.f32.mrb[0].mxu0
  %v4968 = vadd.f32 %v4760, %v4967
  %v4969 = vpop.f32.mrb[0].mxu0
  %4970 = vmatprep.mubr.bf16.mxu0 %v3752
  %4971 = vmatmul.mubr.bf16.gmra.mrb[0].mxu0 %v3751
  %v4972 = vpop.f32.mrb[0].mxu0
  %v4973 = vadd.f32 %v4765, %v4972
  %v4974 = vpop.f32.mrb[0].mxu0
  %v4975 = vpop.f32.mrb[0].mxu0
  %v4976 = vadd.f32 %v4768, %v4975
  %v4977 = vpop.f32.mrb[0].mxu0
  %4978 = vmatprep.mubr.bf16.mxu0 %v3769
  %4979 = vmatmul.mubr.bf16.gmra.mrb[0].mxu0 %v3768
  %v4980 = vpop.f32.mrb[0].mxu0
  %v4981 = vadd.f32 %v4773, %v4980
  %v4982 = vpop.f32.mrb[0].mxu0
  %v4983 = vpop.f32.mrb[0].mxu0
  %v4984 = vadd.f32 %v4776, %v4983
  %v4985 = vpop.f32.mrb[0].mxu0
  %4986 = vmatprep.mubr.bf16.mxu0 %v3786
  %4987 = vmatmul.mubr.bf16.gmra.mrb[0].mxu0 %v3785
  %v4988 = vpop.f32.mrb[0].mxu0
  %v4989 = vadd.f32 %v4781, %v4988
  %v4990 = vpop.f32.mrb[0].mxu0
  %v4991 = vpop.f32.mrb[0].mxu0
  %v4992 = vadd.f32 %v4784, %v4991
  %v4993 = vpop.f32.mrb[0].mxu0
  %4994 = vmatprep.mubr.bf16.mxu0 %v3803
  %4995 = vmatmul.mubr.bf16.gmra.mrb[0].mxu0 %v3802
  %v4996 = vpop.f32.mrb[0].mxu0
  %v4997 = vadd.f32 %v4789, %v4996
  %v4998 = vpop.f32.mrb[0].mxu0
  %v4999 = vpop.f32.mrb[0].mxu0
  %v5000 = vadd.f32 %v4792, %v4999
  %v5001 = vpop.f32.mrb[0].mxu0
  %5002 = vmatprep.mubr.bf16.mxu0 %v3820
  %5003 = vmatmul.mubr.bf16.gmra.mrb[0].mxu0 %v3819
  %v5004 = vpop.f32.mrb[0].mxu0
  %v5005 = vadd.f32 %v4797, %v5004
  %v5006 = vpop.f32.mrb[0].mxu0
  %v5007 = vpop.f32.mrb[0].mxu0
  %v5008 = vadd.f32 %v4800, %v5007
  %v5009 = vpop.f32.mrb[0].mxu0
  %5010 = vmatprep.mubr.bf16.mxu0 %v3837
  %5011 = vmatmul.mubr.bf16.gmra.mrb[0].mxu0 %v3836
  %v5012 = vpop.f32.mrb[0].mxu0
  %v5013 = vadd.f32 %v4805, %v5012
  %v5014 = vpop.f32.mrb[0].mxu0
  %v5015 = vpop.f32.mrb[0].mxu0
  %v5016 = vadd.f32 %v4808, %v5015
  %v5017 = vpop.f32.mrb[0].mxu0
  %5018 = vmatprep.mubr.bf16.mxu0 %v3854
  %5019 = vmatmul.mubr.bf16.gmra.mrb[0].mxu0 %v3853
  %v5020 = vpop.f32.mrb[0].mxu0
  %v5021 = vadd.f32 %v4813, %v5020
  %v5022 = vpop.f32.mrb[0].mxu0
  %v5023 = vpop.f32.mrb[0].mxu0
  %v5024 = vadd.f32 %v4816, %v5023
  %v5025 = vpop.f32.mrb[0].mxu0
  %5026 = vmatprep.mubr.bf16.mxu0 %v3871
  %5027 = vmatmul.mubr.bf16.gmra.mrb[0].mxu0 %v3870
  %v5028 = vpop.f32.mrb[0].mxu0
  %v5029 = vadd.f32 %v4821, %v5028
  %v5030 = vpop.f32.mrb[0].mxu0
  %v5031 = vpop.f32.mrb[0].mxu0
  %v5032 = vadd.f32 %v4824, %v5031
  %v5033 = vpop.f32.mrb[0].mxu0
  %5034 = vmatprep.mubr.bf16.mxu0 %v3888
  %5035 = vmatmul.mubr.bf16.gmra.mrb[0].mxu0 %v3887
  %v5036 = vpop.f32.mrb[0].mxu0
  %v5037 = vadd.f32 %v4829, %v5036
  %v5038 = vpop.f32.mrb[0].mxu0
  %v5039 = vpop.f32.mrb[0].mxu0
  %v5040 = vadd.f32 %v4832, %v5039
  %v5041 = vpop.f32.mrb[0].mxu0
  %5042 = vmatprep.mubr.bf16.mxu0 %v3905
  %5043 = vmatmul.mubr.bf16.gmra.mrb[0].mxu0 %v3904
  %v5044 = vpop.f32.mrb[0].mxu0
  %v5045 = vadd.f32 %v4837, %v5044
  %v5046 = vpop.f32.mrb[0].mxu0
  %v5047 = vpop.f32.mrb[0].mxu0
  %v5048 = vadd.f32 %v4840, %v5047
  %v5049 = vpop.f32.mrb[0].mxu0
  %5050 = vmatprep.mubr.bf16.mxu0 %v3922
  %5051 = vmatmul.mubr.bf16.gmra.mrb[0].mxu0 %v3921
  %v5052 = vpop.f32.mrb[0].mxu0
  %v5053 = vadd.f32 %v4845, %v5052
  %v5054 = vpop.f32.mrb[0].mxu0
  %v5055 = vpop.f32.mrb[0].mxu0
  %v5056 = vadd.f32 %v4848, %v5055
  %v5057 = vpop.f32.mrb[0].mxu0
  %5058 = vmatprep.mubr.bf16.mxu0 %v3939
  %5059 = vmatmul.mubr.bf16.gmra.mrb[0].mxu0 %v3938
  %v5060 = vpop.f32.mrb[0].mxu0
  %v5061 = vadd.f32 %v4853, %v5060
  %v5062 = vpop.f32.mrb[0].mxu0
  %v5063 = vpop.f32.mrb[0].mxu0
  %v5064 = vadd.f32 %v4856, %v5063
  %v5065 = vpop.f32.mrb[0].mxu0
  %5066 = vmatprep.mubr.bf16.mxu0 %v3956
  %5067 = vmatmul.mubr.bf16.gmra.mrb[0].mxu0 %v3955
  %v5068 = vpop.f32.mrb[0].mxu0
  %v5069 = vadd.f32 %v4861, %v5068
  %v5070 = vpop.f32.mrb[0].mxu0
  %v5071 = vpop.f32.mrb[0].mxu0
  %v5072 = vadd.f32 %v4864, %v5071
  %v5073 = vpop.f32.mrb[0].mxu0
  %5074 = vmatprep.mubr.bf16.mxu0 %v3973
  %5075 = vmatmul.mubr.bf16.gmra.mrb[0].mxu0 %v3972
  %v5076 = vpop.f32.mrb[0].mxu0
  %v5077 = vadd.f32 %v4869, %v5076
  %v5078 = vpop.f32.mrb[0].mxu0
  %v5079 = vpop.f32.mrb[0].mxu0
  %v5080 = vadd.f32 %v4872, %v5079
  %v5081 = vpop.f32.mrb[0].mxu0
  %5082 = vmatprep.mubr.bf16.mxu0 %v3990
  %5083 = vmatmul.mubr.bf16.gmra.mrb[0].mxu0 %v3989
  %v5084 = vpop.f32.mrb[0].mxu0
  %v5085 = vadd.f32 %v4877, %v5084
  %v5086 = vpop.f32.mrb[0].mxu0
  %v5087 = vpop.f32.mrb[0].mxu0
  %v5088 = vadd.f32 %v4880, %v5087
  %v5089 = vpop.f32.mrb[0].mxu0
  %5090 = vmatprep.mubr.bf16.mxu0 %v4007
  %5091 = vmatmul.mubr.bf16.gmra.mrb[0].mxu0 %v4006
  %v5092 = vpop.f32.mrb[0].mxu0
  %v5093 = vadd.f32 %v4885, %v5092
  %v5094 = vpop.f32.mrb[0].mxu0
  %v5095 = vpop.f32.mrb[0].mxu0
  %v5096 = vadd.f32 %v4888, %v5095
  %v5097 = vpop.f32.mrb[0].mxu0
  %5098 = vmatprep.mubr.bf16.mxu0 %v4024
  %5099 = vmatmul.mubr.bf16.gmra.mrb[0].mxu0 %v4023
  %v5100 = vpop.f32.mrb[0].mxu0
  %v5101 = vadd.f32 %v4893, %v5100
  %v5102 = vpop.f32.mrb[0].mxu0
  %v5103 = vpop.f32.mrb[0].mxu0
  %v5104 = vadd.f32 %v4896, %v5103
  %v5105 = vpop.f32.mrb[0].mxu0
  %5106 = vmatprep.mubr.bf16.mxu0 %v4041
  %5107 = vmatmul.mubr.bf16.gmra.mrb[0].mxu0 %v4040
  %v5108 = vpop.f32.mrb[0].mxu0
  %v5109 = vadd.f32 %v4901, %v5108
  %v5110 = vpop.f32.mrb[0].mxu0
  %v5111 = vpop.f32.mrb[0].mxu0
  %v5112 = vadd.f32 %v4904, %v5111
  %v5113 = vpop.f32.mrb[0].mxu0
  %5114 = vmatprep.mubr.bf16.mxu0 %v4058
  %5115 = vmatmul.mubr.bf16.gmra.mrb[0].mxu0 %v4057
  %v5116 = vpop.f32.mrb[0].mxu0
  %v5117 = vadd.f32 %v4909, %v5116
  %v5118 = vpop.f32.mrb[0].mxu0
  %v5119 = vpop.f32.mrb[0].mxu0
  %v5120 = vadd.f32 %v4912, %v5119
  %v5121 = vpop.f32.mrb[0].mxu0
  %5122 = vmatprep.mubr.bf16.mxu0 %v4075
  %5123 = vmatmul.mubr.bf16.gmra.mrb[0].mxu0 %v4074
  %v5124 = vpop.f32.mrb[0].mxu0
  %v5125 = vadd.f32 %v4917, %v5124
  %v5126 = vpop.f32.mrb[0].mxu0
  %v5127 = vpop.f32.mrb[0].mxu0
  %v5128 = vpop.f32.mrb[0].mxu0
  %5129 = vdwg.mxu0
  %5130 = vmatprep.subr.bf16.mxu0 0
  %5131 = vmatpush1.bf16.msra.mxu0 %v2127
  %5132 = vmatprep.subr.bf16.mxu0 0
  %5133 = vmatpush1.bf16.msra.mxu0 %v2128
  %5134 = vmatprep.subr.bf16.mxu0 0
  %5135 = vmatpush1.bf16.msra.mxu0 %v2129
  %5136 = vmatprep.subr.bf16.mxu0 0
  %5137 = vmatpush1.bf16.msra.mxu0 %v2130
  %5138 = vmatprep.subr.bf16.mxu0 0
  %5139 = vmatpush1.bf16.msra.mxu0 %v2131
  %5140 = vmatprep.subr.bf16.mxu0 0
  %5141 = vmatpush1.bf16.msra.mxu0 %v2132
  %5142 = vmatprep.subr.bf16.mxu0 0
  %5143 = vmatpush1.bf16.msra.mxu0 %v2133
  %5144 = vmatprep.subr.bf16.mxu0 0
  %5145 = vmatpush1.bf16.msra.mxu0 %v2134
  %5146 = vmatprep.subr.bf16.mxu0 0
  %5147 = vmatpush1.bf16.msra.mxu0 %v2135
  %5148 = vmatprep.subr.bf16.mxu0 0
  %5149 = vmatpush1.bf16.msra.mxu0 %v2136
  %5150 = vmatprep.subr.bf16.mxu0 0
  %5151 = vmatpush1.bf16.msra.mxu0 %v2137
  %5152 = vmatprep.subr.bf16.mxu0 0
  %5153 = vmatpush1.bf16.msra.mxu0 %v2138
  %5154 = vmatprep.subr.bf16.mxu0 0
  %5155 = vmatpush1.bf16.msra.mxu0 %v2139
  %5156 = vmatprep.subr.bf16.mxu0 0
  %5157 = vmatpush1.bf16.msra.mxu0 %v2140
  %5158 = vmatprep.subr.bf16.mxu0 0
  %5159 = vmatpush1.bf16.msra.mxu0 %v2141
  %5160 = vmatprep.subr.bf16.mxu0 0
  %5161 = vmatpush1.bf16.msra.mxu0 %v2142
  %5162 = vmatprep.mubr.bf16.mxu0 %v3720
  %5163 = vmatmul.mubr.bf16.gmra.mrb[0].mxu0 %v3719
  %v5164 = vpop.f32.mrb[0].mxu0
  %v5165 = vadd.f32 %v4957, %v5164
  %v5166 = vpop.f32.mrb[0].mxu0
  %v5167 = vpop.f32.mrb[0].mxu0
  %v5168 = vadd.f32 %v4960, %v5167
  %v5169 = vpop.f32.mrb[0].mxu0
  %5170 = vmatprep.mubr.bf16.mxu0 %v3737
  %5171 = vmatmul.mubr.bf16.gmra.mrb[0].mxu0 %v3736
  %v5172 = vpop.f32.mrb[0].mxu0
  %v5173 = vadd.f32 %v4965, %v5172
  %v5174 = vpop.f32.mrb[0].mxu0
  %v5175 = vpop.f32.mrb[0].mxu0
  %v5176 = vadd.f32 %v4968, %v5175
  %v5177 = vpop.f32.mrb[0].mxu0
  %5178 = vmatprep.mubr.bf16.mxu0 %v3754
  %5179 = vmatmul.mubr.bf16.gmra.mrb[0].mxu0 %v3753
  %v5180 = vpop.f32.mrb[0].mxu0
  %v5181 = vadd.f32 %v4973, %v5180
  %v5182 = vpop.f32.mrb[0].mxu0
  %v5183 = vpop.f32.mrb[0].mxu0
  %v5184 = vadd.f32 %v4976, %v5183
  %v5185 = vpop.f32.mrb[0].mxu0
  %5186 = vmatprep.mubr.bf16.mxu0 %v3771
  %5187 = vmatmul.mubr.bf16.gmra.mrb[0].mxu0 %v3770
  %v5188 = vpop.f32.mrb[0].mxu0
  %v5189 = vadd.f32 %v4981, %v5188
  %v5190 = vpop.f32.mrb[0].mxu0
  %v5191 = vpop.f32.mrb[0].mxu0
  %v5192 = vadd.f32 %v4984, %v5191
  %v5193 = vpop.f32.mrb[0].mxu0
  %5194 = vmatprep.mubr.bf16.mxu0 %v3788
  %5195 = vmatmul.mubr.bf16.gmra.mrb[0].mxu0 %v3787
  %v5196 = vpop.f32.mrb[0].mxu0
  %v5197 = vadd.f32 %v4989, %v5196
  %v5198 = vpop.f32.mrb[0].mxu0
  %v5199 = vpop.f32.mrb[0].mxu0
  %v5200 = vadd.f32 %v4992, %v5199
  %v5201 = vpop.f32.mrb[0].mxu0
  %5202 = vmatprep.mubr.bf16.mxu0 %v3805
  %5203 = vmatmul.mubr.bf16.gmra.mrb[0].mxu0 %v3804
  %v5204 = vpop.f32.mrb[0].mxu0
  %v5205 = vadd.f32 %v4997, %v5204
  %v5206 = vpop.f32.mrb[0].mxu0
  %v5207 = vpop.f32.mrb[0].mxu0
  %v5208 = vadd.f32 %v5000, %v5207
  %v5209 = vpop.f32.mrb[0].mxu0
  %5210 = vmatprep.mubr.bf16.mxu0 %v3822
  %5211 = vmatmul.mubr.bf16.gmra.mrb[0].mxu0 %v3821
  %v5212 = vpop.f32.mrb[0].mxu0
  %v5213 = vadd.f32 %v5005, %v5212
  %v5214 = vpop.f32.mrb[0].mxu0
  %v5215 = vpop.f32.mrb[0].mxu0
  %v5216 = vadd.f32 %v5008, %v5215
  %v5217 = vpop.f32.mrb[0].mxu0
  %5218 = vmatprep.mubr.bf16.mxu0 %v3839
  %5219 = vmatmul.mubr.bf16.gmra.mrb[0].mxu0 %v3838
  %v5220 = vpop.f32.mrb[0].mxu0
  %v5221 = vadd.f32 %v5013, %v5220
  %v5222 = vpop.f32.mrb[0].mxu0
  %v5223 = vpop.f32.mrb[0].mxu0
  %v5224 = vadd.f32 %v5016, %v5223
  %v5225 = vpop.f32.mrb[0].mxu0
  %5226 = vmatprep.mubr.bf16.mxu0 %v3856
  %5227 = vmatmul.mubr.bf16.gmra.mrb[0].mxu0 %v3855
  %v5228 = vpop.f32.mrb[0].mxu0
  %v5229 = vadd.f32 %v5021, %v5228
  %v5230 = vpop.f32.mrb[0].mxu0
  %v5231 = vpop.f32.mrb[0].mxu0
  %v5232 = vadd.f32 %v5024, %v5231
  %v5233 = vpop.f32.mrb[0].mxu0
  %5234 = vmatprep.mubr.bf16.mxu0 %v3873
  %5235 = vmatmul.mubr.bf16.gmra.mrb[0].mxu0 %v3872
  %v5236 = vpop.f32.mrb[0].mxu0
  %v5237 = vadd.f32 %v5029, %v5236
  %v5238 = vpop.f32.mrb[0].mxu0
  %v5239 = vpop.f32.mrb[0].mxu0
  %v5240 = vadd.f32 %v5032, %v5239
  %v5241 = vpop.f32.mrb[0].mxu0
  %5242 = vmatprep.mubr.bf16.mxu0 %v3890
  %5243 = vmatmul.mubr.bf16.gmra.mrb[0].mxu0 %v3889
  %v5244 = vpop.f32.mrb[0].mxu0
  %v5245 = vadd.f32 %v5037, %v5244
  %v5246 = vpop.f32.mrb[0].mxu0
  %v5247 = vpop.f32.mrb[0].mxu0
  %v5248 = vadd.f32 %v5040, %v5247
  %v5249 = vpop.f32.mrb[0].mxu0
  %5250 = vmatprep.mubr.bf16.mxu0 %v3907
  %5251 = vmatmul.mubr.bf16.gmra.mrb[0].mxu0 %v3906
  %v5252 = vpop.f32.mrb[0].mxu0
  %v5253 = vadd.f32 %v5045, %v5252
  %v5254 = vpop.f32.mrb[0].mxu0
  %v5255 = vpop.f32.mrb[0].mxu0
  %v5256 = vadd.f32 %v5048, %v5255
  %v5257 = vpop.f32.mrb[0].mxu0
  %5258 = vmatprep.mubr.bf16.mxu0 %v3924
  %5259 = vmatmul.mubr.bf16.gmra.mrb[0].mxu0 %v3923
  %v5260 = vpop.f32.mrb[0].mxu0
  %v5261 = vadd.f32 %v5053, %v5260
  %v5262 = vpop.f32.mrb[0].mxu0
  %v5263 = vpop.f32.mrb[0].mxu0
  %v5264 = vadd.f32 %v5056, %v5263
  %v5265 = vpop.f32.mrb[0].mxu0
  %5266 = vmatprep.mubr.bf16.mxu0 %v3941
  %5267 = vmatmul.mubr.bf16.gmra.mrb[0].mxu0 %v3940
  %v5268 = vpop.f32.mrb[0].mxu0
  %v5269 = vadd.f32 %v5061, %v5268
  %v5270 = vpop.f32.mrb[0].mxu0
  %v5271 = vpop.f32.mrb[0].mxu0
  %v5272 = vadd.f32 %v5064, %v5271
  %v5273 = vpop.f32.mrb[0].mxu0
  %5274 = vmatprep.mubr.bf16.mxu0 %v3958
  %5275 = vmatmul.mubr.bf16.gmra.mrb[0].mxu0 %v3957
  %v5276 = vpop.f32.mrb[0].mxu0
  %v5277 = vadd.f32 %v5069, %v5276
  %v5278 = vpop.f32.mrb[0].mxu0
  %v5279 = vpop.f32.mrb[0].mxu0
  %v5280 = vadd.f32 %v5072, %v5279
  %v5281 = vpop.f32.mrb[0].mxu0
  %5282 = vmatprep.mubr.bf16.mxu0 %v3975
  %5283 = vmatmul.mubr.bf16.gmra.mrb[0].mxu0 %v3974
  %v5284 = vpop.f32.mrb[0].mxu0
  %v5285 = vadd.f32 %v5077, %v5284
  %v5286 = vpop.f32.mrb[0].mxu0
  %v5287 = vpop.f32.mrb[0].mxu0
  %v5288 = vadd.f32 %v5080, %v5287
  %v5289 = vpop.f32.mrb[0].mxu0
  %5290 = vmatprep.mubr.bf16.mxu0 %v3992
  %5291 = vmatmul.mubr.bf16.gmra.mrb[0].mxu0 %v3991
  %v5292 = vpop.f32.mrb[0].mxu0
  %v5293 = vadd.f32 %v5085, %v5292
  %v5294 = vpop.f32.mrb[0].mxu0
  %v5295 = vpop.f32.mrb[0].mxu0
  %v5296 = vadd.f32 %v5088, %v5295
  %v5297 = vpop.f32.mrb[0].mxu0
  %5298 = vmatprep.mubr.bf16.mxu0 %v4009
  %5299 = vmatmul.mubr.bf16.gmra.mrb[0].mxu0 %v4008
  %v5300 = vpop.f32.mrb[0].mxu0
  %v5301 = vadd.f32 %v5093, %v5300
  %v5302 = vpop.f32.mrb[0].mxu0
  %v5303 = vpop.f32.mrb[0].mxu0
  %v5304 = vadd.f32 %v5096, %v5303
  %v5305 = vpop.f32.mrb[0].mxu0
  %5306 = vmatprep.mubr.bf16.mxu0 %v4026
  %5307 = vmatmul.mubr.bf16.gmra.mrb[0].mxu0 %v4025
  %v5308 = vpop.f32.mrb[0].mxu0
  %v5309 = vadd.f32 %v5101, %v5308
  %v5310 = vpop.f32.mrb[0].mxu0
  %v5311 = vpop.f32.mrb[0].mxu0
  %v5312 = vadd.f32 %v5104, %v5311
  %v5313 = vpop.f32.mrb[0].mxu0
  %5314 = vmatprep.mubr.bf16.mxu0 %v4043
  %5315 = vmatmul.mubr.bf16.gmra.mrb[0].mxu0 %v4042
  %v5316 = vpop.f32.mrb[0].mxu0
  %v5317 = vadd.f32 %v5109, %v5316
  %v5318 = vpop.f32.mrb[0].mxu0
  %v5319 = vpop.f32.mrb[0].mxu0
  %v5320 = vadd.f32 %v5112, %v5319
  %v5321 = vpop.f32.mrb[0].mxu0
  %5322 = vmatprep.mubr.bf16.mxu0 %v4060
  %5323 = vmatmul.mubr.bf16.gmra.mrb[0].mxu0 %v4059
  %v5324 = vpop.f32.mrb[0].mxu0
  %v5325 = vadd.f32 %v5117, %v5324
  %v5326 = vpop.f32.mrb[0].mxu0
  %v5327 = vpop.f32.mrb[0].mxu0
  %v5328 = vadd.f32 %v5120, %v5327
  %v5329 = vpop.f32.mrb[0].mxu0
  %5330 = vmatprep.mubr.bf16.mxu0 %v4077
  %5331 = vmatmul.mubr.bf16.gmra.mrb[0].mxu0 %v4076
  %v5332 = vpop.f32.mrb[0].mxu0
  %v5333 = vadd.f32 %v5125, %v5332
  %v5334 = vpop.f32.mrb[0].mxu0
  %v5335 = vpop.f32.mrb[0].mxu0
  %v5336 = vpop.f32.mrb[0].mxu0
  %5337 = vdwg.mxu0
  %5338 = vmatprep.subr.bf16.mxu0 0
  %5339 = vmatpush1.bf16.msra.mxu0 %v2143
  %5340 = vmatprep.subr.bf16.mxu0 0
  %5341 = vmatpush1.bf16.msra.mxu0 %v2144
  %5342 = vmatprep.subr.bf16.mxu0 0
  %5343 = vmatpush1.bf16.msra.mxu0 %v2145
  %5344 = vmatprep.subr.bf16.mxu0 0
  %5345 = vmatpush1.bf16.msra.mxu0 %v2146
  %5346 = vmatprep.subr.bf16.mxu0 0
  %5347 = vmatpush1.bf16.msra.mxu0 %v2147
  %5348 = vmatprep.subr.bf16.mxu0 0
  %5349 = vmatpush1.bf16.msra.mxu0 %v2148
  %5350 = vmatprep.subr.bf16.mxu0 0
  %5351 = vmatpush1.bf16.msra.mxu0 %v2149
  %5352 = vmatprep.subr.bf16.mxu0 0
  %5353 = vmatpush1.bf16.msra.mxu0 %v2150
  %5354 = vmatprep.subr.bf16.mxu0 0
  %5355 = vmatpush1.bf16.msra.mxu0 %v2151
  %5356 = vmatprep.subr.bf16.mxu0 0
  %5357 = vmatpush1.bf16.msra.mxu0 %v2152
  %5358 = vmatprep.subr.bf16.mxu0 0
  %5359 = vmatpush1.bf16.msra.mxu0 %v2153
  %5360 = vmatprep.subr.bf16.mxu0 0
  %5361 = vmatpush1.bf16.msra.mxu0 %v2154
  %5362 = vmatprep.subr.bf16.mxu0 0
  %5363 = vmatpush1.bf16.msra.mxu0 %v2155
  %5364 = vmatprep.subr.bf16.mxu0 0
  %5365 = vmatpush1.bf16.msra.mxu0 %v2156
  %5366 = vmatprep.subr.bf16.mxu0 0
  %5367 = vmatpush1.bf16.msra.mxu0 %v2157
  %5368 = vmatprep.subr.bf16.mxu0 0
  %5369 = vmatpush1.bf16.msra.mxu0 %v2158
  %5370 = vmatprep.mubr.bf16.mxu0 %v3722
  %5371 = vmatmul.mubr.bf16.gmra.mrb[0].mxu0 %v3721
  %v5372 = vpop.f32.mrb[0].mxu0
  %v5373 = vadd.f32 %v5165, %v5372
  %v5374 = vpop.f32.mrb[0].mxu0
  %v5375 = vpop.f32.mrb[0].mxu0
  %v5376 = vadd.f32 %v5168, %v5375
  %v5377 = vpop.f32.mrb[0].mxu0
  %5378 = vmatprep.mubr.bf16.mxu0 %v3739
  %5379 = vmatmul.mubr.bf16.gmra.mrb[0].mxu0 %v3738
  %v5380 = vpop.f32.mrb[0].mxu0
  %v5381 = vadd.f32 %v5173, %v5380
  %v5382 = vpop.f32.mrb[0].mxu0
  %v5383 = vpop.f32.mrb[0].mxu0
  %v5384 = vadd.f32 %v5176, %v5383
  %v5385 = vpop.f32.mrb[0].mxu0
  %5386 = vmatprep.mubr.bf16.mxu0 %v3756
  %5387 = vmatmul.mubr.bf16.gmra.mrb[0].mxu0 %v3755
  %v5388 = vpop.f32.mrb[0].mxu0
  %v5389 = vadd.f32 %v5181, %v5388
  %v5390 = vpop.f32.mrb[0].mxu0
  %v5391 = vpop.f32.mrb[0].mxu0
  %v5392 = vadd.f32 %v5184, %v5391
  %v5393 = vpop.f32.mrb[0].mxu0
  %5394 = vmatprep.mubr.bf16.mxu0 %v3773
  %5395 = vmatmul.mubr.bf16.gmra.mrb[0].mxu0 %v3772
  %v5396 = vpop.f32.mrb[0].mxu0
  %v5397 = vadd.f32 %v5189, %v5396
  %v5398 = vpop.f32.mrb[0].mxu0
  %v5399 = vpop.f32.mrb[0].mxu0
  %v5400 = vadd.f32 %v5192, %v5399
  %v5401 = vpop.f32.mrb[0].mxu0
  %5402 = vmatprep.mubr.bf16.mxu0 %v3790
  %5403 = vmatmul.mubr.bf16.gmra.mrb[0].mxu0 %v3789
  %v5404 = vpop.f32.mrb[0].mxu0
  %v5405 = vadd.f32 %v5197, %v5404
  %v5406 = vpop.f32.mrb[0].mxu0
  %v5407 = vpop.f32.mrb[0].mxu0
  %v5408 = vadd.f32 %v5200, %v5407
  %v5409 = vpop.f32.mrb[0].mxu0
  %5410 = vmatprep.mubr.bf16.mxu0 %v3807
  %5411 = vmatmul.mubr.bf16.gmra.mrb[0].mxu0 %v3806
  %v5412 = vpop.f32.mrb[0].mxu0
  %v5413 = vadd.f32 %v5205, %v5412
  %v5414 = vpop.f32.mrb[0].mxu0
  %v5415 = vpop.f32.mrb[0].mxu0
  %v5416 = vadd.f32 %v5208, %v5415
  %v5417 = vpop.f32.mrb[0].mxu0
  %5418 = vmatprep.mubr.bf16.mxu0 %v3824
  %5419 = vmatmul.mubr.bf16.gmra.mrb[0].mxu0 %v3823
  %v5420 = vpop.f32.mrb[0].mxu0
  %v5421 = vadd.f32 %v5213, %v5420
  %v5422 = vpop.f32.mrb[0].mxu0
  %v5423 = vpop.f32.mrb[0].mxu0
  %v5424 = vadd.f32 %v5216, %v5423
  %v5425 = vpop.f32.mrb[0].mxu0
  %5426 = vmatprep.mubr.bf16.mxu0 %v3841
  %5427 = vmatmul.mubr.bf16.gmra.mrb[0].mxu0 %v3840
  %v5428 = vpop.f32.mrb[0].mxu0
  %v5429 = vadd.f32 %v5221, %v5428
  %v5430 = vpop.f32.mrb[0].mxu0
  %v5431 = vpop.f32.mrb[0].mxu0
  %v5432 = vadd.f32 %v5224, %v5431
  %v5433 = vpop.f32.mrb[0].mxu0
  %5434 = vmatprep.mubr.bf16.mxu0 %v3858
  %5435 = vmatmul.mubr.bf16.gmra.mrb[0].mxu0 %v3857
  %v5436 = vpop.f32.mrb[0].mxu0
  %v5437 = vadd.f32 %v5229, %v5436
  %v5438 = vpop.f32.mrb[0].mxu0
  %v5439 = vpop.f32.mrb[0].mxu0
  %v5440 = vadd.f32 %v5232, %v5439
  %v5441 = vpop.f32.mrb[0].mxu0
  %5442 = vmatprep.mubr.bf16.mxu0 %v3875
  %5443 = vmatmul.mubr.bf16.gmra.mrb[0].mxu0 %v3874
  %v5444 = vpop.f32.mrb[0].mxu0
  %v5445 = vadd.f32 %v5237, %v5444
  %v5446 = vpop.f32.mrb[0].mxu0
  %v5447 = vpop.f32.mrb[0].mxu0
  %v5448 = vadd.f32 %v5240, %v5447
  %v5449 = vpop.f32.mrb[0].mxu0
  %5450 = vmatprep.mubr.bf16.mxu0 %v3892
  %5451 = vmatmul.mubr.bf16.gmra.mrb[0].mxu0 %v3891
  %v5452 = vpop.f32.mrb[0].mxu0
  %v5453 = vadd.f32 %v5245, %v5452
  %v5454 = vpop.f32.mrb[0].mxu0
  %v5455 = vpop.f32.mrb[0].mxu0
  %v5456 = vadd.f32 %v5248, %v5455
  %v5457 = vpop.f32.mrb[0].mxu0
  %5458 = vmatprep.mubr.bf16.mxu0 %v3909
  %5459 = vmatmul.mubr.bf16.gmra.mrb[0].mxu0 %v3908
  %v5460 = vpop.f32.mrb[0].mxu0
  %v5461 = vadd.f32 %v5253, %v5460
  %v5462 = vpop.f32.mrb[0].mxu0
  %v5463 = vpop.f32.mrb[0].mxu0
  %v5464 = vadd.f32 %v5256, %v5463
  %v5465 = vpop.f32.mrb[0].mxu0
  %5466 = vmatprep.mubr.bf16.mxu0 %v3926
  %5467 = vmatmul.mubr.bf16.gmra.mrb[0].mxu0 %v3925
  %v5468 = vpop.f32.mrb[0].mxu0
  %v5469 = vadd.f32 %v5261, %v5468
  %v5470 = vpop.f32.mrb[0].mxu0
  %v5471 = vpop.f32.mrb[0].mxu0
  %v5472 = vadd.f32 %v5264, %v5471
  %v5473 = vpop.f32.mrb[0].mxu0
  %5474 = vmatprep.mubr.bf16.mxu0 %v3943
  %5475 = vmatmul.mubr.bf16.gmra.mrb[0].mxu0 %v3942
  %v5476 = vpop.f32.mrb[0].mxu0
  %v5477 = vadd.f32 %v5269, %v5476
  %v5478 = vpop.f32.mrb[0].mxu0
  %v5479 = vpop.f32.mrb[0].mxu0
  %v5480 = vadd.f32 %v5272, %v5479
  %v5481 = vpop.f32.mrb[0].mxu0
  %5482 = vmatprep.mubr.bf16.mxu0 %v3960
  %5483 = vmatmul.mubr.bf16.gmra.mrb[0].mxu0 %v3959
  %v5484 = vpop.f32.mrb[0].mxu0
  %v5485 = vadd.f32 %v5277, %v5484
  %v5486 = vpop.f32.mrb[0].mxu0
  %v5487 = vpop.f32.mrb[0].mxu0
  %v5488 = vadd.f32 %v5280, %v5487
  %v5489 = vpop.f32.mrb[0].mxu0
  %5490 = vmatprep.mubr.bf16.mxu0 %v3977
  %5491 = vmatmul.mubr.bf16.gmra.mrb[0].mxu0 %v3976
  %v5492 = vpop.f32.mrb[0].mxu0
  %v5493 = vadd.f32 %v5285, %v5492
  %v5494 = vpop.f32.mrb[0].mxu0
  %v5495 = vpop.f32.mrb[0].mxu0
  %v5496 = vadd.f32 %v5288, %v5495
  %v5497 = vpop.f32.mrb[0].mxu0
  %5498 = vmatprep.mubr.bf16.mxu0 %v3994
  %5499 = vmatmul.mubr.bf16.gmra.mrb[0].mxu0 %v3993
  %v5500 = vpop.f32.mrb[0].mxu0
  %v5501 = vadd.f32 %v5293, %v5500
  %v5502 = vpop.f32.mrb[0].mxu0
  %v5503 = vpop.f32.mrb[0].mxu0
  %v5504 = vadd.f32 %v5296, %v5503
  %v5505 = vpop.f32.mrb[0].mxu0
  %5506 = vmatprep.mubr.bf16.mxu0 %v4011
  %5507 = vmatmul.mubr.bf16.gmra.mrb[0].mxu0 %v4010
  %v5508 = vpop.f32.mrb[0].mxu0
  %v5509 = vadd.f32 %v5301, %v5508
  %v5510 = vpop.f32.mrb[0].mxu0
  %v5511 = vpop.f32.mrb[0].mxu0
  %v5512 = vadd.f32 %v5304, %v5511
  %v5513 = vpop.f32.mrb[0].mxu0
  %5514 = vmatprep.mubr.bf16.mxu0 %v4028
  %5515 = vmatmul.mubr.bf16.gmra.mrb[0].mxu0 %v4027
  %v5516 = vpop.f32.mrb[0].mxu0
  %v5517 = vadd.f32 %v5309, %v5516
  %v5518 = vpop.f32.mrb[0].mxu0
  %v5519 = vpop.f32.mrb[0].mxu0
  %v5520 = vadd.f32 %v5312, %v5519
  %v5521 = vpop.f32.mrb[0].mxu0
  %5522 = vmatprep.mubr.bf16.mxu0 %v4045
  %5523 = vmatmul.mubr.bf16.gmra.mrb[0].mxu0 %v4044
  %v5524 = vpop.f32.mrb[0].mxu0
  %v5525 = vadd.f32 %v5317, %v5524
  %v5526 = vpop.f32.mrb[0].mxu0
  %v5527 = vpop.f32.mrb[0].mxu0
  %v5528 = vadd.f32 %v5320, %v5527
  %v5529 = vpop.f32.mrb[0].mxu0
  %5530 = vmatprep.mubr.bf16.mxu0 %v4062
  %5531 = vmatmul.mubr.bf16.gmra.mrb[0].mxu0 %v4061
  %v5532 = vpop.f32.mrb[0].mxu0
  %v5533 = vadd.f32 %v5325, %v5532
  %v5534 = vpop.f32.mrb[0].mxu0
  %v5535 = vpop.f32.mrb[0].mxu0
  %v5536 = vadd.f32 %v5328, %v5535
  %v5537 = vpop.f32.mrb[0].mxu0
  %5538 = vmatprep.mubr.bf16.mxu0 %v4079
  %5539 = vmatmul.mubr.bf16.gmra.mrb[0].mxu0 %v4078
  %v5540 = vpop.f32.mrb[0].mxu0
  %v5541 = vadd.f32 %v5333, %v5540
  %v5542 = vpop.f32.mrb[0].mxu0
  %v5543 = vpop.f32.mrb[0].mxu0
  %v5544 = vpop.f32.mrb[0].mxu0
  %5545 = vdwg.mxu0
  %5546 = vmatprep.subr.bf16.mxu0 0
  %5547 = vmatpush1.bf16.msra.mxu0 %v2159
  %5548 = vmatprep.subr.bf16.mxu0 0
  %5549 = vmatpush1.bf16.msra.mxu0 %v2160
  %5550 = vmatprep.subr.bf16.mxu0 0
  %5551 = vmatpush1.bf16.msra.mxu0 %v2161
  %5552 = vmatprep.subr.bf16.mxu0 0
  %5553 = vmatpush1.bf16.msra.mxu0 %v2162
  %5554 = vmatprep.subr.bf16.mxu0 0
  %5555 = vmatpush1.bf16.msra.mxu0 %v2163
  %5556 = vmatprep.subr.bf16.mxu0 0
  %5557 = vmatpush1.bf16.msra.mxu0 %v2164
  %5558 = vmatprep.subr.bf16.mxu0 0
  %5559 = vmatpush1.bf16.msra.mxu0 %v2165
  %5560 = vmatprep.subr.bf16.mxu0 0
  %5561 = vmatpush1.bf16.msra.mxu0 %v2166
  %5562 = vmatprep.subr.bf16.mxu0 0
  %5563 = vmatpush1.bf16.msra.mxu0 %v2167
  %5564 = vmatprep.subr.bf16.mxu0 0
  %5565 = vmatpush1.bf16.msra.mxu0 %v2168
  %5566 = vmatprep.subr.bf16.mxu0 0
  %5567 = vmatpush1.bf16.msra.mxu0 %v2169
  %5568 = vmatprep.subr.bf16.mxu0 0
  %5569 = vmatpush1.bf16.msra.mxu0 %v2170
  %5570 = vmatprep.subr.bf16.mxu0 0
  %5571 = vmatpush1.bf16.msra.mxu0 %v2171
  %5572 = vmatprep.subr.bf16.mxu0 0
  %5573 = vmatpush1.bf16.msra.mxu0 %v2172
  %5574 = vmatprep.subr.bf16.mxu0 0
  %5575 = vmatpush1.bf16.msra.mxu0 %v2173
  %5576 = vmatprep.subr.bf16.mxu0 0
  %5577 = vmatpush1.bf16.msra.mxu0 %v2174
  %5578 = vmatprep.mubr.bf16.mxu0 %v3724
  %5579 = vmatmul.mubr.bf16.gmra.mrb[0].mxu0 %v3723
  %v5580 = vpop.f32.mrb[0].mxu0
  %v5581 = vadd.f32 %v5373, %v5580
  %v5582 = vpop.f32.mrb[0].mxu0
  %v5583 = vpop.f32.mrb[0].mxu0
  %v5584 = vadd.f32 %v5376, %v5583
  %v5585 = vpop.f32.mrb[0].mxu0
  %5586 = vmatprep.mubr.bf16.mxu0 %v3741
  %5587 = vmatmul.mubr.bf16.gmra.mrb[0].mxu0 %v3740
  %v5588 = vpop.f32.mrb[0].mxu0
  %v5589 = vadd.f32 %v5381, %v5588
  %v5590 = vpop.f32.mrb[0].mxu0
  %v5591 = vpop.f32.mrb[0].mxu0
  %v5592 = vadd.f32 %v5384, %v5591
  %v5593 = vpop.f32.mrb[0].mxu0
  %5594 = vmatprep.mubr.bf16.mxu0 %v3758
  %5595 = vmatmul.mubr.bf16.gmra.mrb[0].mxu0 %v3757
  %v5596 = vpop.f32.mrb[0].mxu0
  %v5597 = vadd.f32 %v5389, %v5596
  %v5598 = vpop.f32.mrb[0].mxu0
  %v5599 = vpop.f32.mrb[0].mxu0
  %v5600 = vadd.f32 %v5392, %v5599
  %v5601 = vpop.f32.mrb[0].mxu0
  %5602 = vmatprep.mubr.bf16.mxu0 %v3775
  %5603 = vmatmul.mubr.bf16.gmra.mrb[0].mxu0 %v3774
  %v5604 = vpop.f32.mrb[0].mxu0
  %v5605 = vadd.f32 %v5397, %v5604
  %v5606 = vpop.f32.mrb[0].mxu0
  %v5607 = vpop.f32.mrb[0].mxu0
  %v5608 = vadd.f32 %v5400, %v5607
  %v5609 = vpop.f32.mrb[0].mxu0
  %5610 = vmatprep.mubr.bf16.mxu0 %v3792
  %5611 = vmatmul.mubr.bf16.gmra.mrb[0].mxu0 %v3791
  %v5612 = vpop.f32.mrb[0].mxu0
  %v5613 = vadd.f32 %v5405, %v5612
  %v5614 = vpop.f32.mrb[0].mxu0
  %v5615 = vpop.f32.mrb[0].mxu0
  %v5616 = vadd.f32 %v5408, %v5615
  %v5617 = vpop.f32.mrb[0].mxu0
  %5618 = vmatprep.mubr.bf16.mxu0 %v3809
  %5619 = vmatmul.mubr.bf16.gmra.mrb[0].mxu0 %v3808
  %v5620 = vpop.f32.mrb[0].mxu0
  %v5621 = vadd.f32 %v5413, %v5620
  %v5622 = vpop.f32.mrb[0].mxu0
  %v5623 = vpop.f32.mrb[0].mxu0
  %v5624 = vadd.f32 %v5416, %v5623
  %v5625 = vpop.f32.mrb[0].mxu0
  %5626 = vmatprep.mubr.bf16.mxu0 %v3826
  %5627 = vmatmul.mubr.bf16.gmra.mrb[0].mxu0 %v3825
  %v5628 = vpop.f32.mrb[0].mxu0
  %v5629 = vadd.f32 %v5421, %v5628
  %v5630 = vpop.f32.mrb[0].mxu0
  %v5631 = vpop.f32.mrb[0].mxu0
  %v5632 = vadd.f32 %v5424, %v5631
  %v5633 = vpop.f32.mrb[0].mxu0
  %5634 = vmatprep.mubr.bf16.mxu0 %v3843
  %5635 = vmatmul.mubr.bf16.gmra.mrb[0].mxu0 %v3842
  %v5636 = vpop.f32.mrb[0].mxu0
  %v5637 = vadd.f32 %v5429, %v5636
  %v5638 = vpop.f32.mrb[0].mxu0
  %v5639 = vpop.f32.mrb[0].mxu0
  %v5640 = vadd.f32 %v5432, %v5639
  %v5641 = vpop.f32.mrb[0].mxu0
  %5642 = vmatprep.mubr.bf16.mxu0 %v3860
  %5643 = vmatmul.mubr.bf16.gmra.mrb[0].mxu0 %v3859
  %v5644 = vpop.f32.mrb[0].mxu0
  %v5645 = vadd.f32 %v5437, %v5644
  %v5646 = vpop.f32.mrb[0].mxu0
  %v5647 = vpop.f32.mrb[0].mxu0
  %v5648 = vadd.f32 %v5440, %v5647
  %v5649 = vpop.f32.mrb[0].mxu0
  %5650 = vmatprep.mubr.bf16.mxu0 %v3877
  %5651 = vmatmul.mubr.bf16.gmra.mrb[0].mxu0 %v3876
  %v5652 = vpop.f32.mrb[0].mxu0
  %v5653 = vadd.f32 %v5445, %v5652
  %v5654 = vpop.f32.mrb[0].mxu0
  %v5655 = vpop.f32.mrb[0].mxu0
  %v5656 = vadd.f32 %v5448, %v5655
  %v5657 = vpop.f32.mrb[0].mxu0
  %5658 = vmatprep.mubr.bf16.mxu0 %v3894
  %5659 = vmatmul.mubr.bf16.gmra.mrb[0].mxu0 %v3893
  %v5660 = vpop.f32.mrb[0].mxu0
  %v5661 = vadd.f32 %v5453, %v5660
  %v5662 = vpop.f32.mrb[0].mxu0
  %v5663 = vpop.f32.mrb[0].mxu0
  %v5664 = vadd.f32 %v5456, %v5663
  %v5665 = vpop.f32.mrb[0].mxu0
  %5666 = vmatprep.mubr.bf16.mxu0 %v3911
  %5667 = vmatmul.mubr.bf16.gmra.mrb[0].mxu0 %v3910
  %v5668 = vpop.f32.mrb[0].mxu0
  %v5669 = vadd.f32 %v5461, %v5668
  %v5670 = vpop.f32.mrb[0].mxu0
  %v5671 = vpop.f32.mrb[0].mxu0
  %v5672 = vadd.f32 %v5464, %v5671
  %v5673 = vpop.f32.mrb[0].mxu0
  %5674 = vmatprep.mubr.bf16.mxu0 %v3928
  %5675 = vmatmul.mubr.bf16.gmra.mrb[0].mxu0 %v3927
  %v5676 = vpop.f32.mrb[0].mxu0
  %v5677 = vadd.f32 %v5469, %v5676
  %v5678 = vpop.f32.mrb[0].mxu0
  %v5679 = vpop.f32.mrb[0].mxu0
  %v5680 = vadd.f32 %v5472, %v5679
  %v5681 = vpop.f32.mrb[0].mxu0
  %5682 = vmatprep.mubr.bf16.mxu0 %v3945
  %5683 = vmatmul.mubr.bf16.gmra.mrb[0].mxu0 %v3944
  %v5684 = vpop.f32.mrb[0].mxu0
  %v5685 = vadd.f32 %v5477, %v5684
  %v5686 = vpop.f32.mrb[0].mxu0
  %v5687 = vpop.f32.mrb[0].mxu0
  %v5688 = vadd.f32 %v5480, %v5687
  %v5689 = vpop.f32.mrb[0].mxu0
  %5690 = vmatprep.mubr.bf16.mxu0 %v3962
  %5691 = vmatmul.mubr.bf16.gmra.mrb[0].mxu0 %v3961
  %v5692 = vpop.f32.mrb[0].mxu0
  %v5693 = vadd.f32 %v5485, %v5692
  %v5694 = vpop.f32.mrb[0].mxu0
  %v5695 = vpop.f32.mrb[0].mxu0
  %v5696 = vadd.f32 %v5488, %v5695
  %v5697 = vpop.f32.mrb[0].mxu0
  %5698 = vmatprep.mubr.bf16.mxu0 %v3979
  %5699 = vmatmul.mubr.bf16.gmra.mrb[0].mxu0 %v3978
  %v5700 = vpop.f32.mrb[0].mxu0
  %v5701 = vadd.f32 %v5493, %v5700
  %v5702 = vpop.f32.mrb[0].mxu0
  %v5703 = vpop.f32.mrb[0].mxu0
  %v5704 = vadd.f32 %v5496, %v5703
  %v5705 = vpop.f32.mrb[0].mxu0
  %5706 = vmatprep.mubr.bf16.mxu0 %v3996
  %5707 = vmatmul.mubr.bf16.gmra.mrb[0].mxu0 %v3995
  %v5708 = vpop.f32.mrb[0].mxu0
  %v5709 = vadd.f32 %v5501, %v5708
  %v5710 = vpop.f32.mrb[0].mxu0
  %v5711 = vpop.f32.mrb[0].mxu0
  %v5712 = vadd.f32 %v5504, %v5711
  %v5713 = vpop.f32.mrb[0].mxu0
  %5714 = vmatprep.mubr.bf16.mxu0 %v4013
  %5715 = vmatmul.mubr.bf16.gmra.mrb[0].mxu0 %v4012
  %v5716 = vpop.f32.mrb[0].mxu0
  %v5717 = vadd.f32 %v5509, %v5716
  %v5718 = vpop.f32.mrb[0].mxu0
  %v5719 = vpop.f32.mrb[0].mxu0
  %v5720 = vadd.f32 %v5512, %v5719
  %v5721 = vpop.f32.mrb[0].mxu0
  %5722 = vmatprep.mubr.bf16.mxu0 %v4030
  %5723 = vmatmul.mubr.bf16.gmra.mrb[0].mxu0 %v4029
  %v5724 = vpop.f32.mrb[0].mxu0
  %v5725 = vadd.f32 %v5517, %v5724
  %v5726 = vpop.f32.mrb[0].mxu0
  %v5727 = vpop.f32.mrb[0].mxu0
  %v5728 = vadd.f32 %v5520, %v5727
  %v5729 = vpop.f32.mrb[0].mxu0
  %5730 = vmatprep.mubr.bf16.mxu0 %v4047
  %5731 = vmatmul.mubr.bf16.gmra.mrb[0].mxu0 %v4046
  %v5732 = vpop.f32.mrb[0].mxu0
  %v5733 = vadd.f32 %v5525, %v5732
  %v5734 = vpop.f32.mrb[0].mxu0
  %v5735 = vpop.f32.mrb[0].mxu0
  %v5736 = vadd.f32 %v5528, %v5735
  %v5737 = vpop.f32.mrb[0].mxu0
  %5738 = vmatprep.mubr.bf16.mxu0 %v4064
  %5739 = vmatmul.mubr.bf16.gmra.mrb[0].mxu0 %v4063
  %v5740 = vpop.f32.mrb[0].mxu0
  %v5741 = vadd.f32 %v5533, %v5740
  %v5742 = vpop.f32.mrb[0].mxu0
  %v5743 = vpop.f32.mrb[0].mxu0
  %v5744 = vadd.f32 %v5536, %v5743
  %v5745 = vpop.f32.mrb[0].mxu0
  %5746 = vmatprep.mubr.bf16.mxu0 %v4081
  %5747 = vmatmul.mubr.bf16.gmra.mrb[0].mxu0 %v4080
  %v5748 = vpop.f32.mrb[0].mxu0
  %v5749 = vadd.f32 %v5541, %v5748
  %v5750 = vpop.f32.mrb[0].mxu0
  %v5751 = vpop.f32.mrb[0].mxu0
  %v5752 = vpop.f32.mrb[0].mxu0
  %5753 = vdwg.mxu0
  %5754 = vmatprep.subr.bf16.mxu0 0
  %5755 = vmatpush1.bf16.msra.mxu0 %v2175
  %5756 = vmatprep.subr.bf16.mxu0 0
  %5757 = vmatpush1.bf16.msra.mxu0 %v2176
  %5758 = vmatprep.subr.bf16.mxu0 0
  %5759 = vmatpush1.bf16.msra.mxu0 %v2177
  %5760 = vmatprep.subr.bf16.mxu0 0
  %5761 = vmatpush1.bf16.msra.mxu0 %v2178
  %5762 = vmatprep.subr.bf16.mxu0 0
  %5763 = vmatpush1.bf16.msra.mxu0 %v2179
  %5764 = vmatprep.subr.bf16.mxu0 0
  %5765 = vmatpush1.bf16.msra.mxu0 %v2180
  %5766 = vmatprep.subr.bf16.mxu0 0
  %5767 = vmatpush1.bf16.msra.mxu0 %v2181
  %5768 = vmatprep.subr.bf16.mxu0 0
  %5769 = vmatpush1.bf16.msra.mxu0 %v2182
  %5770 = vmatprep.subr.bf16.mxu0 0
  %5771 = vmatpush1.bf16.msra.mxu0 %v2183
  %5772 = vmatprep.subr.bf16.mxu0 0
  %5773 = vmatpush1.bf16.msra.mxu0 %v2184
  %5774 = vmatprep.subr.bf16.mxu0 0
  %5775 = vmatpush1.bf16.msra.mxu0 %v2185
  %5776 = vmatprep.subr.bf16.mxu0 0
  %5777 = vmatpush1.bf16.msra.mxu0 %v2186
  %5778 = vmatprep.subr.bf16.mxu0 0
  %5779 = vmatpush1.bf16.msra.mxu0 %v2187
  %5780 = vmatprep.subr.bf16.mxu0 0
  %5781 = vmatpush1.bf16.msra.mxu0 %v2188
  %5782 = vmatprep.subr.bf16.mxu0 0
  %5783 = vmatpush1.bf16.msra.mxu0 %v2189
  %5784 = vmatprep.subr.bf16.mxu0 0
  %5785 = vmatpush1.bf16.msra.mxu0 %v2190
  %5786 = vmatprep.mubr.bf16.mxu0 %v3726
  %5787 = vmatmul.mubr.bf16.gmra.mrb[0].mxu0 %v3725
  %v5788 = vpop.f32.mrb[0].mxu0
  %v5789 = vadd.f32 %v5581, %v5788
  %v5790 = vpop.f32.mrb[0].mxu0
  %v5791 = vpop.f32.mrb[0].mxu0
  %v5792 = vadd.f32 %v5584, %v5791
  %v5793 = vpop.f32.mrb[0].mxu0
  %5794 = vmatprep.mubr.bf16.mxu0 %v3743
  %5795 = vmatmul.mubr.bf16.gmra.mrb[0].mxu0 %v3742
  %v5796 = vpop.f32.mrb[0].mxu0
  %v5797 = vadd.f32 %v5589, %v5796
  %v5798 = vpop.f32.mrb[0].mxu0
  %v5799 = vpop.f32.mrb[0].mxu0
  %v5800 = vadd.f32 %v5592, %v5799
  %v5801 = vpop.f32.mrb[0].mxu0
  %5802 = vmatprep.mubr.bf16.mxu0 %v3760
  %5803 = vmatmul.mubr.bf16.gmra.mrb[0].mxu0 %v3759
  %v5804 = vpop.f32.mrb[0].mxu0
  %v5805 = vadd.f32 %v5597, %v5804
  %v5806 = vpop.f32.mrb[0].mxu0
  %v5807 = vpop.f32.mrb[0].mxu0
  %v5808 = vadd.f32 %v5600, %v5807
  %v5809 = vpop.f32.mrb[0].mxu0
  %5810 = vmatprep.mubr.bf16.mxu0 %v3777
  %5811 = vmatmul.mubr.bf16.gmra.mrb[0].mxu0 %v3776
  %v5812 = vpop.f32.mrb[0].mxu0
  %v5813 = vadd.f32 %v5605, %v5812
  %v5814 = vpop.f32.mrb[0].mxu0
  %v5815 = vpop.f32.mrb[0].mxu0
  %v5816 = vadd.f32 %v5608, %v5815
  %v5817 = vpop.f32.mrb[0].mxu0
  %5818 = vmatprep.mubr.bf16.mxu0 %v3794
  %5819 = vmatmul.mubr.bf16.gmra.mrb[0].mxu0 %v3793
  %v5820 = vpop.f32.mrb[0].mxu0
  %v5821 = vadd.f32 %v5613, %v5820
  %v5822 = vpop.f32.mrb[0].mxu0
  %v5823 = vpop.f32.mrb[0].mxu0
  %v5824 = vadd.f32 %v5616, %v5823
  %v5825 = vpop.f32.mrb[0].mxu0
  %5826 = vmatprep.mubr.bf16.mxu0 %v3811
  %5827 = vmatmul.mubr.bf16.gmra.mrb[0].mxu0 %v3810
  %v5828 = vpop.f32.mrb[0].mxu0
  %v5829 = vadd.f32 %v5621, %v5828
  %v5830 = vpop.f32.mrb[0].mxu0
  %v5831 = vpop.f32.mrb[0].mxu0
  %v5832 = vadd.f32 %v5624, %v5831
  %v5833 = vpop.f32.mrb[0].mxu0
  %5834 = vmatprep.mubr.bf16.mxu0 %v3828
  %5835 = vmatmul.mubr.bf16.gmra.mrb[0].mxu0 %v3827
  %v5836 = vpop.f32.mrb[0].mxu0
  %v5837 = vadd.f32 %v5629, %v5836
  %v5838 = vpop.f32.mrb[0].mxu0
  %v5839 = vpop.f32.mrb[0].mxu0
  %v5840 = vadd.f32 %v5632, %v5839
  %v5841 = vpop.f32.mrb[0].mxu0
  %5842 = vmatprep.mubr.bf16.mxu0 %v3845
  %5843 = vmatmul.mubr.bf16.gmra.mrb[0].mxu0 %v3844
  %v5844 = vpop.f32.mrb[0].mxu0
  %v5845 = vadd.f32 %v5637, %v5844
  %v5846 = vpop.f32.mrb[0].mxu0
  %v5847 = vpop.f32.mrb[0].mxu0
  %v5848 = vadd.f32 %v5640, %v5847
  %v5849 = vpop.f32.mrb[0].mxu0
  %5850 = vmatprep.mubr.bf16.mxu0 %v3862
  %5851 = vmatmul.mubr.bf16.gmra.mrb[0].mxu0 %v3861
  %v5852 = vpop.f32.mrb[0].mxu0
  %v5853 = vadd.f32 %v5645, %v5852
  %v5854 = vpop.f32.mrb[0].mxu0
  %v5855 = vpop.f32.mrb[0].mxu0
  %v5856 = vadd.f32 %v5648, %v5855
  %v5857 = vpop.f32.mrb[0].mxu0
  %5858 = vmatprep.mubr.bf16.mxu0 %v3879
  %5859 = vmatmul.mubr.bf16.gmra.mrb[0].mxu0 %v3878
  %v5860 = vpop.f32.mrb[0].mxu0
  %v5861 = vadd.f32 %v5653, %v5860
  %v5862 = vpop.f32.mrb[0].mxu0
  %v5863 = vpop.f32.mrb[0].mxu0
  %v5864 = vadd.f32 %v5656, %v5863
  %v5865 = vpop.f32.mrb[0].mxu0
  %5866 = vmatprep.mubr.bf16.mxu0 %v3896
  %5867 = vmatmul.mubr.bf16.gmra.mrb[0].mxu0 %v3895
  %v5868 = vpop.f32.mrb[0].mxu0
  %v5869 = vadd.f32 %v5661, %v5868
  %v5870 = vpop.f32.mrb[0].mxu0
  %v5871 = vpop.f32.mrb[0].mxu0
  %v5872 = vadd.f32 %v5664, %v5871
  %v5873 = vpop.f32.mrb[0].mxu0
  %5874 = vmatprep.mubr.bf16.mxu0 %v3913
  %5875 = vmatmul.mubr.bf16.gmra.mrb[0].mxu0 %v3912
  %v5876 = vpop.f32.mrb[0].mxu0
  %v5877 = vadd.f32 %v5669, %v5876
  %v5878 = vpop.f32.mrb[0].mxu0
  %v5879 = vpop.f32.mrb[0].mxu0
  %v5880 = vadd.f32 %v5672, %v5879
  %v5881 = vpop.f32.mrb[0].mxu0
  %5882 = vmatprep.mubr.bf16.mxu0 %v3930
  %5883 = vmatmul.mubr.bf16.gmra.mrb[0].mxu0 %v3929
  %v5884 = vpop.f32.mrb[0].mxu0
  %v5885 = vadd.f32 %v5677, %v5884
  %v5886 = vpop.f32.mrb[0].mxu0
  %v5887 = vpop.f32.mrb[0].mxu0
  %v5888 = vadd.f32 %v5680, %v5887
  %v5889 = vpop.f32.mrb[0].mxu0
  %5890 = vmatprep.mubr.bf16.mxu0 %v3947
  %5891 = vmatmul.mubr.bf16.gmra.mrb[0].mxu0 %v3946
  %v5892 = vpop.f32.mrb[0].mxu0
  %v5893 = vadd.f32 %v5685, %v5892
  %v5894 = vpop.f32.mrb[0].mxu0
  %v5895 = vpop.f32.mrb[0].mxu0
  %v5896 = vadd.f32 %v5688, %v5895
  %v5897 = vpop.f32.mrb[0].mxu0
  %5898 = vmatprep.mubr.bf16.mxu0 %v3964
  %5899 = vmatmul.mubr.bf16.gmra.mrb[0].mxu0 %v3963
  %v5900 = vpop.f32.mrb[0].mxu0
  %v5901 = vadd.f32 %v5693, %v5900
  %v5902 = vpop.f32.mrb[0].mxu0
  %v5903 = vpop.f32.mrb[0].mxu0
  %v5904 = vadd.f32 %v5696, %v5903
  %v5905 = vpop.f32.mrb[0].mxu0
  %5906 = vmatprep.mubr.bf16.mxu0 %v3981
  %5907 = vmatmul.mubr.bf16.gmra.mrb[0].mxu0 %v3980
  %v5908 = vpop.f32.mrb[0].mxu0
  %v5909 = vadd.f32 %v5701, %v5908
  %v5910 = vpop.f32.mrb[0].mxu0
  %v5911 = vpop.f32.mrb[0].mxu0
  %v5912 = vadd.f32 %v5704, %v5911
  %v5913 = vpop.f32.mrb[0].mxu0
  %5914 = vmatprep.mubr.bf16.mxu0 %v3998
  %5915 = vmatmul.mubr.bf16.gmra.mrb[0].mxu0 %v3997
  %v5916 = vpop.f32.mrb[0].mxu0
  %v5917 = vadd.f32 %v5709, %v5916
  %v5918 = vpop.f32.mrb[0].mxu0
  %v5919 = vpop.f32.mrb[0].mxu0
  %v5920 = vadd.f32 %v5712, %v5919
  %v5921 = vpop.f32.mrb[0].mxu0
  %5922 = vmatprep.mubr.bf16.mxu0 %v4015
  %5923 = vmatmul.mubr.bf16.gmra.mrb[0].mxu0 %v4014
  %v5924 = vpop.f32.mrb[0].mxu0
  %v5925 = vadd.f32 %v5717, %v5924
  %v5926 = vpop.f32.mrb[0].mxu0
  %v5927 = vpop.f32.mrb[0].mxu0
  %v5928 = vadd.f32 %v5720, %v5927
  %v5929 = vpop.f32.mrb[0].mxu0
  %5930 = vmatprep.mubr.bf16.mxu0 %v4032
  %5931 = vmatmul.mubr.bf16.gmra.mrb[0].mxu0 %v4031
  %v5932 = vpop.f32.mrb[0].mxu0
  %v5933 = vadd.f32 %v5725, %v5932
  %v5934 = vpop.f32.mrb[0].mxu0
  %v5935 = vpop.f32.mrb[0].mxu0
  %v5936 = vadd.f32 %v5728, %v5935
  %v5937 = vpop.f32.mrb[0].mxu0
  %5938 = vmatprep.mubr.bf16.mxu0 %v4049
  %5939 = vmatmul.mubr.bf16.gmra.mrb[0].mxu0 %v4048
  %v5940 = vpop.f32.mrb[0].mxu0
  %v5941 = vadd.f32 %v5733, %v5940
  %v5942 = vpop.f32.mrb[0].mxu0
  %v5943 = vpop.f32.mrb[0].mxu0
  %v5944 = vadd.f32 %v5736, %v5943
  %v5945 = vpop.f32.mrb[0].mxu0
  %5946 = vmatprep.mubr.bf16.mxu0 %v4066
  %5947 = vmatmul.mubr.bf16.gmra.mrb[0].mxu0 %v4065
  %v5948 = vpop.f32.mrb[0].mxu0
  %v5949 = vadd.f32 %v5741, %v5948
  %v5950 = vpop.f32.mrb[0].mxu0
  %v5951 = vpop.f32.mrb[0].mxu0
  %v5952 = vadd.f32 %v5744, %v5951
  %v5953 = vpop.f32.mrb[0].mxu0
  %5954 = vmatprep.mubr.bf16.mxu0 %v4083
  %5955 = vmatmul.mubr.bf16.gmra.mrb[0].mxu0 %v4082
  %v5956 = vpop.f32.mrb[0].mxu0
  %v5957 = vadd.f32 %v5749, %v5956
  %v5958 = vpop.f32.mrb[0].mxu0
  %v5959 = vpop.f32.mrb[0].mxu0
  %v5960 = vpop.f32.mrb[0].mxu0
  %5961 = vdwg.mxu0
  %5962 = vmatprep.subr.bf16.mxu0 0
  %5963 = vmatpush1.bf16.msra.mxu0 %v2191
  %5964 = vmatprep.subr.bf16.mxu0 0
  %5965 = vmatpush1.bf16.msra.mxu0 %v2192
  %5966 = vmatprep.subr.bf16.mxu0 0
  %5967 = vmatpush1.bf16.msra.mxu0 %v2193
  %5968 = vmatprep.subr.bf16.mxu0 0
  %5969 = vmatpush1.bf16.msra.mxu0 %v2194
  %5970 = vmatprep.subr.bf16.mxu0 0
  %5971 = vmatpush1.bf16.msra.mxu0 %v2195
  %5972 = vmatprep.subr.bf16.mxu0 0
  %5973 = vmatpush1.bf16.msra.mxu0 %v2196
  %5974 = vmatprep.subr.bf16.mxu0 0
  %5975 = vmatpush1.bf16.msra.mxu0 %v2197
  %5976 = vmatprep.subr.bf16.mxu0 0
  %5977 = vmatpush1.bf16.msra.mxu0 %v2198
  %5978 = vmatprep.subr.bf16.mxu0 0
  %5979 = vmatpush1.bf16.msra.mxu0 %v2199
  %5980 = vmatprep.subr.bf16.mxu0 0
  %5981 = vmatpush1.bf16.msra.mxu0 %v2200
  %5982 = vmatprep.subr.bf16.mxu0 0
  %5983 = vmatpush1.bf16.msra.mxu0 %v2201
  %5984 = vmatprep.subr.bf16.mxu0 0
  %5985 = vmatpush1.bf16.msra.mxu0 %v2202
  %5986 = vmatprep.subr.bf16.mxu0 0
  %5987 = vmatpush1.bf16.msra.mxu0 %v2203
  %5988 = vmatprep.subr.bf16.mxu0 0
  %5989 = vmatpush1.bf16.msra.mxu0 %v2204
  %5990 = vmatprep.subr.bf16.mxu0 0
  %5991 = vmatpush1.bf16.msra.mxu0 %v2205
  %5992 = vmatprep.subr.bf16.mxu0 0
  %5993 = vmatpush1.bf16.msra.mxu0 %v2206
  %5994 = vmatprep.mubr.bf16.mxu0 %v3728
  %5995 = vmatmul.mubr.bf16.gmra.mrb[0].mxu0 %v3727
  %v5996 = vpop.f32.mrb[0].mxu0
  %v5997 = vadd.f32 %v5789, %v5996
  %v5998 = vpop.f32.mrb[0].mxu0
  %v5999 = vpop.f32.mrb[0].mxu0
  %v6000 = vadd.f32 %v5792, %v5999
  %v6001 = vpop.f32.mrb[0].mxu0
  %6002 = vmatprep.mubr.bf16.mxu0 %v3745
  %6003 = vmatmul.mubr.bf16.gmra.mrb[0].mxu0 %v3744
  %v6004 = vpop.f32.mrb[0].mxu0
  %v6005 = vadd.f32 %v5797, %v6004
  %v6006 = vpop.f32.mrb[0].mxu0
  %v6007 = vpop.f32.mrb[0].mxu0
  %v6008 = vadd.f32 %v5800, %v6007
  %v6009 = vpop.f32.mrb[0].mxu0
  %6010 = vmatprep.mubr.bf16.mxu0 %v3762
  %6011 = vmatmul.mubr.bf16.gmra.mrb[0].mxu0 %v3761
  %v6012 = vpop.f32.mrb[0].mxu0
  %v6013 = vadd.f32 %v5805, %v6012
  %v6014 = vpop.f32.mrb[0].mxu0
  %v6015 = vpop.f32.mrb[0].mxu0
  %v6016 = vadd.f32 %v5808, %v6015
  %v6017 = vpop.f32.mrb[0].mxu0
  %6018 = vmatprep.mubr.bf16.mxu0 %v3779
  %6019 = vmatmul.mubr.bf16.gmra.mrb[0].mxu0 %v3778
  %v6020 = vpop.f32.mrb[0].mxu0
  %v6021 = vadd.f32 %v5813, %v6020
  %v6022 = vpop.f32.mrb[0].mxu0
  %v6023 = vpop.f32.mrb[0].mxu0
  %v6024 = vadd.f32 %v5816, %v6023
  %v6025 = vpop.f32.mrb[0].mxu0
  %6026 = vmatprep.mubr.bf16.mxu0 %v3796
  %6027 = vmatmul.mubr.bf16.gmra.mrb[0].mxu0 %v3795
  %v6028 = vpop.f32.mrb[0].mxu0
  %v6029 = vadd.f32 %v5821, %v6028
  %v6030 = vpop.f32.mrb[0].mxu0
  %v6031 = vpop.f32.mrb[0].mxu0
  %v6032 = vadd.f32 %v5824, %v6031
  %v6033 = vpop.f32.mrb[0].mxu0
  %6034 = vmatprep.mubr.bf16.mxu0 %v3813
  %6035 = vmatmul.mubr.bf16.gmra.mrb[0].mxu0 %v3812
  %v6036 = vpop.f32.mrb[0].mxu0
  %v6037 = vadd.f32 %v5829, %v6036
  %v6038 = vpop.f32.mrb[0].mxu0
  %v6039 = vpop.f32.mrb[0].mxu0
  %v6040 = vadd.f32 %v5832, %v6039
  %v6041 = vpop.f32.mrb[0].mxu0
  %6042 = vmatprep.mubr.bf16.mxu0 %v3830
  %6043 = vmatmul.mubr.bf16.gmra.mrb[0].mxu0 %v3829
  %v6044 = vpop.f32.mrb[0].mxu0
  %v6045 = vadd.f32 %v5837, %v6044
  %v6046 = vpop.f32.mrb[0].mxu0
  %v6047 = vpop.f32.mrb[0].mxu0
  %v6048 = vadd.f32 %v5840, %v6047
  %v6049 = vpop.f32.mrb[0].mxu0
  %6050 = vmatprep.mubr.bf16.mxu0 %v3847
  %6051 = vmatmul.mubr.bf16.gmra.mrb[0].mxu0 %v3846
  %v6052 = vpop.f32.mrb[0].mxu0
  %v6053 = vadd.f32 %v5845, %v6052
  %v6054 = vpop.f32.mrb[0].mxu0
  %v6055 = vpop.f32.mrb[0].mxu0
  %v6056 = vadd.f32 %v5848, %v6055
  %v6057 = vpop.f32.mrb[0].mxu0
  %6058 = vmatprep.mubr.bf16.mxu0 %v3864
  %6059 = vmatmul.mubr.bf16.gmra.mrb[0].mxu0 %v3863
  %v6060 = vpop.f32.mrb[0].mxu0
  %v6061 = vadd.f32 %v5853, %v6060
  %v6062 = vpop.f32.mrb[0].mxu0
  %v6063 = vpop.f32.mrb[0].mxu0
  %v6064 = vadd.f32 %v5856, %v6063
  %v6065 = vpop.f32.mrb[0].mxu0
  %6066 = vmatprep.mubr.bf16.mxu0 %v3881
  %6067 = vmatmul.mubr.bf16.gmra.mrb[0].mxu0 %v3880
  %v6068 = vpop.f32.mrb[0].mxu0
  %v6069 = vadd.f32 %v5861, %v6068
  %v6070 = vpop.f32.mrb[0].mxu0
  %v6071 = vpop.f32.mrb[0].mxu0
  %v6072 = vadd.f32 %v5864, %v6071
  %v6073 = vpop.f32.mrb[0].mxu0
  %6074 = vmatprep.mubr.bf16.mxu0 %v3898
  %6075 = vmatmul.mubr.bf16.gmra.mrb[0].mxu0 %v3897
  %v6076 = vpop.f32.mrb[0].mxu0
  %v6077 = vadd.f32 %v5869, %v6076
  %v6078 = vpop.f32.mrb[0].mxu0
  %v6079 = vpop.f32.mrb[0].mxu0
  %v6080 = vadd.f32 %v5872, %v6079
  %v6081 = vpop.f32.mrb[0].mxu0
  %6082 = vmatprep.mubr.bf16.mxu0 %v3915
  %6083 = vmatmul.mubr.bf16.gmra.mrb[0].mxu0 %v3914
  %v6084 = vpop.f32.mrb[0].mxu0
  %v6085 = vadd.f32 %v5877, %v6084
  %v6086 = vpop.f32.mrb[0].mxu0
  %v6087 = vpop.f32.mrb[0].mxu0
  %v6088 = vadd.f32 %v5880, %v6087
  %v6089 = vpop.f32.mrb[0].mxu0
  %6090 = vmatprep.mubr.bf16.mxu0 %v3932
  %6091 = vmatmul.mubr.bf16.gmra.mrb[0].mxu0 %v3931
  %v6092 = vpop.f32.mrb[0].mxu0
  %v6093 = vadd.f32 %v5885, %v6092
  %v6094 = vpop.f32.mrb[0].mxu0
  %v6095 = vpop.f32.mrb[0].mxu0
  %v6096 = vadd.f32 %v5888, %v6095
  %v6097 = vpop.f32.mrb[0].mxu0
  %6098 = vmatprep.mubr.bf16.mxu0 %v3949
  %6099 = vmatmul.mubr.bf16.gmra.mrb[0].mxu0 %v3948
  %v6100 = vpop.f32.mrb[0].mxu0
  %v6101 = vadd.f32 %v5893, %v6100
  %v6102 = vpop.f32.mrb[0].mxu0
  %v6103 = vpop.f32.mrb[0].mxu0
  %v6104 = vadd.f32 %v5896, %v6103
  %v6105 = vpop.f32.mrb[0].mxu0
  %6106 = vmatprep.mubr.bf16.mxu0 %v3966
  %6107 = vmatmul.mubr.bf16.gmra.mrb[0].mxu0 %v3965
  %v6108 = vpop.f32.mrb[0].mxu0
  %v6109 = vadd.f32 %v5901, %v6108
  %v6110 = vpop.f32.mrb[0].mxu0
  %v6111 = vpop.f32.mrb[0].mxu0
  %v6112 = vadd.f32 %v5904, %v6111
  %v6113 = vpop.f32.mrb[0].mxu0
  %6114 = vmatprep.mubr.bf16.mxu0 %v3983
  %6115 = vmatmul.mubr.bf16.gmra.mrb[0].mxu0 %v3982
  %v6116 = vpop.f32.mrb[0].mxu0
  %v6117 = vadd.f32 %v5909, %v6116
  %v6118 = vpop.f32.mrb[0].mxu0
  %v6119 = vpop.f32.mrb[0].mxu0
  %v6120 = vadd.f32 %v5912, %v6119
  %v6121 = vpop.f32.mrb[0].mxu0
  %6122 = vmatprep.mubr.bf16.mxu0 %v4000
  %6123 = vmatmul.mubr.bf16.gmra.mrb[0].mxu0 %v3999
  %v6124 = vpop.f32.mrb[0].mxu0
  %v6125 = vadd.f32 %v5917, %v6124
  %v6126 = vpop.f32.mrb[0].mxu0
  %v6127 = vpop.f32.mrb[0].mxu0
  %v6128 = vadd.f32 %v5920, %v6127
  %v6129 = vpop.f32.mrb[0].mxu0
  %6130 = vmatprep.mubr.bf16.mxu0 %v4017
  %6131 = vmatmul.mubr.bf16.gmra.mrb[0].mxu0 %v4016
  %v6132 = vpop.f32.mrb[0].mxu0
  %v6133 = vadd.f32 %v5925, %v6132
  %v6134 = vpop.f32.mrb[0].mxu0
  %v6135 = vpop.f32.mrb[0].mxu0
  %v6136 = vadd.f32 %v5928, %v6135
  %v6137 = vpop.f32.mrb[0].mxu0
  %6138 = vmatprep.mubr.bf16.mxu0 %v4034
  %6139 = vmatmul.mubr.bf16.gmra.mrb[0].mxu0 %v4033
  %v6140 = vpop.f32.mrb[0].mxu0
  %v6141 = vadd.f32 %v5933, %v6140
  %v6142 = vpop.f32.mrb[0].mxu0
  %v6143 = vpop.f32.mrb[0].mxu0
  %v6144 = vadd.f32 %v5936, %v6143
  %v6145 = vpop.f32.mrb[0].mxu0
  %6146 = vmatprep.mubr.bf16.mxu0 %v4051
  %6147 = vmatmul.mubr.bf16.gmra.mrb[0].mxu0 %v4050
  %v6148 = vpop.f32.mrb[0].mxu0
  %v6149 = vadd.f32 %v5941, %v6148
  %v6150 = vpop.f32.mrb[0].mxu0
  %v6151 = vpop.f32.mrb[0].mxu0
  %v6152 = vadd.f32 %v5944, %v6151
  %v6153 = vpop.f32.mrb[0].mxu0
  %6154 = vmatprep.mubr.bf16.mxu0 %v4068
  %6155 = vmatmul.mubr.bf16.gmra.mrb[0].mxu0 %v4067
  %v6156 = vpop.f32.mrb[0].mxu0
  %v6157 = vadd.f32 %v5949, %v6156
  %v6158 = vpop.f32.mrb[0].mxu0
  %v6159 = vpop.f32.mrb[0].mxu0
  %v6160 = vadd.f32 %v5952, %v6159
  %v6161 = vpop.f32.mrb[0].mxu0
  %6162 = vmatprep.mubr.bf16.mxu0 %v4085
  %6163 = vmatmul.mubr.bf16.gmra.mrb[0].mxu0 %v4084
  %v6164 = vpop.f32.mrb[0].mxu0
  %v6165 = vadd.f32 %v5957, %v6164
  %v6166 = vpop.f32.mrb[0].mxu0
  %v6167 = vpop.f32.mrb[0].mxu0
  %v6168 = vpop.f32.mrb[0].mxu0
  %6169 = vdwg.mxu0
  %6170 = vmatprep.subr.bf16.mxu0 0
  %6171 = vmatpush1.bf16.msra.mxu0 %v2207
  %6172 = vmatprep.subr.bf16.mxu0 0
  %6173 = vmatpush1.bf16.msra.mxu0 0
  %6174 = vmatprep.subr.bf16.mxu0 0
  %6175 = vmatpush1.bf16.msra.mxu0 0
  %6176 = vmatprep.subr.bf16.mxu0 0
  %6177 = vmatpush1.bf16.msra.mxu0 0
  %6178 = vmatprep.subr.bf16.mxu0 0
  %6179 = vmatpush1.bf16.msra.mxu0 0
  %6180 = vmatprep.subr.bf16.mxu0 0
  %6181 = vmatpush1.bf16.msra.mxu0 0
  %6182 = vmatprep.subr.bf16.mxu0 0
  %6183 = vmatpush1.bf16.msra.mxu0 0
  %6184 = vmatprep.subr.bf16.mxu0 0
  %6185 = vmatpush1.bf16.msra.mxu0 0
  %6186 = vmatprep.subr.bf16.mxu0 0
  %6187 = vmatpush1.bf16.msra.mxu0 0
  %6188 = vmatprep.subr.bf16.mxu0 0
  %6189 = vmatpush1.bf16.msra.mxu0 0
  %6190 = vmatprep.subr.bf16.mxu0 0
  %6191 = vmatpush1.bf16.msra.mxu0 0
  %6192 = vmatprep.subr.bf16.mxu0 0
  %6193 = vmatpush1.bf16.msra.mxu0 0
  %6194 = vmatprep.subr.bf16.mxu0 0
  %6195 = vmatpush1.bf16.msra.mxu0 0
  %6196 = vmatprep.subr.bf16.mxu0 0
  %6197 = vmatpush1.bf16.msra.mxu0 0
  %6198 = vmatprep.subr.bf16.mxu0 0
  %6199 = vmatpush1.bf16.msra.mxu0 0
  %6200 = vmatprep.subr.bf16.mxu0 0
  %6201 = vmatpush1.bf16.msra.mxu0 0
  %6202 = vmatprep.mubr.bf16.mxu0 0
  %6203 = vmatmul.mubr.bf16.gmra.mrb[0].mxu0 %v4441
  %v6204 = vpop.f32.mrb[0].mxu0
  %v6205 = vadd.f32 %v5997, %v6204
  %v6206 = vpop.f32.mrb[0].mxu0
  %v6207 = vpop.f32.mrb[0].mxu0
  %v6208 = vadd.f32 %v6000, %v6207
  %v6209 = vpop.f32.mrb[0].mxu0
  %6210 = vmatprep.mubr.bf16.mxu0 0
  %6211 = vmatmul.mubr.bf16.gmra.mrb[0].mxu0 %v4444
  %v6212 = vpop.f32.mrb[0].mxu0
  %v6213 = vadd.f32 %v6005, %v6212
  %v6214 = vpop.f32.mrb[0].mxu0
  %v6215 = vpop.f32.mrb[0].mxu0
  %v6216 = vadd.f32 %v6008, %v6215
  %v6217 = vpop.f32.mrb[0].mxu0
  %6218 = vmatprep.mubr.bf16.mxu0 0
  %6219 = vmatmul.mubr.bf16.gmra.mrb[0].mxu0 %v4447
  %v6220 = vpop.f32.mrb[0].mxu0
  %v6221 = vadd.f32 %v6013, %v6220
  %v6222 = vpop.f32.mrb[0].mxu0
  %v6223 = vpop.f32.mrb[0].mxu0
  %v6224 = vadd.f32 %v6016, %v6223
  %v6225 = vpop.f32.mrb[0].mxu0
  %6226 = vmatprep.mubr.bf16.mxu0 0
  %6227 = vmatmul.mubr.bf16.gmra.mrb[0].mxu0 %v4450
  %v6228 = vpop.f32.mrb[0].mxu0
  %v6229 = vadd.f32 %v6021, %v6228
  %v6230 = vpop.f32.mrb[0].mxu0
  %v6231 = vpop.f32.mrb[0].mxu0
  %v6232 = vadd.f32 %v6024, %v6231
  %v6233 = vpop.f32.mrb[0].mxu0
  %6234 = vmatprep.mubr.bf16.mxu0 0
  %6235 = vmatmul.mubr.bf16.gmra.mrb[0].mxu0 %v4453
  %v6236 = vpop.f32.mrb[0].mxu0
  %v6237 = vadd.f32 %v6029, %v6236
  %v6238 = vpop.f32.mrb[0].mxu0
  %v6239 = vpop.f32.mrb[0].mxu0
  %v6240 = vadd.f32 %v6032, %v6239
  %v6241 = vpop.f32.mrb[0].mxu0
  %6242 = vmatprep.mubr.bf16.mxu0 0
  %6243 = vmatmul.mubr.bf16.gmra.mrb[0].mxu0 %v4456
  %v6244 = vpop.f32.mrb[0].mxu0
  %v6245 = vadd.f32 %v6037, %v6244
  %v6246 = vpop.f32.mrb[0].mxu0
  %v6247 = vpop.f32.mrb[0].mxu0
  %v6248 = vadd.f32 %v6040, %v6247
  %v6249 = vpop.f32.mrb[0].mxu0
  %6250 = vmatprep.mubr.bf16.mxu0 0
  %6251 = vmatmul.mubr.bf16.gmra.mrb[0].mxu0 %v4459
  %v6252 = vpop.f32.mrb[0].mxu0
  %v6253 = vadd.f32 %v6045, %v6252
  %v6254 = vpop.f32.mrb[0].mxu0
  %v6255 = vpop.f32.mrb[0].mxu0
  %v6256 = vadd.f32 %v6048, %v6255
  %v6257 = vpop.f32.mrb[0].mxu0
  %6258 = vmatprep.mubr.bf16.mxu0 0
  %6259 = vmatmul.mubr.bf16.gmra.mrb[0].mxu0 %v4462
  %v6260 = vpop.f32.mrb[0].mxu0
  %v6261 = vadd.f32 %v6053, %v6260
  %v6262 = vpop.f32.mrb[0].mxu0
  %v6263 = vpop.f32.mrb[0].mxu0
  %v6264 = vadd.f32 %v6056, %v6263
  %v6265 = vpop.f32.mrb[0].mxu0
  %6266 = vmatprep.mubr.bf16.mxu0 0
  %6267 = vmatmul.mubr.bf16.gmra.mrb[0].mxu0 %v4465
  %v6268 = vpop.f32.mrb[0].mxu0
  %v6269 = vadd.f32 %v6061, %v6268
  %v6270 = vpop.f32.mrb[0].mxu0
  %v6271 = vpop.f32.mrb[0].mxu0
  %v6272 = vadd.f32 %v6064, %v6271
  %v6273 = vpop.f32.mrb[0].mxu0
  %6274 = vmatprep.mubr.bf16.mxu0 0
  %6275 = vmatmul.mubr.bf16.gmra.mrb[0].mxu0 %v4468
  %v6276 = vpop.f32.mrb[0].mxu0
  %v6277 = vadd.f32 %v6069, %v6276
  %v6278 = vpop.f32.mrb[0].mxu0
  %v6279 = vpop.f32.mrb[0].mxu0
  %v6280 = vadd.f32 %v6072, %v6279
  %v6281 = vpop.f32.mrb[0].mxu0
  %6282 = vmatprep.mubr.bf16.mxu0 0
  %6283 = vmatmul.mubr.bf16.gmra.mrb[0].mxu0 %v4471
  %v6284 = vpop.f32.mrb[0].mxu0
  %v6285 = vadd.f32 %v6077, %v6284
  %v6286 = vpop.f32.mrb[0].mxu0
  %v6287 = vpop.f32.mrb[0].mxu0
  %v6288 = vadd.f32 %v6080, %v6287
  %v6289 = vpop.f32.mrb[0].mxu0
  %6290 = vmatprep.mubr.bf16.mxu0 0
  %6291 = vmatmul.mubr.bf16.gmra.mrb[0].mxu0 %v4474
  %v6292 = vpop.f32.mrb[0].mxu0
  %v6293 = vadd.f32 %v6085, %v6292
  %v6294 = vpop.f32.mrb[0].mxu0
  %v6295 = vpop.f32.mrb[0].mxu0
  %v6296 = vadd.f32 %v6088, %v6295
  %v6297 = vpop.f32.mrb[0].mxu0
  %6298 = vmatprep.mubr.bf16.mxu0 0
  %6299 = vmatmul.mubr.bf16.gmra.mrb[0].mxu0 %v4477
  %v6300 = vpop.f32.mrb[0].mxu0
  %v6301 = vadd.f32 %v6093, %v6300
  %v6302 = vpop.f32.mrb[0].mxu0
  %v6303 = vpop.f32.mrb[0].mxu0
  %v6304 = vadd.f32 %v6096, %v6303
  %v6305 = vpop.f32.mrb[0].mxu0
  %6306 = vmatprep.mubr.bf16.mxu0 0
  %6307 = vmatmul.mubr.bf16.gmra.mrb[0].mxu0 %v4480
  %v6308 = vpop.f32.mrb[0].mxu0
  %v6309 = vadd.f32 %v6101, %v6308
  %v6310 = vpop.f32.mrb[0].mxu0
  %v6311 = vpop.f32.mrb[0].mxu0
  %v6312 = vadd.f32 %v6104, %v6311
  %v6313 = vpop.f32.mrb[0].mxu0
  %6314 = vmatprep.mubr.bf16.mxu0 0
  %6315 = vmatmul.mubr.bf16.gmra.mrb[0].mxu0 %v4483
  %v6316 = vpop.f32.mrb[0].mxu0
  %v6317 = vadd.f32 %v6109, %v6316
  %v6318 = vpop.f32.mrb[0].mxu0
  %v6319 = vpop.f32.mrb[0].mxu0
  %v6320 = vadd.f32 %v6112, %v6319
  %v6321 = vpop.f32.mrb[0].mxu0
  %6322 = vmatprep.mubr.bf16.mxu0 0
  %6323 = vmatmul.mubr.bf16.gmra.mrb[0].mxu0 %v4486
  %v6324 = vpop.f32.mrb[0].mxu0
  %v6325 = vadd.f32 %v6117, %v6324
  %v6326 = vpop.f32.mrb[0].mxu0
  %v6327 = vpop.f32.mrb[0].mxu0
  %v6328 = vadd.f32 %v6120, %v6327
  %v6329 = vpop.f32.mrb[0].mxu0
  %6330 = vmatprep.mubr.bf16.mxu0 0
  %6331 = vmatmul.mubr.bf16.gmra.mrb[0].mxu0 %v4489
  %v6332 = vpop.f32.mrb[0].mxu0
  %v6333 = vadd.f32 %v6125, %v6332
  %v6334 = vpop.f32.mrb[0].mxu0
  %v6335 = vpop.f32.mrb[0].mxu0
  %v6336 = vadd.f32 %v6128, %v6335
  %v6337 = vpop.f32.mrb[0].mxu0
  %6338 = vmatprep.mubr.bf16.mxu0 0
  %6339 = vmatmul.mubr.bf16.gmra.mrb[0].mxu0 %v4492
  %v6340 = vpop.f32.mrb[0].mxu0
  %v6341 = vadd.f32 %v6133, %v6340
  %v6342 = vpop.f32.mrb[0].mxu0
  %v6343 = vpop.f32.mrb[0].mxu0
  %v6344 = vadd.f32 %v6136, %v6343
  %v6345 = vpop.f32.mrb[0].mxu0
  %6346 = vmatprep.mubr.bf16.mxu0 0
  %6347 = vmatmul.mubr.bf16.gmra.mrb[0].mxu0 %v4495
  %v6348 = vpop.f32.mrb[0].mxu0
  %v6349 = vadd.f32 %v6141, %v6348
  %v6350 = vpop.f32.mrb[0].mxu0
  %v6351 = vpop.f32.mrb[0].mxu0
  %v6352 = vadd.f32 %v6144, %v6351
  %v6353 = vpop.f32.mrb[0].mxu0
  %6354 = vmatprep.mubr.bf16.mxu0 0
  %6355 = vmatmul.mubr.bf16.gmra.mrb[0].mxu0 %v4498
  %v6356 = vpop.f32.mrb[0].mxu0
  %v6357 = vadd.f32 %v6149, %v6356
  %v6358 = vpop.f32.mrb[0].mxu0
  %v6359 = vpop.f32.mrb[0].mxu0
  %v6360 = vadd.f32 %v6152, %v6359
  %v6361 = vpop.f32.mrb[0].mxu0
  %6362 = vmatprep.mubr.bf16.mxu0 0
  %6363 = vmatmul.mubr.bf16.gmra.mrb[0].mxu0 %v4501
  %v6364 = vpop.f32.mrb[0].mxu0
  %v6365 = vadd.f32 %v6157, %v6364
  %v6366 = vpop.f32.mrb[0].mxu0
  %v6367 = vpop.f32.mrb[0].mxu0
  %v6368 = vadd.f32 %v6160, %v6367
  %v6369 = vpop.f32.mrb[0].mxu0
  %6370 = vmatprep.mubr.bf16.mxu0 0
  %6371 = vmatmul.mubr.bf16.gmra.mrb[0].mxu0 %v4504
  %v6372 = vpop.f32.mrb[0].mxu0
  %v6373 = vadd.f32 %v6165, %v6372
  %v6374 = vpop.f32.mrb[0].mxu0
  %v6375 = vpop.f32.mrb[0].mxu0
  %v6376 = vpop.f32.mrb[0].mxu0
  %6377 = vdwg.mxu0
  %vm6378 = vcmask 400384
  %6379 = vst.msk [vmem:[%s3] sm:$0xff] %vm6378, %v6205
  %6380 = vst.msk [vmem:[%s3 + $0x8] sm:$0xff] %vm6378, %v6208
  %6381 = vst.msk [vmem:[%s3 + $0x10] sm:$0xff] %vm6378, %v6213
  %6382 = vst.msk [vmem:[%s3 + $0x18] sm:$0xff] %vm6378, %v6216
  %6383 = vst.msk [vmem:[%s3 + $0x20] sm:$0xff] %vm6378, %v6221
  %6384 = vst.msk [vmem:[%s3 + $0x28] sm:$0xff] %vm6378, %v6224
  %6385 = vst.msk [vmem:[%s3 + $0x30] sm:$0xff] %vm6378, %v6229
  %6386 = vst.msk [vmem:[%s3 + $0x38] sm:$0xff] %vm6378, %v6232
  %6387 = vst.msk [vmem:[%s3 + $0x40] sm:$0xff] %vm6378, %v6237
  %6388 = vst.msk [vmem:[%s3 + $0x48] sm:$0xff] %vm6378, %v6240
  %6389 = vst.msk [vmem:[%s3 + $0x50] sm:$0xff] %vm6378, %v6245
  %6390 = vst.msk [vmem:[%s3 + $0x58] sm:$0xff] %vm6378, %v6248
  %6391 = vst.msk [vmem:[%s3 + $0x60] sm:$0xff] %vm6378, %v6253
  %6392 = vst.msk [vmem:[%s3 + $0x68] sm:$0xff] %vm6378, %v6256
  %6393 = vst.msk [vmem:[%s3 + $0x70] sm:$0xff] %vm6378, %v6261
  %6394 = vst.msk [vmem:[%s3 + $0x78] sm:$0xff] %vm6378, %v6264
  %6395 = vst.msk [vmem:[%s3 + $0x80] sm:$0xff] %vm6378, %v6269
  %6396 = vst.msk [vmem:[%s3 + $0x88] sm:$0xff] %vm6378, %v6272
  %6397 = vst.msk [vmem:[%s3 + $0x90] sm:$0xff] %vm6378, %v6277
  %6398 = vst.msk [vmem:[%s3 + $0x98] sm:$0xff] %vm6378, %v6280
  %6399 = vst.msk [vmem:[%s3 + $0xa0] sm:$0xff] %vm6378, %v6285
  %6400 = vst.msk [vmem:[%s3 + $0xa8] sm:$0xff] %vm6378, %v6288
  %6401 = vst.msk [vmem:[%s3 + $0xb0] sm:$0xff] %vm6378, %v6293
  %6402 = vst.msk [vmem:[%s3 + $0xb8] sm:$0xff] %vm6378, %v6296
  %6403 = vst.msk [vmem:[%s3 + $0xc0] sm:$0xff] %vm6378, %v6301
  %6404 = vst.msk [vmem:[%s3 + $0xc8] sm:$0xff] %vm6378, %v6304
  %6405 = vst.msk [vmem:[%s3 + $0xd0] sm:$0xff] %vm6378, %v6309
  %6406 = vst.msk [vmem:[%s3 + $0xd8] sm:$0xff] %vm6378, %v6312
  %6407 = vst.msk [vmem:[%s3 + $0xe0] sm:$0xff] %vm6378, %v6317
  %6408 = vst.msk [vmem:[%s3 + $0xe8] sm:$0xff] %vm6378, %v6320
  %6409 = vst.msk [vmem:[%s3 + $0xf0] sm:$0xff] %vm6378, %v6325
  %6410 = vst.msk [vmem:[%s3 + $0xf8] sm:$0xff] %vm6378, %v6328
  %6411 = vst.msk [vmem:[%s3 + $0x100] sm:$0xff] %vm6378, %v6333
  %6412 = vst.msk [vmem:[%s3 + $0x108] sm:$0xff] %vm6378, %v6336
  %6413 = vst.msk [vmem:[%s3 + $0x110] sm:$0xff] %vm6378, %v6341
  %6414 = vst.msk [vmem:[%s3 + $0x118] sm:$0xff] %vm6378, %v6344
  %6415 = vst.msk [vmem:[%s3 + $0x120] sm:$0xff] %vm6378, %v6349
  %6416 = vst.msk [vmem:[%s3 + $0x128] sm:$0xff] %vm6378, %v6352
  %6417 = vst.msk [vmem:[%s3 + $0x130] sm:$0xff] %vm6378, %v6357
  %6418 = vst.msk [vmem:[%s3 + $0x138] sm:$0xff] %vm6378, %v6360
  %6419 = vst.msk [vmem:[%s3 + $0x140] sm:$0xff] %vm6378, %v6365
  %6420 = vst.msk [vmem:[%s3 + $0x148] sm:$0xff] %vm6378, %v6368
  %6421 = vst.msk [vmem:[%s3 + $0x150] sm:$0xff] %vm6378, %v6373
  // Predicated region
  $region14: #{tpu_custom_call.1} parent=0 // pred_check
    _
  $region15: #{tpu_custom_call.1} parent=0 // pred_check_branch
    %6423 = sbr.rel (0) target = $region17
  $region16: #{tpu_custom_call.1} parent=0 // pred_region
    _
  $region17: #{tpu_custom_call.1} parent=0 // pred_fallthru
    _
  // Predicated region
  $region18: #{tpu_custom_call.1} parent=0 // pred_check
    _
  $region19: #{tpu_custom_call.1} parent=0 // pred_check_branch
    %6425 = sbr.rel (0) target = $region21
  $region20: #{tpu_custom_call.1} parent=0 // pred_region
    _
  $region21: #{tpu_custom_call.1} parent=0 // pred_fallthru
    _

</llo_original>
